<compile_context>
chip_gen: v6e
topology: v6e:2x2x1
jax: 0.10.0
libtpu: 0.0.40
codegen_flags: <defaults>
</compile_context>

<pallas_src>
import functools

import jax
import jax.numpy as jnp
from jax.experimental import pallas as pl
from jax.experimental.pallas import tpu as pltpu

C = 256      # in/out channels (fixed by the module)
KH = KW = 3  # kernel size
EPS = 1e-5


# ----------------------------------------------------------------------------
# Per-generation VMEM budget (conservative unless a 128-MiB part is confirmed).
# ----------------------------------------------------------------------------
def _vmem_budget():
    conservative = (52 * 1024 * 1024, 2048)   # safe on v7x's 64 MiB/core
    generous = (100 * 1024 * 1024, 4096)      # v5e / v6e: 128 MiB VMEM
    try:
        kind = jax.devices()[0].device_kind.lower()
    except Exception:
        kind = ""
    if "v7" in kind:
        return conservative
    try:
        cap = pltpu.get_tpu_info().vmem_capacity_bytes
    except Exception:
        cap = 0
    if cap >= 100 * 1024 * 1024:
        return generous
    if any(tag in kind for tag in ("v5 lite", "v5e", "v6", "trillium")):
        return generous
    return conservative


_VMEM_LIMIT, _CONV_CAP_ROWS = _vmem_budget()
_BN_CAP_ROWS = 8192


# ----------------------------------------------------------------------------
# Kernel 1: 3x3 SAME conv as ONE bf16 MXU matmul (K = 3*3*C) over an in-VMEM
# im2col patch, plus per-block sum / sum-of-squares for the BatchNorm stats.
# ----------------------------------------------------------------------------
def _conv_stats_kernel(x_ref, w_ref, y_ref, stat_ref, xp_ref, patch_ref,
                       *, TB, H, W):
    """x_ref    : (TB, H, W, C)        f32  unpadded input tile
       w_ref    : (KH*KW*C, C)         bf16 weights, (kh, kw, ci) folded into K
       y_ref    : (TB*H*W, C)          bf16 conv output tile
       stat_ref : (1, 2, C)            f32  per-block [sum, sum-of-squares]
       xp_ref   : (TB, H+2, W+2, C)    f32  scratch: zero-padded tile
       patch_ref: (TB*H*W, KH*KW*C)    bf16 scratch: im2col patch
    """
    M = TB * H * W

    # SAME padding in VMEM: zero ONLY the 1-pixel halo; the interior is
    # overwritten by the copy below.  Re-done every step so the batch grid
    # axis stays safely "parallel" under megacore sharding.
    zrow = jnp.zeros((TB, 1, W + 2, C), dtype=xp_ref.dtype)
    zcol = jnp.zeros((TB, H + 2, 1, C), dtype=xp_ref.dtype)
    xp_ref[:, 0:1, :, :] = zrow
    xp_ref[:, H + 1:H + 2, :, :] = zrow
    xp_ref[:, :, 0:1, :] = zcol
    xp_ref[:, :, W + 1:W + 2, :] = zcol
    xp_ref[:, 1:H + 1, 1:W + 1, :] = x_ref[...]

    # im2col: each of the 9 taps is written exactly once into the bf16 patch
    # scratch (no concatenate temporaries, no y read-modify-write).
    for dh in range(KH):
        for dw in range(KW):
            col = (dh * KW + dw) * C
            tap = xp_ref[:, dh:dh + H, dw:dw + W, :].reshape(M, C)
            patch_ref[:, col:col + C] = tap.astype(patch_ref.dtype)

    # Single MXU contraction: bf16 operands, f32 accumulation.
    y = jnp.dot(patch_ref[...], w_ref[...],
                preferred_element_type=jnp.float32)          # (M, C) f32

    # Per-block partial statistics in f32 (reduced across blocks in JAX glue).
    s1 = jnp.sum(y, axis=0, keepdims=True)
    s2 = jnp.sum(y * y, axis=0, keepdims=True)
    stat_ref[...] = jnp.concatenate([s1, s2], axis=0).reshape(1, 2, C)

    # Lane-dense bf16 intermediate (halves the HBM write + the BN-pass read).
    y_ref[...] = y.astype(y_ref.dtype)


# ----------------------------------------------------------------------------
# Kernel 2: fused BatchNorm (folded into per-channel scale/bias) + ReLU over
# the flattened (rows, C) view.  bf16 input upcast to f32 inside the kernel.
# ----------------------------------------------------------------------------
def _bn_relu_kernel(y_ref, scale_ref, bias_ref, o_ref):
    y = y_ref[...].astype(jnp.float32)
    o_ref[...] = jnp.maximum(y * scale_ref[...] + bias_ref[...], 0.0)


# ----------------------------------------------------------------------------
# Tile-size helpers
# ----------------------------------------------------------------------------
def _pick_batch_block(N, H, W, cap_rows):
    """Images per conv grid step.  Prefer >= 2 grid steps (pipelining +
    v7x megacore), target M = TB*H*W >= 256 MXU rows, keep the per-step
    footprint under cap_rows, and keep the flattened row block a multiple of
    16 (bf16 output tiling) unless it covers the whole batch."""
    hw = H * W
    divs = [d for d in range(1, N + 1) if N % d == 0]
    ok = lambda d: d == N or (d * hw) % 16 == 0
    cands = [d for d in divs if ok(d) and d * hw <= cap_rows]
    if not cands:
        # TODO(synk): for very large H*W this fallback can still exceed the
        # per-step VMEM budget (v7x 64 MiB); a 2-row-halo spatial tiling of the
        # HBM blocks is the proper fix and is not implemented here.
        return min(d for d in divs if ok(d))
    multi = [d for d in cands if N // d >= 2]   # keep >= 2 grid steps if possible
    pool = multi if multi else cands
    reaching = [d for d in pool if d * hw >= 256]
    return min(reaching) if reaching else max(pool)


def _pick_row_block(rows, cap):
    """Largest multiple-of-16 divisor of `rows` up to `cap` (else full rows)."""
    best = None
    for d in range(16, min(rows, cap) + 1, 16):
        if rows % d == 0:
            best = d
    return best if best is not None else rows


# ----------------------------------------------------------------------------
# Public forward pass
# ----------------------------------------------------------------------------
@jax.jit
def block_of_dmt3(x_nchw, w_hwio, gamma, beta):
    """Forward pass of Block_of_DMT3 (train-mode BatchNorm with batch stats).

    x_nchw : (N, 256, H, W) float32  (PyTorch NCHW convention)
    w_hwio : (3, 3, 256, 256) float32 conv weight in HWIO layout
             (w_hwio[kh, kw, ci, co] == torch_weight[co, ci, kh, kw])
    gamma, beta : (256,) BatchNorm affine parameters
    returns (N, 256, H, W) float32

    The nn.Conv2d bias is omitted: followed by train-mode BatchNorm (which
    subtracts the batch mean) a per-channel constant bias cancels exactly.
    """
    N, Cin, H, W = x_nchw.shape
    assert Cin == C

    # NOTE: the entry/exit transposes exist only to keep the PyTorch NCHW
    # interface (each is a full HBM pass of the activation); keep the
    # surrounding model NHWC to drop them entirely.
    x = jnp.transpose(x_nchw, (0, 2, 3, 1)).astype(jnp.float32)   # NHWC f32
    w2 = w_hwio.astype(jnp.bfloat16).reshape(KH * KW * C, C)      # bf16 MXU operand

    TB = _pick_batch_block(N, H, W, _CONV_CAP_ROWS)
    NB = N // TB
    M = TB * H * W
    rows = N * H * W

    # --- conv + per-block batch-stat partials --------------------------------
    y2d, stats = pl.pallas_call(
        functools.partial(_conv_stats_kernel, TB=TB, H=H, W=W),
        out_shape=(
            jax.ShapeDtypeStruct((rows, C), jnp.bfloat16),
            jax.ShapeDtypeStruct((NB, 2, C), jnp.float32),
        ),
        grid_spec=pltpu.PrefetchScalarGridSpec(
            num_scalar_prefetch=0,
            grid=(NB,),
            in_specs=[
                pl.BlockSpec((TB, H, W, C), lambda b: (b, 0, 0, 0)),
                pl.BlockSpec((KH * KW * C, C), lambda b: (0, 0)),
            ],
            out_specs=(
                pl.BlockSpec((M, C), lambda b: (b, 0)),
                pl.BlockSpec((1, 2, C), lambda b: (b, 0, 0)),
            ),
            scratch_shapes=[
                pltpu.VMEM((TB, H + 2, W + 2, C), jnp.float32),     # padded tile
                pltpu.VMEM((M, KH * KW * C), jnp.bfloat16),         # im2col patch
            ],
        ),
        compiler_params=pltpu.CompilerParams(
            dimension_semantics=("parallel",),
            vmem_limit_bytes=_VMEM_LIMIT),
    )(x, w2)

    # --- fold train-mode BatchNorm into per-channel scale/bias (glue) --------
    # NOTE: var = E[y^2] - E[y]^2 in f32 can lose precision when |mean| >> std
    # (documented limitation; PyTorch uses a centered computation).
    count = jnp.float32(rows)
    s = jnp.sum(stats, axis=0)                       # (2, C)
    mean = s[0] / count
    var = s[1] / count - mean * mean                 # biased var (PyTorch)
    scale = gamma.astype(jnp.float32) * jax.lax.rsqrt(var + EPS)
    bias = beta.astype(jnp.float32) - mean * scale

    # --- fused BN + ReLU over large lane-dense 2-D row blocks ----------------
    TR = _pick_row_block(rows, _BN_CAP_ROWS)
    out2d = pl.pallas_call(
        _bn_relu_kernel,
        out_shape=jax.ShapeDtypeStruct((rows, C), jnp.float32),
        grid_spec=pltpu.PrefetchScalarGridSpec(
            num_scalar_prefetch=0,
            grid=(rows // TR,),
            in_specs=[
                pl.BlockSpec((TR, C), lambda r: (r, 0)),
                pl.BlockSpec((1, C), lambda r: (0, 0)),
                pl.BlockSpec((1, C), lambda r: (0, 0)),
            ],
            out_specs=pl.BlockSpec((TR, C), lambda r: (r, 0)),
        ),
        compiler_params=pltpu.CompilerParams(
            dimension_semantics=("parallel",),
            vmem_limit_bytes=_VMEM_LIMIT),
    )(y2d, scale.reshape(1, C), bias.reshape(1, C))

    out = out2d.reshape(N, H, W, C)
    return jnp.transpose(out, (0, 3, 1, 2))          # back to NCHW (f32)


# ----------------------------------------------------------------------------
# Pure-JAX reference (for a quick correctness check)
# ----------------------------------------------------------------------------
def _reference(x_nchw, w_hwio, gamma, beta):
    x = jnp.transpose(x_nchw, (0, 2, 3, 1))
    y = jax.lax.conv_general_dilated(
        x, w_hwio, window_strides=(1, 1), padding="SAME",
        dimension_numbers=("NHWC", "HWIO", "NHWC"))
    mean = jnp.mean(y, axis=(0, 1, 2))
    var = jnp.mean((y - mean) ** 2, axis=(0, 1, 2))
    y = (y - mean) / jnp.sqrt(var + EPS) * gamma + beta
    y = jnp.maximum(y, 0.0)
    return jnp.transpose(y, (0, 3, 1, 2))


if __name__ == "__main__":
    key = jax.random.PRNGKey(0)
    k_x, k_w, k_g, k_b = jax.random.split(key, 4)

    N, H, W = 2, 8, 8                    # small batch/spatial; C fixed at 256
    x = jax.random.normal(k_x, (N, C, H, W), dtype=jnp.float32)

    # Deterministic synthetic parameters (shapes follow nn.Conv2d / BatchNorm2d).
    w_hwio = jax.random.normal(k_w, (KH, KW, C, C), dtype=jnp.float32) * 0.02
    gamma = 1.0 + 0.1 * jax.random.normal(k_g, (C,), dtype=jnp.float32)
    beta = 0.1 * jax.random.normal(k_b, (C,), dtype=jnp.float32)

    out = jax.block_until_ready(block_of_dmt3(x, w_hwio, gamma, beta))
    ref = jax.block_until_ready(_reference(x, w_hwio, gamma, beta))

    assert out.shape == (N, C, H, W)
    # bf16 MXU operands + bf16 conv intermediate -> looser tolerance than the
    # old all-f32 path (expected |err| ~ 1e-2 after BN normalization).
    max_err = float(jnp.max(jnp.abs(out - ref)))
    assert max_err < 5e-2, f"mismatch vs reference: {max_err}"

    print("KERNEL_OK")
</pallas_src>

<mosaic_0001>
module attributes {stable_mosaic.version = 11 : i64} {
  func.func @_conv_stats_kernel(%arg0: i32, %arg1: memref<1x8x8x256xf32, #tpu.memory_space<vmem>>, %arg2: memref<2304x256xbf16, #tpu.memory_space<vmem>>, %arg3: memref<64x256xbf16, #tpu.memory_space<vmem>>, %arg4: memref<1x2x256xf32, #tpu.memory_space<vmem>>, %arg5: memref<1x10x10x256xf32, #tpu.memory_space<vmem>>, %arg6: memref<64x2304xbf16, #tpu.memory_space<vmem>>) attributes {dimension_semantics = [#tpu.dimension_semantics<parallel>], iteration_bounds = array<i64: 2>, scalar_prefetch = 0 : i64, scratch_operands = 2 : i64, tpu.core_type = #tpu.core_type<tc>, window_params = [{transform_indices = @transform_0, window_bounds = array<i64: 1, 8, 8, 256>}, {pipeline_mode = #tpu.pipeline_mode<synchronous>, transform_indices = @transform_1, window_bounds = array<i64: 2304, 256>}, {transform_indices = @transform_2, window_bounds = array<i64: 64, 256>}, {transform_indices = @transform_3, window_bounds = array<i64: 1, 2, 256>}]} {
    %cst = arith.constant 0.000000e+00 : f32
    %0 = vector.broadcast %cst : f32 to vector<1x1x10x256xf32>
    %cst_0 = arith.constant 0.000000e+00 : f32
    %1 = vector.broadcast %cst_0 : f32 to vector<1x10x1x256xf32>
    %c0 = arith.constant 0 : index
    %c0_1 = arith.constant 0 : index
    %c0_2 = arith.constant 0 : index
    %c0_3 = arith.constant 0 : index
    %2 = vector.load %arg5[%c0, %c0_1, %c0_2, %c0_3] : memref<1x10x10x256xf32, #tpu.memory_space<vmem>>, vector<1x1x10x256xf32>
    tpu.vector_store %arg5[%c0, %c0_1, %c0_2, %c0_3], %0 {strides = array<i32>} : memref<1x10x10x256xf32, #tpu.memory_space<vmem>>, vector<1x1x10x256xf32>,
    %c0_4 = arith.constant 0 : index
    %c9 = arith.constant 9 : index
    %c0_5 = arith.constant 0 : index
    %c0_6 = arith.constant 0 : index
    %3 = vector.load %arg5[%c0_4, %c9, %c0_5, %c0_6] : memref<1x10x10x256xf32, #tpu.memory_space<vmem>>, vector<1x1x10x256xf32>
    tpu.vector_store %arg5[%c0_4, %c9, %c0_5, %c0_6], %0 {strides = array<i32>} : memref<1x10x10x256xf32, #tpu.memory_space<vmem>>, vector<1x1x10x256xf32>,
    %c0_7 = arith.constant 0 : index
    %c0_8 = arith.constant 0 : index
    %c0_9 = arith.constant 0 : index
    %c0_10 = arith.constant 0 : index
    %4 = vector.load %arg5[%c0_7, %c0_8, %c0_9, %c0_10] : memref<1x10x10x256xf32, #tpu.memory_space<vmem>>, vector<1x10x1x256xf32>
    tpu.vector_store %arg5[%c0_7, %c0_8, %c0_9, %c0_10], %1 {strides = array<i32>} : memref<1x10x10x256xf32, #tpu.memory_space<vmem>>, vector<1x10x1x256xf32>,
    %c0_11 = arith.constant 0 : index
    %c0_12 = arith.constant 0 : index
    %c9_13 = arith.constant 9 : index
    %c0_14 = arith.constant 0 : index
    %5 = vector.load %arg5[%c0_11, %c0_12, %c9_13, %c0_14] : memref<1x10x10x256xf32, #tpu.memory_space<vmem>>, vector<1x10x1x256xf32>
    tpu.vector_store %arg5[%c0_11, %c0_12, %c9_13, %c0_14], %1 {strides = array<i32>} : memref<1x10x10x256xf32, #tpu.memory_space<vmem>>, vector<1x10x1x256xf32>,
    %c0_15 = arith.constant 0 : index
    %c0_16 = arith.constant 0 : index
    %c0_17 = arith.constant 0 : index
    %c0_18 = arith.constant 0 : index
    %6 = vector.load %arg1[%c0_15, %c0_16, %c0_17, %c0_18] : memref<1x8x8x256xf32, #tpu.memory_space<vmem>>, vector<1x8x8x256xf32>
    %c0_19 = arith.constant 0 : index
    %c1 = arith.constant 1 : index
    %c1_20 = arith.constant 1 : index
    %c0_21 = arith.constant 0 : index
    %7 = vector.load %arg5[%c0_19, %c1, %c1_20, %c0_21] : memref<1x10x10x256xf32, #tpu.memory_space<vmem>>, vector<1x8x8x256xf32>
    tpu.vector_store %arg5[%c0_19, %c1, %c1_20, %c0_21], %6 {strides = array<i32>} : memref<1x10x10x256xf32, #tpu.memory_space<vmem>>, vector<1x8x8x256xf32>,
    %c0_22 = arith.constant 0 : index
    %c0_23 = arith.constant 0 : index
    %c0_24 = arith.constant 0 : index
    %c0_25 = arith.constant 0 : index
    %8 = vector.load %arg5[%c0_22, %c0_23, %c0_24, %c0_25] : memref<1x10x10x256xf32, #tpu.memory_space<vmem>>, vector<1x8x8x256xf32>
    %9 = vector.shape_cast %8 : vector<1x8x8x256xf32> to vector<64x256xf32>
    %10 = arith.truncf %9 : vector<64x256xf32> to vector<64x256xbf16>
    %c0_26 = arith.constant 0 : index
    %c0_27 = arith.constant 0 : index
    %11 = vector.load %arg6[%c0_26, %c0_27] : memref<64x2304xbf16, #tpu.memory_space<vmem>>, vector<64x256xbf16>
    tpu.vector_store %arg6[%c0_26, %c0_27], %10 {strides = array<i32>} : memref<64x2304xbf16, #tpu.memory_space<vmem>>, vector<64x256xbf16>,
    %c0_28 = arith.constant 0 : index
    %c0_29 = arith.constant 0 : index
    %c1_30 = arith.constant 1 : index
    %c0_31 = arith.constant 0 : index
    %12 = vector.load %arg5[%c0_28, %c0_29, %c1_30, %c0_31] : memref<1x10x10x256xf32, #tpu.memory_space<vmem>>, vector<1x8x8x256xf32>
    %13 = vector.shape_cast %12 : vector<1x8x8x256xf32> to vector<64x256xf32>
    %14 = arith.truncf %13 : vector<64x256xf32> to vector<64x256xbf16>
    %c0_32 = arith.constant 0 : index
    %c256 = arith.constant 256 : index
    %15 = vector.load %arg6[%c0_32, %c256] : memref<64x2304xbf16, #tpu.memory_space<vmem>>, vector<64x256xbf16>
    tpu.vector_store %arg6[%c0_32, %c256], %14 {strides = array<i32>} : memref<64x2304xbf16, #tpu.memory_space<vmem>>, vector<64x256xbf16>,
    %c0_33 = arith.constant 0 : index
    %c0_34 = arith.constant 0 : index
    %c2 = arith.constant 2 : index
    %c0_35 = arith.constant 0 : index
    %16 = vector.load %arg5[%c0_33, %c0_34, %c2, %c0_35] : memref<1x10x10x256xf32, #tpu.memory_space<vmem>>, vector<1x8x8x256xf32>
    %17 = vector.shape_cast %16 : vector<1x8x8x256xf32> to vector<64x256xf32>
    %18 = arith.truncf %17 : vector<64x256xf32> to vector<64x256xbf16>
    %c0_36 = arith.constant 0 : index
    %c512 = arith.constant 512 : index
    %19 = vector.load %arg6[%c0_36, %c512] : memref<64x2304xbf16, #tpu.memory_space<vmem>>, vector<64x256xbf16>
    tpu.vector_store %arg6[%c0_36, %c512], %18 {strides = array<i32>} : memref<64x2304xbf16, #tpu.memory_space<vmem>>, vector<64x256xbf16>,
    %c0_37 = arith.constant 0 : index
    %c1_38 = arith.constant 1 : index
    %c0_39 = arith.constant 0 : index
    %c0_40 = arith.constant 0 : index
    %20 = vector.load %arg5[%c0_37, %c1_38, %c0_39, %c0_40] : memref<1x10x10x256xf32, #tpu.memory_space<vmem>>, vector<1x8x8x256xf32>
    %21 = vector.shape_cast %20 : vector<1x8x8x256xf32> to vector<64x256xf32>
    %22 = arith.truncf %21 : vector<64x256xf32> to vector<64x256xbf16>
    %c0_41 = arith.constant 0 : index
    %c768 = arith.constant 768 : index
    %23 = vector.load %arg6[%c0_41, %c768] : memref<64x2304xbf16, #tpu.memory_space<vmem>>, vector<64x256xbf16>
    tpu.vector_store %arg6[%c0_41, %c768], %22 {strides = array<i32>} : memref<64x2304xbf16, #tpu.memory_space<vmem>>, vector<64x256xbf16>,
    %c0_42 = arith.constant 0 : index
    %c1_43 = arith.constant 1 : index
    %c1_44 = arith.constant 1 : index
    %c0_45 = arith.constant 0 : index
    %24 = vector.load %arg5[%c0_42, %c1_43, %c1_44, %c0_45] : memref<1x10x10x256xf32, #tpu.memory_space<vmem>>, vector<1x8x8x256xf32>
    %25 = vector.shape_cast %24 : vector<1x8x8x256xf32> to vector<64x256xf32>
    %26 = arith.truncf %25 : vector<64x256xf32> to vector<64x256xbf16>
    %c0_46 = arith.constant 0 : index
    %c1024 = arith.constant 1024 : index
    %27 = vector.load %arg6[%c0_46, %c1024] : memref<64x2304xbf16, #tpu.memory_space<vmem>>, vector<64x256xbf16>
    tpu.vector_store %arg6[%c0_46, %c1024], %26 {strides = array<i32>} : memref<64x2304xbf16, #tpu.memory_space<vmem>>, vector<64x256xbf16>,
    %c0_47 = arith.constant 0 : index
    %c1_48 = arith.constant 1 : index
    %c2_49 = arith.constant 2 : index
    %c0_50 = arith.constant 0 : index
    %28 = vector.load %arg5[%c0_47, %c1_48, %c2_49, %c0_50] : memref<1x10x10x256xf32, #tpu.memory_space<vmem>>, vector<1x8x8x256xf32>
    %29 = vector.shape_cast %28 : vector<1x8x8x256xf32> to vector<64x256xf32>
    %30 = arith.truncf %29 : vector<64x256xf32> to vector<64x256xbf16>
    %c0_51 = arith.constant 0 : index
    %c1280 = arith.constant 1280 : index
    %31 = vector.load %arg6[%c0_51, %c1280] : memref<64x2304xbf16, #tpu.memory_space<vmem>>, vector<64x256xbf16>
    tpu.vector_store %arg6[%c0_51, %c1280], %30 {strides = array<i32>} : memref<64x2304xbf16, #tpu.memory_space<vmem>>, vector<64x256xbf16>,
    %c0_52 = arith.constant 0 : index
    %c2_53 = arith.constant 2 : index
    %c0_54 = arith.constant 0 : index
    %c0_55 = arith.constant 0 : index
    %32 = vector.load %arg5[%c0_52, %c2_53, %c0_54, %c0_55] : memref<1x10x10x256xf32, #tpu.memory_space<vmem>>, vector<1x8x8x256xf32>
    %33 = vector.shape_cast %32 : vector<1x8x8x256xf32> to vector<64x256xf32>
    %34 = arith.truncf %33 : vector<64x256xf32> to vector<64x256xbf16>
    %c0_56 = arith.constant 0 : index
    %c1536 = arith.constant 1536 : index
    %35 = vector.load %arg6[%c0_56, %c1536] : memref<64x2304xbf16, #tpu.memory_space<vmem>>, vector<64x256xbf16>
    tpu.vector_store %arg6[%c0_56, %c1536], %34 {strides = array<i32>} : memref<64x2304xbf16, #tpu.memory_space<vmem>>, vector<64x256xbf16>,
    %c0_57 = arith.constant 0 : index
    %c2_58 = arith.constant 2 : index
    %c1_59 = arith.constant 1 : index
    %c0_60 = arith.constant 0 : index
    %36 = vector.load %arg5[%c0_57, %c2_58, %c1_59, %c0_60] : memref<1x10x10x256xf32, #tpu.memory_space<vmem>>, vector<1x8x8x256xf32>
    %37 = vector.shape_cast %36 : vector<1x8x8x256xf32> to vector<64x256xf32>
    %38 = arith.truncf %37 : vector<64x256xf32> to vector<64x256xbf16>
    %c0_61 = arith.constant 0 : index
    %c1792 = arith.constant 1792 : index
    %39 = vector.load %arg6[%c0_61, %c1792] : memref<64x2304xbf16, #tpu.memory_space<vmem>>, vector<64x256xbf16>
    tpu.vector_store %arg6[%c0_61, %c1792], %38 {strides = array<i32>} : memref<64x2304xbf16, #tpu.memory_space<vmem>>, vector<64x256xbf16>,
    %c0_62 = arith.constant 0 : index
    %c2_63 = arith.constant 2 : index
    %c2_64 = arith.constant 2 : index
    %c0_65 = arith.constant 0 : index
    %40 = vector.load %arg5[%c0_62, %c2_63, %c2_64, %c0_65] : memref<1x10x10x256xf32, #tpu.memory_space<vmem>>, vector<1x8x8x256xf32>
    %41 = vector.shape_cast %40 : vector<1x8x8x256xf32> to vector<64x256xf32>
    %42 = arith.truncf %41 : vector<64x256xf32> to vector<64x256xbf16>
    %c0_66 = arith.constant 0 : index
    %c2048 = arith.constant 2048 : index
    %43 = vector.load %arg6[%c0_66, %c2048] : memref<64x2304xbf16, #tpu.memory_space<vmem>>, vector<64x256xbf16>
    tpu.vector_store %arg6[%c0_66, %c2048], %42 {strides = array<i32>} : memref<64x2304xbf16, #tpu.memory_space<vmem>>, vector<64x256xbf16>,
    %c0_67 = arith.constant 0 : index
    %c0_68 = arith.constant 0 : index
    %44 = vector.load %arg6[%c0_67, %c0_68] : memref<64x2304xbf16, #tpu.memory_space<vmem>>, vector<64x2304xbf16>
    %c0_69 = arith.constant 0 : index
    %c0_70 = arith.constant 0 : index
    %45 = vector.load %arg2[%c0_69, %c0_70] : memref<2304x256xbf16, #tpu.memory_space<vmem>>, vector<2304x256xbf16>
    %cst_71 = arith.constant dense<0.000000e+00> : vector<64x256xf32>
    %46 = tpu.matmul %44, %45, %cst_71 {dimension_numbers = #tpu.dot_dimension_numbers<[1], [0], [0], [1], [0, 0, 1, 1], [], []>} : vector<64x2304xbf16>, vector<2304x256xbf16>, vector<64x256xf32> -> vector<64x256xf32>
    %cst_72 = arith.constant dense<0.000000e+00> : vector<256xf32>
    %47 = vector.multi_reduction <add>, %46, %cst_72 [0] : vector<64x256xf32> to vector<256xf32>
    %48 = vector.shape_cast %47 : vector<256xf32> to vector<1x256xf32>
    %49 = arith.mulf %46, %46 : vector<64x256xf32>
    %cst_73 = arith.constant dense<0.000000e+00> : vector<256xf32>
    %50 = vector.multi_reduction <add>, %49, %cst_73 [0] : vector<64x256xf32> to vector<256xf32>
    %51 = vector.shape_cast %50 : vector<256xf32> to vector<1x256xf32>
    %52 = tpu.concatenate %48, %51 in 0 : vector<1x256xf32>, vector<1x256xf32> -> vector<2x256xf32>
    %53 = vector.shape_cast %52 : vector<2x256xf32> to vector<1x2x256xf32>
    %c0_74 = arith.constant 0 : index
    %c0_75 = arith.constant 0 : index
    %c0_76 = arith.constant 0 : index
    %54 = vector.load %arg4[%c0_74, %c0_75, %c0_76] : memref<1x2x256xf32, #tpu.memory_space<vmem>>, vector<1x2x256xf32>
    tpu.vector_store %arg4[%c0_74, %c0_75, %c0_76], %53 {strides = array<i32>} : memref<1x2x256xf32, #tpu.memory_space<vmem>>, vector<1x2x256xf32>,
    %55 = arith.truncf %46 : vector<64x256xf32> to vector<64x256xbf16>
    %c0_77 = arith.constant 0 : index
    %c0_78 = arith.constant 0 : index
    %56 = vector.load %arg3[%c0_77, %c0_78] : memref<64x256xbf16, #tpu.memory_space<vmem>>, vector<64x256xbf16>
    tpu.vector_store %arg3[%c0_77, %c0_78], %55 {strides = array<i32>} : memref<64x256xbf16, #tpu.memory_space<vmem>>, vector<64x256xbf16>,
    return
  }
  func.func @transform_0(%arg0: i32) -> (i32, i32, i32, i32) {
    %c0_i32 = arith.constant 0 : i32
    %c0_i32_0 = arith.constant 0 : i32
    %c0_i32_1 = arith.constant 0 : i32
    %c0_i32_2 = arith.constant 0 : i32
    return %arg0, %c0_i32, %c0_i32_0, %c0_i32_1 : i32, i32, i32, i32
  }
  func.func @transform_1(%arg0: i32) -> (i32, i32) {
    %c0_i32 = arith.constant 0 : i32
    %c0_i32_0 = arith.constant 0 : i32
    %c0_i32_1 = arith.constant 0 : i32
    return %c0_i32, %c0_i32_0 : i32, i32
  }
  func.func @transform_2(%arg0: i32) -> (i32, i32) {
    %c0_i32 = arith.constant 0 : i32
    %c0_i32_0 = arith.constant 0 : i32
    return %arg0, %c0_i32 : i32, i32
  }
  func.func @transform_3(%arg0: i32) -> (i32, i32, i32) {
    %c0_i32 = arith.constant 0 : i32
    %c0_i32_0 = arith.constant 0 : i32
    %c0_i32_1 = arith.constant 0 : i32
    return %arg0, %c0_i32, %c0_i32_0 : i32, i32, i32
  }
}

module attributes {stable_mosaic.version = 11 : i64} {
  func.func @_bn_relu_kernel(%arg0: i32, %arg1: memref<128x256xbf16, #tpu.memory_space<vmem>>, %arg2: memref<1x256xf32, #tpu.memory_space<vmem>>, %arg3: memref<1x256xf32, #tpu.memory_space<vmem>>, %arg4: memref<128x256xf32, #tpu.memory_space<vmem>>) attributes {dimension_semantics = [#tpu.dimension_semantics<parallel>], iteration_bounds = array<i64: 1>, scalar_prefetch = 0 : i64, scratch_operands = 0 : i64, tpu.core_type = #tpu.core_type<tc>, window_params = [{transform_indices = @transform_0, window_bounds = array<i64: 128, 256>}, {pipeline_mode = #tpu.pipeline_mode<synchronous>, transform_indices = @transform_1, window_bounds = array<i64: 1, 256>}, {pipeline_mode = #tpu.pipeline_mode<synchronous>, transform_indices = @transform_2, window_bounds = array<i64: 1, 256>}, {transform_indices = @transform_3, window_bounds = array<i64: 128, 256>}]} {
    %c0 = arith.constant 0 : index
    %c0_0 = arith.constant 0 : index
    %0 = vector.load %arg1[%c0, %c0_0] : memref<128x256xbf16, #tpu.memory_space<vmem>>, vector<128x256xbf16>
    %1 = arith.extf %0 : vector<128x256xbf16> to vector<128x256xf32>
    %c0_1 = arith.constant 0 : index
    %c0_2 = arith.constant 0 : index
    %2 = vector.load %arg2[%c0_1, %c0_2] : memref<1x256xf32, #tpu.memory_space<vmem>>, vector<1x256xf32>
    %3 = vector.broadcast %2 : vector<1x256xf32> to vector<128x256xf32>
    %4 = arith.mulf %1, %3 : vector<128x256xf32>
    %c0_3 = arith.constant 0 : index
    %c0_4 = arith.constant 0 : index
    %5 = vector.load %arg3[%c0_3, %c0_4] : memref<1x256xf32, #tpu.memory_space<vmem>>, vector<1x256xf32>
    %6 = vector.broadcast %5 : vector<1x256xf32> to vector<128x256xf32>
    %7 = arith.addf %4, %6 : vector<128x256xf32>
    %cst = arith.constant 0.000000e+00 : f32
    %8 = vector.broadcast %cst : f32 to vector<128x256xf32>
    %9 = arith.maximumf %7, %8 : vector<128x256xf32>
    %c0_5 = arith.constant 0 : index
    %c0_6 = arith.constant 0 : index
    %10 = vector.load %arg4[%c0_5, %c0_6] : memref<128x256xf32, #tpu.memory_space<vmem>>, vector<128x256xf32>
    tpu.vector_store %arg4[%c0_5, %c0_6], %9 {strides = array<i32>} : memref<128x256xf32, #tpu.memory_space<vmem>>, vector<128x256xf32>,
    return
  }
  func.func @transform_0(%arg0: i32) -> (i32, i32) {
    %c0_i32 = arith.constant 0 : i32
    %c0_i32_0 = arith.constant 0 : i32
    return %arg0, %c0_i32 : i32, i32
  }
  func.func @transform_1(%arg0: i32) -> (i32, i32) {
    %c0_i32 = arith.constant 0 : i32
    %c0_i32_0 = arith.constant 0 : i32
    %c0_i32_1 = arith.constant 0 : i32
    return %c0_i32, %c0_i32_0 : i32, i32
  }
  func.func @transform_2(%arg0: i32) -> (i32, i32) {
    %c0_i32 = arith.constant 0 : i32
    %c0_i32_0 = arith.constant 0 : i32
    %c0_i32_1 = arith.constant 0 : i32
    return %c0_i32, %c0_i32_0 : i32, i32
  }
  func.func @transform_3(%arg0: i32) -> (i32, i32) {
    %c0_i32 = arith.constant 0 : i32
    %c0_i32_0 = arith.constant 0 : i32
    return %arg0, %c0_i32 : i32, i32
  }
}

</mosaic_0001>

<llo_original>
// kernel: block_of_dmt3.3
$region0: #{block_of_dmt3.3}
  #allocation0 [shape = 'u32[]', space=smem, size = 0x4, offset = 0x4, fixed_abs, tag = 'smem constant byte address 0x4 - core index']
  #allocation1 [shape = 'u32[144,128]{1,0:T(1,128)}', space=vmem, size = 0x12000, scoped, tag = 'internal scratch']
  %s0 = inlined_call_operand.vmem [shape: bf16[128,256], index: 0, kind: input, shape index: {}]
  %s1 = inlined_call_operand.vmem [shape: f32[1,256], index: 1, kind: input, shape index: {}]
  %s2 = inlined_call_operand.vmem [shape: f32[1,256], index: 2, kind: input, shape index: {}]
  %s3 = inlined_call_operand.hbm [shape: f32[128,256], index: 3, kind: output, shape index: {}]
  %s4 = sld [smem:[#allocation0]]
  $region22: #{block_of_dmt3.3} parent=0
    _
  %s6 = ssub.s32 1, %s4
  %s7 = scalar_select 0, %s6, %s4
  $region1: #{block_of_dmt3.3} parent=0
    #allocation2 [shape = 'u8[131072]{0}', space=vmem, size = 0x20000, scoped, tag = 'output window, operand 0, single buffered']
    #allocation3 [shape = 's32[1]{0}', space=sflag, size = 0x4, scoped, tag = 'scoped memory for block_of_dmt3.3']
    %8 = vsyncpa [#allocation3], 0
    // Predicated region
    $region2: #{block_of_dmt3.3} parent=1 // pred_check
      _
    $region3: #{block_of_dmt3.3} parent=1 // pred_check_branch
      %10 = sbr.rel (0) target = $region5
    $region4: #{block_of_dmt3.3} parent=1 // pred_region
      _
    $region5: #{block_of_dmt3.3} parent=1 // pred_fallthru
      _
    // Predicated region
    $region6: #{block_of_dmt3.3} parent=1 // pred_check
      _
    $region7: #{block_of_dmt3.3} parent=1 // pred_check_branch
      %12 = sbr.rel (0) target = $region9
    $region8: #{block_of_dmt3.3} parent=1 // pred_region
      _
    $region9: #{block_of_dmt3.3} parent=1 // pred_fallthru
      _
    // Predicated region
    $region10: #{block_of_dmt3.3} parent=1 // pred_check
      _
    $region11: #{block_of_dmt3.3} parent=1 // pred_check_branch
      %14 = sbr.rel (0) target = $region13
    $region12: #{block_of_dmt3.3} parent=1 // pred_region
      _
    $region13: #{block_of_dmt3.3} parent=1 // pred_fallthru
      _
    %v15 = vld [vmem:[%s0] sm:$0xff]
    %v16 = vld [vmem:[%s0 + $0x8] sm:$0xff]
    %v17 = vld [vmem:[%s0 + $0x10] sm:$0xff]
    %v18 = vld [vmem:[%s0 + $0x18] sm:$0xff]
    %v19 = vld [vmem:[%s0 + $0x20] sm:$0xff]
    %v20 = vld [vmem:[%s0 + $0x28] sm:$0xff]
    %v21 = vld [vmem:[%s0 + $0x30] sm:$0xff]
    %v22 = vld [vmem:[%s0 + $0x38] sm:$0xff]
    %v23 = vld [vmem:[%s0 + $0x40] sm:$0xff]
    %v24 = vld [vmem:[%s0 + $0x48] sm:$0xff]
    %v25 = vld [vmem:[%s0 + $0x50] sm:$0xff]
    %v26 = vld [vmem:[%s0 + $0x58] sm:$0xff]
    %v27 = vld [vmem:[%s0 + $0x60] sm:$0xff]
    %v28 = vld [vmem:[%s0 + $0x68] sm:$0xff]
    %v29 = vld [vmem:[%s0 + $0x70] sm:$0xff]
    %v30 = vld [vmem:[%s0 + $0x78] sm:$0xff]
    %v31 = vunpack.c.l.bf16 %v15
    %v32 = vunpack.c.h.bf16 %v15
    %v33 = vunpack.c.l.bf16 %v16
    %v34 = vunpack.c.h.bf16 %v16
    %v35 = vunpack.c.l.bf16 %v17
    %v36 = vunpack.c.h.bf16 %v17
    %v37 = vunpack.c.l.bf16 %v18
    %v38 = vunpack.c.h.bf16 %v18
    %v39 = vunpack.c.l.bf16 %v19
    %v40 = vunpack.c.h.bf16 %v19
    %v41 = vunpack.c.l.bf16 %v20
    %v42 = vunpack.c.h.bf16 %v20
    %v43 = vunpack.c.l.bf16 %v21
    %v44 = vunpack.c.h.bf16 %v21
    %v45 = vunpack.c.l.bf16 %v22
    %v46 = vunpack.c.h.bf16 %v22
    %v47 = vunpack.c.l.bf16 %v23
    %v48 = vunpack.c.h.bf16 %v23
    %v49 = vunpack.c.l.bf16 %v24
    %v50 = vunpack.c.h.bf16 %v24
    %v51 = vunpack.c.l.bf16 %v25
    %v52 = vunpack.c.h.bf16 %v25
    %v53 = vunpack.c.l.bf16 %v26
    %v54 = vunpack.c.h.bf16 %v26
    %v55 = vunpack.c.l.bf16 %v27
    %v56 = vunpack.c.h.bf16 %v27
    %v57 = vunpack.c.l.bf16 %v28
    %v58 = vunpack.c.h.bf16 %v28
    %v59 = vunpack.c.l.bf16 %v29
    %v60 = vunpack.c.h.bf16 %v29
    %v61 = vunpack.c.l.bf16 %v30
    %v62 = vunpack.c.h.bf16 %v30
    %v63 = vld [vmem:[%s1] sm:$0x3]
    %v65 = vlaneseq
    %v66 = vshrl.u32 %v65, 7
    %v67 = vsub.s32 0, %v66
    %v68 = vrot.slane %v63, %v67
    %v69 = vlaneseq
    %v70 = vshrl.u32 %v69, 7
    %v71 = vsub.s32 1, %v70
    %v72 = vrot.slane %v63, %v71
    %v75 = vmul.f32 %v31, %v68
    %v76 = vmul.f32 %v32, %v72
    %v77 = vmul.f32 %v33, %v68
    %v78 = vmul.f32 %v34, %v72
    %v79 = vmul.f32 %v35, %v68
    %v80 = vmul.f32 %v36, %v72
    %v81 = vmul.f32 %v37, %v68
    %v82 = vmul.f32 %v38, %v72
    %v83 = vmul.f32 %v39, %v68
    %v84 = vmul.f32 %v40, %v72
    %v85 = vmul.f32 %v41, %v68
    %v86 = vmul.f32 %v42, %v72
    %v87 = vmul.f32 %v43, %v68
    %v88 = vmul.f32 %v44, %v72
    %v89 = vmul.f32 %v45, %v68
    %v90 = vmul.f32 %v46, %v72
    %v91 = vmul.f32 %v47, %v68
    %v92 = vmul.f32 %v48, %v72
    %v93 = vmul.f32 %v49, %v68
    %v94 = vmul.f32 %v50, %v72
    %v95 = vmul.f32 %v51, %v68
    %v96 = vmul.f32 %v52, %v72
    %v97 = vmul.f32 %v53, %v68
    %v98 = vmul.f32 %v54, %v72
    %v99 = vmul.f32 %v55, %v68
    %v100 = vmul.f32 %v56, %v72
    %v101 = vmul.f32 %v57, %v68
    %v102 = vmul.f32 %v58, %v72
    %v103 = vmul.f32 %v59, %v68
    %v104 = vmul.f32 %v60, %v72
    %v105 = vmul.f32 %v61, %v68
    %v106 = vmul.f32 %v62, %v72
    %v107 = vld [vmem:[%s2] sm:$0x3]
    %v109 = vlaneseq
    %v110 = vshrl.u32 %v109, 7
    %v111 = vsub.s32 0, %v110
    %v112 = vrot.slane %v107, %v111
    %v113 = vlaneseq
    %v114 = vshrl.u32 %v113, 7
    %v115 = vsub.s32 1, %v114
    %v116 = vrot.slane %v107, %v115
    %v119 = vadd.f32 %v75, %v112
    %v120 = vadd.f32 %v76, %v116
    %v121 = vadd.f32 %v77, %v112
    %v122 = vadd.f32 %v78, %v116
    %v123 = vadd.f32 %v79, %v112
    %v124 = vadd.f32 %v80, %v116
    %v125 = vadd.f32 %v81, %v112
    %v126 = vadd.f32 %v82, %v116
    %v127 = vadd.f32 %v83, %v112
    %v128 = vadd.f32 %v84, %v116
    %v129 = vadd.f32 %v85, %v112
    %v130 = vadd.f32 %v86, %v116
    %v131 = vadd.f32 %v87, %v112
    %v132 = vadd.f32 %v88, %v116
    %v133 = vadd.f32 %v89, %v112
    %v134 = vadd.f32 %v90, %v116
    %v135 = vadd.f32 %v91, %v112
    %v136 = vadd.f32 %v92, %v116
    %v137 = vadd.f32 %v93, %v112
    %v138 = vadd.f32 %v94, %v116
    %v139 = vadd.f32 %v95, %v112
    %v140 = vadd.f32 %v96, %v116
    %v141 = vadd.f32 %v97, %v112
    %v142 = vadd.f32 %v98, %v116
    %v143 = vadd.f32 %v99, %v112
    %v144 = vadd.f32 %v100, %v116
    %v145 = vadd.f32 %v101, %v112
    %v146 = vadd.f32 %v102, %v116
    %v147 = vadd.f32 %v103, %v112
    %v148 = vadd.f32 %v104, %v116
    %v149 = vadd.f32 %v105, %v112
    %v150 = vadd.f32 %v106, %v116
    %v151 = vmax.f32 %v119, 0.0
    %v152 = vmax.f32 %v120, 0.0
    %v153 = vmax.f32 %v121, 0.0
    %v154 = vmax.f32 %v122, 0.0
    %v155 = vmax.f32 %v123, 0.0
    %v156 = vmax.f32 %v124, 0.0
    %v157 = vmax.f32 %v125, 0.0
    %v158 = vmax.f32 %v126, 0.0
    %v159 = vmax.f32 %v127, 0.0
    %v160 = vmax.f32 %v128, 0.0
    %v161 = vmax.f32 %v129, 0.0
    %v162 = vmax.f32 %v130, 0.0
    %v163 = vmax.f32 %v131, 0.0
    %v164 = vmax.f32 %v132, 0.0
    %v165 = vmax.f32 %v133, 0.0
    %v166 = vmax.f32 %v134, 0.0
    %v167 = vmax.f32 %v135, 0.0
    %v168 = vmax.f32 %v136, 0.0
    %v169 = vmax.f32 %v137, 0.0
    %v170 = vmax.f32 %v138, 0.0
    %v171 = vmax.f32 %v139, 0.0
    %v172 = vmax.f32 %v140, 0.0
    %v173 = vmax.f32 %v141, 0.0
    %v174 = vmax.f32 %v142, 0.0
    %v175 = vmax.f32 %v143, 0.0
    %v176 = vmax.f32 %v144, 0.0
    %v177 = vmax.f32 %v145, 0.0
    %v178 = vmax.f32 %v146, 0.0
    %v179 = vmax.f32 %v147, 0.0
    %v180 = vmax.f32 %v148, 0.0
    %v181 = vmax.f32 %v149, 0.0
    %v182 = vmax.f32 %v150, 0.0
    %183 = vst [vmem:[#allocation2] sm:$0xff] %v151
    %184 = vst [vmem:[#allocation2 + $0x8] sm:$0xff] %v152
    %185 = vst [vmem:[#allocation2 + $0x10] sm:$0xff] %v153
    %186 = vst [vmem:[#allocation2 + $0x18] sm:$0xff] %v154
    %187 = vst [vmem:[#allocation2 + $0x20] sm:$0xff] %v155
    %188 = vst [vmem:[#allocation2 + $0x28] sm:$0xff] %v156
    %189 = vst [vmem:[#allocation2 + $0x30] sm:$0xff] %v157
    %190 = vst [vmem:[#allocation2 + $0x38] sm:$0xff] %v158
    %191 = vst [vmem:[#allocation2 + $0x40] sm:$0xff] %v159
    %192 = vst [vmem:[#allocation2 + $0x48] sm:$0xff] %v160
    %193 = vst [vmem:[#allocation2 + $0x50] sm:$0xff] %v161
    %194 = vst [vmem:[#allocation2 + $0x58] sm:$0xff] %v162
    %195 = vst [vmem:[#allocation2 + $0x60] sm:$0xff] %v163
    %196 = vst [vmem:[#allocation2 + $0x68] sm:$0xff] %v164
    %197 = vst [vmem:[#allocation2 + $0x70] sm:$0xff] %v165
    %198 = vst [vmem:[#allocation2 + $0x78] sm:$0xff] %v166
    %199 = vst [vmem:[#allocation2 + $0x80] sm:$0xff] %v167
    %200 = vst [vmem:[#allocation2 + $0x88] sm:$0xff] %v168
    %201 = vst [vmem:[#allocation2 + $0x90] sm:$0xff] %v169
    %202 = vst [vmem:[#allocation2 + $0x98] sm:$0xff] %v170
    %203 = vst [vmem:[#allocation2 + $0xa0] sm:$0xff] %v171
    %204 = vst [vmem:[#allocation2 + $0xa8] sm:$0xff] %v172
    %205 = vst [vmem:[#allocation2 + $0xb0] sm:$0xff] %v173
    %206 = vst [vmem:[#allocation2 + $0xb8] sm:$0xff] %v174
    %207 = vst [vmem:[#allocation2 + $0xc0] sm:$0xff] %v175
    %208 = vst [vmem:[#allocation2 + $0xc8] sm:$0xff] %v176
    %209 = vst [vmem:[#allocation2 + $0xd0] sm:$0xff] %v177
    %210 = vst [vmem:[#allocation2 + $0xd8] sm:$0xff] %v178
    %211 = vst [vmem:[#allocation2 + $0xe0] sm:$0xff] %v179
    %212 = vst [vmem:[#allocation2 + $0xe8] sm:$0xff] %v180
    %213 = vst [vmem:[#allocation2 + $0xf0] sm:$0xff] %v181
    %214 = vst [vmem:[#allocation2 + $0xf8] sm:$0xff] %v182
    // Predicated region
    $region14: #{block_of_dmt3.3} parent=1 // pred_check
      _
    $region15: #{block_of_dmt3.3} parent=1 // pred_check_branch
      %216 = sbr.rel (0) target = $region17
    $region16: #{block_of_dmt3.3} parent=1 // pred_region
      %s218 = ssub.s32 4096, 4096
      %219 = vsyncadd [#allocation3], %s218
      %s220 = sshll.u32 [#allocation2], 4
      %s221 = int_to_ptr.vmem [resolvable:$true] %s220
      %226 = dma.vmem_to_hbm [thread:$0]  %s221, 4096, %s3, [#allocation3], 256, 256, 16
    $region17: #{block_of_dmt3.3} parent=1 // pred_fallthru
      _
    // Predicated region
    $region18: #{block_of_dmt3.3} parent=1 // pred_check
      _
    $region19: #{block_of_dmt3.3} parent=1 // pred_check_branch
      %228 = sbr.rel (0) target = $region21
    $region20: #{block_of_dmt3.3} parent=1 // pred_region
      %229 = dma.done [#allocation3], 4096
    $region21: #{block_of_dmt3.3} parent=1 // pred_fallthru
      _
    %230 = vsyncpa [#allocation3], 1

// kernel: block_of_dmt3.2
$region0: #{block_of_dmt3.2}
  #allocation0 [shape = 'u32[]', space=smem, size = 0x4, offset = 0x4, fixed_abs, tag = 'smem constant byte address 0x4 - core index']
  #allocation1 [shape = 'u32[144,128]{1,0:T(1,128)}', space=vmem, size = 0x12000, scoped, tag = 'internal scratch']
  #allocation2 [shape = 'f32[1,10,10,256]{3,2,1,0:T(8,128)}', space=vmem, size = 0x28000, scoped, tag = 'scratch operand']
  #allocation3 [shape = 'bf16[64,2304]{1,0:T(8,128)(2,1)}', space=vmem, size = 0x48000, scoped, tag = 'scratch operand']
  %s0 = inlined_call_operand.vmem [shape: f32[2,8,8,256], index: 0, kind: input, shape index: {}]
  %s1 = inlined_call_operand.vmem [shape: bf16[2304,256], index: 1, kind: input, shape index: {}]
  %s2 = inlined_call_operand.vmem [shape: bf16[128,256], index: 2, kind: output, shape index: {0}]
  %s3 = inlined_call_operand.vmem [shape: f32[2,2,256], index: 3, kind: output, shape index: {1}]
  %4 = xla_tuple %s2, %s3
  %s5 = sld [smem:[#allocation0]]
  $region49: #{block_of_dmt3.2} parent=0
    _
  %s7 = ssub.s32 1, %s5
  %s8 = scalar_select 0, %s7, %s5
  loop: start=0, step=1, limit=4
  $region2: #{block_of_dmt3.2} parent=0 // loop_pre_header
    _
  $region3: #{block_of_dmt3.2} parent=0 // loop_header
    %s10 = sphi 0, %s14
    %p11 = scmp.ge.s32.totalorder %s10, 4
    %s20 = sphi 0, %s22
    %s23 = sphi 0, %s20
    %s24 = sphi 0, %s23
    %s40 = sphi 0, %s24
    %s44 = sphi 0, %s44
    %s46 = sphi 0, %s44
    %s47 = sphi 0, %s46
    %s61 = sphi 0, %s47
    %s67 = sphi 0, %s69
    %s70 = sphi 0, %s67
    %s71 = sphi 0, %s70
    %s87 = sphi 0, %s71
    %s93 = sphi 0, %s95
    %s96 = sphi 0, %s93
    %s97 = sphi 0, %s96
    %s113 = sphi 0, %s97
  $region4: #{block_of_dmt3.2} parent=0 // loop_header_branch
    %13 = sbr.rel (%p11) target = $region8
  $region5: #{block_of_dmt3.2} parent=0 // loop_body
    %s15 = ssub.s32 %s10, 1
    %s16 = ssub.s32 %s10, 2
    %s17 = sadd.s32 %s10, 1
    %s18 = ssub.s32 %s10, %s17
    %p19 = scmp.eq.s32.totalorder %s18, 0
    %s21 = sadd.s32 %s20, 1
    %s22 = scalar_select %p19, %s20, %s21
    %p25 = pneg %p19
    %p26 = scmp.eq.s32.totalorder %s10, 1
    %p27 = por %p25, %p26
    %p28 = scmp.ne.s32.totalorder %s20, %s23
    %p29 = scmp.eq.s32.totalorder %s10, 0
    %p30 = por %p28, %p29
    %p31 = scmp.ne.s32.totalorder %s20, %s23
    %p32 = scmp.eq.s32.totalorder %s15, 1
    %p33 = por %p31, %p32
    %p34 = scmp.ne.s32.totalorder %s23, %s24
    %p35 = scmp.eq.s32.totalorder %s15, 0
    %p36 = por %p34, %p35
    %p37 = scmp.ne.s32.totalorder %s23, %s24
    %p38 = scmp.eq.s32.totalorder %s16, 1
    %p39 = por %p37, %p38
    %p41 = scmp.ne.s32.totalorder %s24, %s40
    %p42 = scmp.eq.s32.totalorder %s16, 0
    %p43 = por %p41, %p42
    %s45 = sadd.s32 %s44, 1
    %p48 = scmp.eq.s32.totalorder %s10, 1
    %p49 = scmp.ne.s32.totalorder %s44, %s46
    %p50 = scmp.eq.s32.totalorder %s10, 0
    %p51 = por %p49, %p50
    %p52 = scmp.ne.s32.totalorder %s44, %s46
    %p53 = scmp.eq.s32.totalorder %s15, 1
    %p54 = por %p52, %p53
    %p55 = scmp.ne.s32.totalorder %s46, %s47
    %p56 = scmp.eq.s32.totalorder %s15, 0
    %p57 = por %p55, %p56
    %p58 = scmp.ne.s32.totalorder %s46, %s47
    %p59 = scmp.eq.s32.totalorder %s16, 1
    %p60 = por %p58, %p59
    %p62 = scmp.ne.s32.totalorder %s47, %s61
    %p63 = scmp.eq.s32.totalorder %s16, 0
    %p64 = por %p62, %p63
    %s65 = ssub.s32 %s10, %s17
    %p66 = scmp.eq.s32.totalorder %s65, 0
    %s68 = sadd.s32 %s67, 1
    %s69 = scalar_select %p66, %s67, %s68
    %p72 = pneg %p66
    %p73 = scmp.eq.s32.totalorder %s10, 1
    %p74 = por %p72, %p73
    %p75 = scmp.ne.s32.totalorder %s67, %s70
    %p76 = scmp.eq.s32.totalorder %s10, 0
    %p77 = por %p75, %p76
    %p78 = scmp.ne.s32.totalorder %s67, %s70
    %p79 = scmp.eq.s32.totalorder %s15, 1
    %p80 = por %p78, %p79
    %p81 = scmp.ne.s32.totalorder %s70, %s71
    %p82 = scmp.eq.s32.totalorder %s15, 0
    %p83 = por %p81, %p82
    %p84 = scmp.ne.s32.totalorder %s70, %s71
    %p85 = scmp.eq.s32.totalorder %s16, 1
    %p86 = por %p84, %p85
    %p88 = scmp.ne.s32.totalorder %s71, %s87
    %p89 = scmp.eq.s32.totalorder %s16, 0
    %p90 = por %p88, %p89
    %s91 = ssub.s32 %s10, %s17
    %p92 = scmp.eq.s32.totalorder %s91, 0
    %s94 = sadd.s32 %s93, 1
    %s95 = scalar_select %p92, %s93, %s94
    %p98 = pneg %p92
    %p99 = scmp.eq.s32.totalorder %s10, 1
    %p100 = por %p98, %p99
    %p101 = scmp.ne.s32.totalorder %s93, %s96
    %p102 = scmp.eq.s32.totalorder %s10, 0
    %p103 = por %p101, %p102
    %p104 = scmp.ne.s32.totalorder %s93, %s96
    %p105 = scmp.eq.s32.totalorder %s15, 1
    %p106 = por %p104, %p105
    %p107 = scmp.ne.s32.totalorder %s96, %s97
    %p108 = scmp.eq.s32.totalorder %s15, 0
    %p109 = por %p107, %p108
    %p110 = scmp.ne.s32.totalorder %s96, %s97
    %p111 = scmp.eq.s32.totalorder %s16, 1
    %p112 = por %p110, %p111
    %p114 = scmp.ne.s32.totalorder %s97, %s113
    %p115 = scmp.eq.s32.totalorder %s16, 0
    %p116 = por %p114, %p115
    %p117 = scmp.le.s32.totalorder 1, %s10
    %p118 = scmp.lt.s32.totalorder %s10, 3
    %p119 = pnand %p117, %p118
    %p120 = pneg %p119
    // Predicated region
    $region9: #{block_of_dmt3.2} parent=5 // pred_check
      _
    $region10: #{block_of_dmt3.2} parent=5 // pred_check_branch
      %122 = sbr.rel (%p119) target = $region12
    $region11: #{block_of_dmt3.2} parent=5 // pred_region
      %s123 = ssub.s32 %s10, 1
      // Predicated region
      $region13: #{block_of_dmt3.2} parent=11 // pred_check
        %p124 = pneg %p57
      $region14: #{block_of_dmt3.2} parent=11 // pred_check_branch
        %126 = sbr.rel (%p124) target = $region16
      $region15: #{block_of_dmt3.2} parent=11 // pred_region
        _
      $region16: #{block_of_dmt3.2} parent=11 // pred_fallthru
        _
    $region12: #{block_of_dmt3.2} parent=5 // pred_fallthru
      _
    %p127 = scmp.lt.s32.totalorder %s10, 2
    // Predicated region
    $region17: #{block_of_dmt3.2} parent=5 // pred_check
      %p128 = pneg %p127
    $region18: #{block_of_dmt3.2} parent=5 // pred_check_branch
      %130 = sbr.rel (%p128) target = $region20
    $region19: #{block_of_dmt3.2} parent=5 // pred_region
      // Predicated region
      $region21: #{block_of_dmt3.2} parent=19 // pred_check
        %p131 = pneg %p30
      $region22: #{block_of_dmt3.2} parent=19 // pred_check_branch
        %133 = sbr.rel (%p131) target = $region24
      $region23: #{block_of_dmt3.2} parent=19 // pred_region
        %p134 = scmp.lt.s32.totalorder %s10, 1
        %s135 = scalar_select %p134, %s10, 1
        %s136 = smul.addr %s135, 16
        %s137 = smul.addr %s136, 8
        %s138 = scalar_lea.vmem %s0, %s137
      $region24: #{block_of_dmt3.2} parent=19 // pred_fallthru
        _
    $region20: #{block_of_dmt3.2} parent=5 // pred_fallthru
      _
    %p139 = scmp.le.s32.totalorder 1, %s10
    %p140 = scmp.lt.s32.totalorder %s10, 3
    %p141 = pnand %p139, %p140
    %p142 = pneg %p141
    // Predicated region
    $region25: #{block_of_dmt3.2} parent=5 // pred_check
      _
    $region26: #{block_of_dmt3.2} parent=5 // pred_check_branch
      %144 = sbr.rel (%p141) target = $region28
    $region27: #{block_of_dmt3.2} parent=5 // pred_region
      %s145 = ssub.s32 %s10, 1
      %p146 = scmp.lt.s32.totalorder %s15, 1
      %s147 = scalar_select %p146, %s15, 1
      %s148 = smul.addr %s147, 16
      %s149 = smul.addr %s148, 8
      %s150 = scalar_lea.vmem %s0, %s149
      %p151 = pneg %p36
      %p152 = pneg %p33
      %p153 = pneg %p57
      %p154 = pneg %p54
      %p155 = pneg %p83
      %p156 = pneg %p80
      %s157 = smul.u32 8, %s15
      %p158 = scmp.lt.s32.totalorder %s157, 15
      %s159 = scalar_select %p158, %s157, 15
      %s160 = smul.addr %s159, 2
      %s161 = smul.addr %s160, 4
      %s162 = scalar_lea.vmem %s2, %s161
      %p163 = pneg %p109
      %p164 = pneg %p106
      %p165 = scmp.lt.s32.totalorder %s15, 1
      %s166 = scalar_select %p165, %s15, 1
      %s167 = smul.addr %s166, 2
      %s168 = smul.addr %s167, 2
      %s169 = scalar_lea.vmem %s3, %s168
      %p170 = scmp.lt.s32.totalorder %s15, 1
      %s171 = scalar_select %p170, %s15, 1
      %s172 = smul.addr %s171, 16
      %s173 = smul.addr %s172, 8
      %s174 = scalar_lea.vmem %s0, %s173
      %s175 = smul.u32 8, %s15
      %p176 = scmp.lt.s32.totalorder %s175, 15
      %s177 = scalar_select %p176, %s175, 15
      %s178 = smul.addr %s177, 2
      %s179 = smul.addr %s178, 4
      %s180 = scalar_lea.vmem %s2, %s179
      %s181 = smul.u32 8, %s15
      %p182 = scmp.lt.s32.totalorder %s15, 1
      %s183 = scalar_select %p182, %s15, 1
      %s184 = smul.addr %s183, 2
      %s185 = smul.addr %s184, 2
      %s186 = scalar_lea.vmem %s3, %s185
      %187 = vst [vmem:[#allocation2] sm:$0xff] 0.0
      %188 = vst [vmem:[#allocation2 + $0x8] sm:$0xff] 0.0
      %189 = vst [vmem:[#allocation2 + $0x10] sm:$0x3] 0.0
      %190 = vst [vmem:[#allocation2 + $0x18] sm:$0x3] 0.0
      %s191 = scalar_lea.vmem [#allocation2], 288
      %192 = vst [vmem:[%s191] sm:$0xff] 0.0
      %193 = vst [vmem:[%s191 + $0x8] sm:$0xff] 0.0
      %194 = vst [vmem:[%s191 + $0x10] sm:$0x3] 0.0
      %195 = vst [vmem:[%s191 + $0x18] sm:$0x3] 0.0
      %v196 = vlaneseq
      %vm197 = vcmp.ge.s32.totalorder %v196, 0
      %vm198 = vcmp.lt.s32.totalorder %v196, 256
      %vm199 = vmand %vm197, %vm198
      %200 = vst.msk [vmem:[#allocation2] ss:$8 sm:$0x3] %vm199, 0.0
      %201 = vst.msk [vmem:[#allocation2] ss:$8 sm:$0x0] %vm199, 0.0
      %s202 = scalar_lea.vmem [#allocation2], 32
      %203 = vst.msk [vmem:[%s202] ss:$8 sm:$0x3] %vm199, 0.0
      %204 = vst.msk [vmem:[%s202] ss:$8 sm:$0x0] %vm199, 0.0
      %s205 = scalar_lea.vmem [#allocation2], 64
      %206 = vst.msk [vmem:[%s205] ss:$8 sm:$0x3] %vm199, 0.0
      %207 = vst.msk [vmem:[%s205] ss:$8 sm:$0x0] %vm199, 0.0
      %s208 = scalar_lea.vmem [#allocation2], 96
      %209 = vst.msk [vmem:[%s208] ss:$8 sm:$0x3] %vm199, 0.0
      %210 = vst.msk [vmem:[%s208] ss:$8 sm:$0x0] %vm199, 0.0
      %s211 = scalar_lea.vmem [#allocation2], 128
      %212 = vst.msk [vmem:[%s211] ss:$8 sm:$0x3] %vm199, 0.0
      %213 = vst.msk [vmem:[%s211] ss:$8 sm:$0x0] %vm199, 0.0
      %s214 = scalar_lea.vmem [#allocation2], 160
      %215 = vst.msk [vmem:[%s214] ss:$8 sm:$0x3] %vm199, 0.0
      %216 = vst.msk [vmem:[%s214] ss:$8 sm:$0x0] %vm199, 0.0
      %s217 = scalar_lea.vmem [#allocation2], 192
      %218 = vst.msk [vmem:[%s217] ss:$8 sm:$0x3] %vm199, 0.0
      %219 = vst.msk [vmem:[%s217] ss:$8 sm:$0x0] %vm199, 0.0
      %s220 = scalar_lea.vmem [#allocation2], 224
      %221 = vst.msk [vmem:[%s220] ss:$8 sm:$0x3] %vm199, 0.0
      %222 = vst.msk [vmem:[%s220] ss:$8 sm:$0x0] %vm199, 0.0
      %s223 = scalar_lea.vmem [#allocation2], 256
      %224 = vst.msk [vmem:[%s223] ss:$8 sm:$0x3] %vm199, 0.0
      %225 = vst.msk [vmem:[%s223] ss:$8 sm:$0x0] %vm199, 0.0
      %s226 = scalar_lea.vmem [#allocation2], 288
      %227 = vst.msk [vmem:[%s226] ss:$8 sm:$0x3] %vm199, 0.0
      %228 = vst.msk [vmem:[%s226] ss:$8 sm:$0x0] %vm199, 0.0
      %s229 = scalar_lea.vmem [#allocation2], 17
      %230 = vst.msk [vmem:[%s229] ss:$8 sm:$0x3] %vm199, 0.0
      %231 = vst.msk [vmem:[%s229] ss:$8 sm:$0x0] %vm199, 0.0
      %s232 = scalar_lea.vmem [#allocation2], 49
      %233 = vst.msk [vmem:[%s232] ss:$8 sm:$0x3] %vm199, 0.0
      %234 = vst.msk [vmem:[%s232] ss:$8 sm:$0x0] %vm199, 0.0
      %s235 = scalar_lea.vmem [#allocation2], 81
      %236 = vst.msk [vmem:[%s235] ss:$8 sm:$0x3] %vm199, 0.0
      %237 = vst.msk [vmem:[%s235] ss:$8 sm:$0x0] %vm199, 0.0
      %s238 = scalar_lea.vmem [#allocation2], 113
      %239 = vst.msk [vmem:[%s238] ss:$8 sm:$0x3] %vm199, 0.0
      %240 = vst.msk [vmem:[%s238] ss:$8 sm:$0x0] %vm199, 0.0
      %s241 = scalar_lea.vmem [#allocation2], 145
      %242 = vst.msk [vmem:[%s241] ss:$8 sm:$0x3] %vm199, 0.0
      %243 = vst.msk [vmem:[%s241] ss:$8 sm:$0x0] %vm199, 0.0
      %s244 = scalar_lea.vmem [#allocation2], 177
      %245 = vst.msk [vmem:[%s244] ss:$8 sm:$0x3] %vm199, 0.0
      %246 = vst.msk [vmem:[%s244] ss:$8 sm:$0x0] %vm199, 0.0
      %s247 = scalar_lea.vmem [#allocation2], 209
      %248 = vst.msk [vmem:[%s247] ss:$8 sm:$0x3] %vm199, 0.0
      %249 = vst.msk [vmem:[%s247] ss:$8 sm:$0x0] %vm199, 0.0
      %s250 = scalar_lea.vmem [#allocation2], 241
      %251 = vst.msk [vmem:[%s250] ss:$8 sm:$0x3] %vm199, 0.0
      %252 = vst.msk [vmem:[%s250] ss:$8 sm:$0x0] %vm199, 0.0
      %s253 = scalar_lea.vmem [#allocation2], 273
      %254 = vst.msk [vmem:[%s253] ss:$8 sm:$0x3] %vm199, 0.0
      %255 = vst.msk [vmem:[%s253] ss:$8 sm:$0x0] %vm199, 0.0
      %s256 = scalar_lea.vmem [#allocation2], 305
      %257 = vst.msk [vmem:[%s256] ss:$8 sm:$0x3] %vm199, 0.0
      %258 = vst.msk [vmem:[%s256] ss:$8 sm:$0x0] %vm199, 0.0
      %v259 = vld [vmem:[%s174] sm:$0xff]
      %v260 = vld [vmem:[%s174 + $0x8] sm:$0xff]
      %v261 = vld [vmem:[%s174 + $0x10] sm:$0xff]
      %v262 = vld [vmem:[%s174 + $0x18] sm:$0xff]
      %v263 = vld [vmem:[%s174 + $0x20] sm:$0xff]
      %v264 = vld [vmem:[%s174 + $0x28] sm:$0xff]
      %v265 = vld [vmem:[%s174 + $0x30] sm:$0xff]
      %v266 = vld [vmem:[%s174 + $0x38] sm:$0xff]
      %v267 = vld [vmem:[%s174 + $0x40] sm:$0xff]
      %v268 = vld [vmem:[%s174 + $0x48] sm:$0xff]
      %v269 = vld [vmem:[%s174 + $0x50] sm:$0xff]
      %v270 = vld [vmem:[%s174 + $0x58] sm:$0xff]
      %v271 = vld [vmem:[%s174 + $0x60] sm:$0xff]
      %v272 = vld [vmem:[%s174 + $0x68] sm:$0xff]
      %v273 = vld [vmem:[%s174 + $0x70] sm:$0xff]
      %v274 = vld [vmem:[%s174 + $0x78] sm:$0xff]
      %v291 = vrot.slane %v259, 7
      %v292 = vrot.slane %v260, 7
      %v293 = vrot.slane %v261, 7
      %v294 = vrot.slane %v262, 7
      %v295 = vrot.slane %v263, 7
      %v296 = vrot.slane %v264, 7
      %v297 = vrot.slane %v265, 7
      %v298 = vrot.slane %v266, 7
      %v299 = vrot.slane %v267, 7
      %v300 = vrot.slane %v268, 7
      %v301 = vrot.slane %v269, 7
      %v302 = vrot.slane %v270, 7
      %v303 = vrot.slane %v271, 7
      %v304 = vrot.slane %v272, 7
      %v305 = vrot.slane %v273, 7
      %v306 = vrot.slane %v274, 7
      %s323 = scalar_lea.vmem [#allocation2], 32
      %324 = vst [vmem:[%s323] sm:$0xfe] %v291
      %325 = vst [vmem:[%s323 + $0x8] sm:$0xfe] %v292
      %326 = vst [vmem:[%s323 + $0x10] sm:$0x1] %v291
      %327 = vst [vmem:[%s323 + $0x18] sm:$0x1] %v292
      %328 = vst [vmem:[%s323 + $0x20] sm:$0xfe] %v293
      %329 = vst [vmem:[%s323 + $0x28] sm:$0xfe] %v294
      %330 = vst [vmem:[%s323 + $0x30] sm:$0x1] %v293
      %331 = vst [vmem:[%s323 + $0x38] sm:$0x1] %v294
      %332 = vst [vmem:[%s323 + $0x40] sm:$0xfe] %v295
      %333 = vst [vmem:[%s323 + $0x48] sm:$0xfe] %v296
      %334 = vst [vmem:[%s323 + $0x50] sm:$0x1] %v295
      %335 = vst [vmem:[%s323 + $0x58] sm:$0x1] %v296
      %336 = vst [vmem:[%s323 + $0x60] sm:$0xfe] %v297
      %337 = vst [vmem:[%s323 + $0x68] sm:$0xfe] %v298
      %338 = vst [vmem:[%s323 + $0x70] sm:$0x1] %v297
      %339 = vst [vmem:[%s323 + $0x78] sm:$0x1] %v298
      %340 = vst [vmem:[%s323 + $0x80] sm:$0xfe] %v299
      %341 = vst [vmem:[%s323 + $0x88] sm:$0xfe] %v300
      %342 = vst [vmem:[%s323 + $0x90] sm:$0x1] %v299
      %343 = vst [vmem:[%s323 + $0x98] sm:$0x1] %v300
      %344 = vst [vmem:[%s323 + $0xa0] sm:$0xfe] %v301
      %345 = vst [vmem:[%s323 + $0xa8] sm:$0xfe] %v302
      %346 = vst [vmem:[%s323 + $0xb0] sm:$0x1] %v301
      %347 = vst [vmem:[%s323 + $0xb8] sm:$0x1] %v302
      %348 = vst [vmem:[%s323 + $0xc0] sm:$0xfe] %v303
      %349 = vst [vmem:[%s323 + $0xc8] sm:$0xfe] %v304
      %350 = vst [vmem:[%s323 + $0xd0] sm:$0x1] %v303
      %351 = vst [vmem:[%s323 + $0xd8] sm:$0x1] %v304
      %352 = vst [vmem:[%s323 + $0xe0] sm:$0xfe] %v305
      %353 = vst [vmem:[%s323 + $0xe8] sm:$0xfe] %v306
      %354 = vst [vmem:[%s323 + $0xf0] sm:$0x1] %v305
      %355 = vst [vmem:[%s323 + $0xf8] sm:$0x1] %v306
      %v356 = vld [vmem:[#allocation2] sm:$0xff]
      %v357 = vld [vmem:[#allocation2 + $0x8] sm:$0xff]
      %v358 = vld [vmem:[#allocation2 + $0x20] sm:$0xff]
      %v359 = vld [vmem:[#allocation2 + $0x28] sm:$0xff]
      %v360 = vld [vmem:[#allocation2 + $0x40] sm:$0xff]
      %v361 = vld [vmem:[#allocation2 + $0x48] sm:$0xff]
      %v362 = vld [vmem:[#allocation2 + $0x60] sm:$0xff]
      %v363 = vld [vmem:[#allocation2 + $0x68] sm:$0xff]
      %v364 = vld [vmem:[#allocation2 + $0x80] sm:$0xff]
      %v365 = vld [vmem:[#allocation2 + $0x88] sm:$0xff]
      %v366 = vld [vmem:[#allocation2 + $0xa0] sm:$0xff]
      %v367 = vld [vmem:[#allocation2 + $0xa8] sm:$0xff]
      %v368 = vld [vmem:[#allocation2 + $0xc0] sm:$0xff]
      %v369 = vld [vmem:[#allocation2 + $0xc8] sm:$0xff]
      %v370 = vld [vmem:[#allocation2 + $0xe0] sm:$0xff]
      %v371 = vld [vmem:[#allocation2 + $0xe8] sm:$0xff]
      %v372 = vpack.c.bf16 %v358, %v356
      %v373 = vpack.c.bf16 %v359, %v357
      %v374 = vpack.c.bf16 %v362, %v360
      %v375 = vpack.c.bf16 %v363, %v361
      %v376 = vpack.c.bf16 %v366, %v364
      %v377 = vpack.c.bf16 %v367, %v365
      %v378 = vpack.c.bf16 %v370, %v368
      %v379 = vpack.c.bf16 %v371, %v369
      %v388 = vunpack.c.l.b16 %v372
      %v389 = vunpack.c.l.b16 %v373
      %v390 = vunpack.c.h.b16 %v372
      %v391 = vunpack.c.h.b16 %v373
      %v392 = vunpack.c.l.b16 %v374
      %v393 = vunpack.c.l.b16 %v375
      %v394 = vunpack.c.h.b16 %v374
      %v395 = vunpack.c.h.b16 %v375
      %v396 = vunpack.c.l.b16 %v376
      %v397 = vunpack.c.l.b16 %v377
      %v398 = vunpack.c.h.b16 %v376
      %v399 = vunpack.c.h.b16 %v377
      %v400 = vunpack.c.l.b16 %v378
      %v401 = vunpack.c.l.b16 %v379
      %v402 = vunpack.c.h.b16 %v378
      %v403 = vunpack.c.h.b16 %v379
      %v404 = vpack.c.b16 %v389, %v388
      %v405 = vpack.c.b16 %v391, %v390
      %v406 = vpack.c.b16 %v393, %v392
      %v407 = vpack.c.b16 %v395, %v394
      %v408 = vpack.c.b16 %v397, %v396
      %v409 = vpack.c.b16 %v399, %v398
      %v410 = vpack.c.b16 %v401, %v400
      %v411 = vpack.c.b16 %v403, %v402
      %420 = vst [vmem:[#allocation3] sm:$0xff] %v404
      %421 = vst [vmem:[#allocation3 + $0x48] sm:$0xff] %v405
      %422 = vst [vmem:[#allocation3 + $0x90] sm:$0xff] %v406
      %423 = vst [vmem:[#allocation3 + $0xd8] sm:$0xff] %v407
      %424 = vst [vmem:[#allocation3 + $0x120] sm:$0xff] %v408
      %425 = vst [vmem:[#allocation3 + $0x168] sm:$0xff] %v409
      %426 = vst [vmem:[#allocation3 + $0x1b0] sm:$0xff] %v410
      %427 = vst [vmem:[#allocation3 + $0x1f8] sm:$0xff] %v411
      %v428 = vld [vmem:[#allocation2] sm:$0xfe]
      %v429 = vld [vmem:[#allocation2 + $0x8] sm:$0xfe]
      %v430 = vld [vmem:[#allocation2 + $0x10] sm:$0x1]
      %v431 = vld [vmem:[#allocation2 + $0x18] sm:$0x1]
      %v432 = vld [vmem:[#allocation2 + $0x20] sm:$0xfe]
      %v433 = vld [vmem:[#allocation2 + $0x28] sm:$0xfe]
      %v434 = vld [vmem:[#allocation2 + $0x30] sm:$0x1]
      %v435 = vld [vmem:[#allocation2 + $0x38] sm:$0x1]
      %v436 = vld [vmem:[#allocation2 + $0x40] sm:$0xfe]
      %v437 = vld [vmem:[#allocation2 + $0x48] sm:$0xfe]
      %v438 = vld [vmem:[#allocation2 + $0x50] sm:$0x1]
      %v439 = vld [vmem:[#allocation2 + $0x58] sm:$0x1]
      %v440 = vld [vmem:[#allocation2 + $0x60] sm:$0xfe]
      %v441 = vld [vmem:[#allocation2 + $0x68] sm:$0xfe]
      %v442 = vld [vmem:[#allocation2 + $0x70] sm:$0x1]
      %v443 = vld [vmem:[#allocation2 + $0x78] sm:$0x1]
      %v444 = vld [vmem:[#allocation2 + $0x80] sm:$0xfe]
      %v445 = vld [vmem:[#allocation2 + $0x88] sm:$0xfe]
      %v446 = vld [vmem:[#allocation2 + $0x90] sm:$0x1]
      %v447 = vld [vmem:[#allocation2 + $0x98] sm:$0x1]
      %v448 = vld [vmem:[#allocation2 + $0xa0] sm:$0xfe]
      %v449 = vld [vmem:[#allocation2 + $0xa8] sm:$0xfe]
      %v450 = vld [vmem:[#allocation2 + $0xb0] sm:$0x1]
      %v451 = vld [vmem:[#allocation2 + $0xb8] sm:$0x1]
      %v452 = vld [vmem:[#allocation2 + $0xc0] sm:$0xfe]
      %v453 = vld [vmem:[#allocation2 + $0xc8] sm:$0xfe]
      %v454 = vld [vmem:[#allocation2 + $0xd0] sm:$0x1]
      %v455 = vld [vmem:[#allocation2 + $0xd8] sm:$0x1]
      %v456 = vld [vmem:[#allocation2 + $0xe0] sm:$0xfe]
      %v457 = vld [vmem:[#allocation2 + $0xe8] sm:$0xfe]
      %v458 = vld [vmem:[#allocation2 + $0xf0] sm:$0x1]
      %v459 = vld [vmem:[#allocation2 + $0xf8] sm:$0x1]
      %vm492 = vcmask 1046528
      %v493 = vrot.slane %v428, 1
      %v494 = vrot.slane %v430, 1
      %v495 = vsel %vm492, %v493, %v494
      %v496 = vrot.slane %v429, 1
      %v497 = vrot.slane %v431, 1
      %v498 = vsel %vm492, %v496, %v497
      %v499 = vrot.slane %v432, 1
      %v500 = vrot.slane %v434, 1
      %v501 = vsel %vm492, %v499, %v500
      %v502 = vrot.slane %v433, 1
      %v503 = vrot.slane %v435, 1
      %v504 = vsel %vm492, %v502, %v503
      %v505 = vrot.slane %v436, 1
      %v506 = vrot.slane %v438, 1
      %v507 = vsel %vm492, %v505, %v506
      %v508 = vrot.slane %v437, 1
      %v509 = vrot.slane %v439, 1
      %v510 = vsel %vm492, %v508, %v509
      %v511 = vrot.slane %v440, 1
      %v512 = vrot.slane %v442, 1
      %v513 = vsel %vm492, %v511, %v512
      %v514 = vrot.slane %v441, 1
      %v515 = vrot.slane %v443, 1
      %v516 = vsel %vm492, %v514, %v515
      %v517 = vrot.slane %v444, 1
      %v518 = vrot.slane %v446, 1
      %v519 = vsel %vm492, %v517, %v518
      %v520 = vrot.slane %v445, 1
      %v521 = vrot.slane %v447, 1
      %v522 = vsel %vm492, %v520, %v521
      %v523 = vrot.slane %v448, 1
      %v524 = vrot.slane %v450, 1
      %v525 = vsel %vm492, %v523, %v524
      %v526 = vrot.slane %v449, 1
      %v527 = vrot.slane %v451, 1
      %v528 = vsel %vm492, %v526, %v527
      %v529 = vrot.slane %v452, 1
      %v530 = vrot.slane %v454, 1
      %v531 = vsel %vm492, %v529, %v530
      %v532 = vrot.slane %v453, 1
      %v533 = vrot.slane %v455, 1
      %v534 = vsel %vm492, %v532, %v533
      %v535 = vrot.slane %v456, 1
      %v536 = vrot.slane %v458, 1
      %v537 = vsel %vm492, %v535, %v536
      %v538 = vrot.slane %v457, 1
      %v539 = vrot.slane %v459, 1
      %v540 = vsel %vm492, %v538, %v539
      %v557 = vpack.c.bf16 %v501, %v495
      %v558 = vpack.c.bf16 %v504, %v498
      %v559 = vpack.c.bf16 %v513, %v507
      %v560 = vpack.c.bf16 %v516, %v510
      %v561 = vpack.c.bf16 %v525, %v519
      %v562 = vpack.c.bf16 %v528, %v522
      %v563 = vpack.c.bf16 %v537, %v531
      %v564 = vpack.c.bf16 %v540, %v534
      %v573 = vunpack.c.l.b16 %v557
      %v574 = vunpack.c.l.b16 %v558
      %v575 = vunpack.c.h.b16 %v557
      %v576 = vunpack.c.h.b16 %v558
      %v577 = vunpack.c.l.b16 %v559
      %v578 = vunpack.c.l.b16 %v560
      %v579 = vunpack.c.h.b16 %v559
      %v580 = vunpack.c.h.b16 %v560
      %v581 = vunpack.c.l.b16 %v561
      %v582 = vunpack.c.l.b16 %v562
      %v583 = vunpack.c.h.b16 %v561
      %v584 = vunpack.c.h.b16 %v562
      %v585 = vunpack.c.l.b16 %v563
      %v586 = vunpack.c.l.b16 %v564
      %v587 = vunpack.c.h.b16 %v563
      %v588 = vunpack.c.h.b16 %v564
      %v589 = vpack.c.b16 %v574, %v573
      %v590 = vpack.c.b16 %v576, %v575
      %v591 = vpack.c.b16 %v578, %v577
      %v592 = vpack.c.b16 %v580, %v579
      %v593 = vpack.c.b16 %v582, %v581
      %v594 = vpack.c.b16 %v584, %v583
      %v595 = vpack.c.b16 %v586, %v585
      %v596 = vpack.c.b16 %v588, %v587
      %605 = vst [vmem:[#allocation3 + $0x8] sm:$0xff] %v589
      %606 = vst [vmem:[#allocation3 + $0x50] sm:$0xff] %v590
      %607 = vst [vmem:[#allocation3 + $0x98] sm:$0xff] %v591
      %608 = vst [vmem:[#allocation3 + $0xe0] sm:$0xff] %v592
      %609 = vst [vmem:[#allocation3 + $0x128] sm:$0xff] %v593
      %610 = vst [vmem:[#allocation3 + $0x170] sm:$0xff] %v594
      %611 = vst [vmem:[#allocation3 + $0x1b8] sm:$0xff] %v595
      %612 = vst [vmem:[#allocation3 + $0x200] sm:$0xff] %v596
      %v613 = vld [vmem:[#allocation2] sm:$0xfc]
      %v614 = vld [vmem:[#allocation2 + $0x8] sm:$0xfc]
      %v615 = vld [vmem:[#allocation2 + $0x10] sm:$0x3]
      %v616 = vld [vmem:[#allocation2 + $0x18] sm:$0x3]
      %v617 = vld [vmem:[#allocation2 + $0x20] sm:$0xfc]
      %v618 = vld [vmem:[#allocation2 + $0x28] sm:$0xfc]
      %v619 = vld [vmem:[#allocation2 + $0x30] sm:$0x3]
      %v620 = vld [vmem:[#allocation2 + $0x38] sm:$0x3]
      %v621 = vld [vmem:[#allocation2 + $0x40] sm:$0xfc]
      %v622 = vld [vmem:[#allocation2 + $0x48] sm:$0xfc]
      %v623 = vld [vmem:[#allocation2 + $0x50] sm:$0x3]
      %v624 = vld [vmem:[#allocation2 + $0x58] sm:$0x3]
      %v625 = vld [vmem:[#allocation2 + $0x60] sm:$0xfc]
      %v626 = vld [vmem:[#allocation2 + $0x68] sm:$0xfc]
      %v627 = vld [vmem:[#allocation2 + $0x70] sm:$0x3]
      %v628 = vld [vmem:[#allocation2 + $0x78] sm:$0x3]
      %v629 = vld [vmem:[#allocation2 + $0x80] sm:$0xfc]
      %v630 = vld [vmem:[#allocation2 + $0x88] sm:$0xfc]
      %v631 = vld [vmem:[#allocation2 + $0x90] sm:$0x3]
      %v632 = vld [vmem:[#allocation2 + $0x98] sm:$0x3]
      %v633 = vld [vmem:[#allocation2 + $0xa0] sm:$0xfc]
      %v634 = vld [vmem:[#allocation2 + $0xa8] sm:$0xfc]
      %v635 = vld [vmem:[#allocation2 + $0xb0] sm:$0x3]
      %v636 = vld [vmem:[#allocation2 + $0xb8] sm:$0x3]
      %v637 = vld [vmem:[#allocation2 + $0xc0] sm:$0xfc]
      %v638 = vld [vmem:[#allocation2 + $0xc8] sm:$0xfc]
      %v639 = vld [vmem:[#allocation2 + $0xd0] sm:$0x3]
      %v640 = vld [vmem:[#allocation2 + $0xd8] sm:$0x3]
      %v641 = vld [vmem:[#allocation2 + $0xe0] sm:$0xfc]
      %v642 = vld [vmem:[#allocation2 + $0xe8] sm:$0xfc]
      %v643 = vld [vmem:[#allocation2 + $0xf0] sm:$0x3]
      %v644 = vld [vmem:[#allocation2 + $0xf8] sm:$0x3]
      %vm677 = vcmask 1045504
      %v678 = vrot.slane %v613, 2
      %v679 = vrot.slane %v615, 2
      %v680 = vsel %vm677, %v678, %v679
      %v681 = vrot.slane %v614, 2
      %v682 = vrot.slane %v616, 2
      %v683 = vsel %vm677, %v681, %v682
      %v684 = vrot.slane %v617, 2
      %v685 = vrot.slane %v619, 2
      %v686 = vsel %vm677, %v684, %v685
      %v687 = vrot.slane %v618, 2
      %v688 = vrot.slane %v620, 2
      %v689 = vsel %vm677, %v687, %v688
      %v690 = vrot.slane %v621, 2
      %v691 = vrot.slane %v623, 2
      %v692 = vsel %vm677, %v690, %v691
      %v693 = vrot.slane %v622, 2
      %v694 = vrot.slane %v624, 2
      %v695 = vsel %vm677, %v693, %v694
      %v696 = vrot.slane %v625, 2
      %v697 = vrot.slane %v627, 2
      %v698 = vsel %vm677, %v696, %v697
      %v699 = vrot.slane %v626, 2
      %v700 = vrot.slane %v628, 2
      %v701 = vsel %vm677, %v699, %v700
      %v702 = vrot.slane %v629, 2
      %v703 = vrot.slane %v631, 2
      %v704 = vsel %vm677, %v702, %v703
      %v705 = vrot.slane %v630, 2
      %v706 = vrot.slane %v632, 2
      %v707 = vsel %vm677, %v705, %v706
      %v708 = vrot.slane %v633, 2
      %v709 = vrot.slane %v635, 2
      %v710 = vsel %vm677, %v708, %v709
      %v711 = vrot.slane %v634, 2
      %v712 = vrot.slane %v636, 2
      %v713 = vsel %vm677, %v711, %v712
      %v714 = vrot.slane %v637, 2
      %v715 = vrot.slane %v639, 2
      %v716 = vsel %vm677, %v714, %v715
      %v717 = vrot.slane %v638, 2
      %v718 = vrot.slane %v640, 2
      %v719 = vsel %vm677, %v717, %v718
      %v720 = vrot.slane %v641, 2
      %v721 = vrot.slane %v643, 2
      %v722 = vsel %vm677, %v720, %v721
      %v723 = vrot.slane %v642, 2
      %v724 = vrot.slane %v644, 2
      %v725 = vsel %vm677, %v723, %v724
      %v742 = vpack.c.bf16 %v686, %v680
      %v743 = vpack.c.bf16 %v689, %v683
      %v744 = vpack.c.bf16 %v698, %v692
      %v745 = vpack.c.bf16 %v701, %v695
      %v746 = vpack.c.bf16 %v710, %v704
      %v747 = vpack.c.bf16 %v713, %v707
      %v748 = vpack.c.bf16 %v722, %v716
      %v749 = vpack.c.bf16 %v725, %v719
      %v758 = vunpack.c.l.b16 %v742
      %v759 = vunpack.c.l.b16 %v743
      %v760 = vunpack.c.h.b16 %v742
      %v761 = vunpack.c.h.b16 %v743
      %v762 = vunpack.c.l.b16 %v744
      %v763 = vunpack.c.l.b16 %v745
      %v764 = vunpack.c.h.b16 %v744
      %v765 = vunpack.c.h.b16 %v745
      %v766 = vunpack.c.l.b16 %v746
      %v767 = vunpack.c.l.b16 %v747
      %v768 = vunpack.c.h.b16 %v746
      %v769 = vunpack.c.h.b16 %v747
      %v770 = vunpack.c.l.b16 %v748
      %v771 = vunpack.c.l.b16 %v749
      %v772 = vunpack.c.h.b16 %v748
      %v773 = vunpack.c.h.b16 %v749
      %v774 = vpack.c.b16 %v759, %v758
      %v775 = vpack.c.b16 %v761, %v760
      %v776 = vpack.c.b16 %v763, %v762
      %v777 = vpack.c.b16 %v765, %v764
      %v778 = vpack.c.b16 %v767, %v766
      %v779 = vpack.c.b16 %v769, %v768
      %v780 = vpack.c.b16 %v771, %v770
      %v781 = vpack.c.b16 %v773, %v772
      %790 = vst [vmem:[#allocation3 + $0x10] sm:$0xff] %v774
      %791 = vst [vmem:[#allocation3 + $0x58] sm:$0xff] %v775
      %792 = vst [vmem:[#allocation3 + $0xa0] sm:$0xff] %v776
      %793 = vst [vmem:[#allocation3 + $0xe8] sm:$0xff] %v777
      %794 = vst [vmem:[#allocation3 + $0x130] sm:$0xff] %v778
      %795 = vst [vmem:[#allocation3 + $0x178] sm:$0xff] %v779
      %796 = vst [vmem:[#allocation3 + $0x1c0] sm:$0xff] %v780
      %797 = vst [vmem:[#allocation3 + $0x208] sm:$0xff] %v781
      %v798 = vld [vmem:[%s323] sm:$0xff]
      %v799 = vld [vmem:[%s323 + $0x8] sm:$0xff]
      %v800 = vld [vmem:[%s323 + $0x20] sm:$0xff]
      %v801 = vld [vmem:[%s323 + $0x28] sm:$0xff]
      %v802 = vld [vmem:[%s323 + $0x40] sm:$0xff]
      %v803 = vld [vmem:[%s323 + $0x48] sm:$0xff]
      %v804 = vld [vmem:[%s323 + $0x60] sm:$0xff]
      %v805 = vld [vmem:[%s323 + $0x68] sm:$0xff]
      %v806 = vld [vmem:[%s323 + $0x80] sm:$0xff]
      %v807 = vld [vmem:[%s323 + $0x88] sm:$0xff]
      %v808 = vld [vmem:[%s323 + $0xa0] sm:$0xff]
      %v809 = vld [vmem:[%s323 + $0xa8] sm:$0xff]
      %v810 = vld [vmem:[%s323 + $0xc0] sm:$0xff]
      %v811 = vld [vmem:[%s323 + $0xc8] sm:$0xff]
      %v812 = vld [vmem:[%s323 + $0xe0] sm:$0xff]
      %v813 = vld [vmem:[%s323 + $0xe8] sm:$0xff]
      %v814 = vpack.c.bf16 %v800, %v798
      %v815 = vpack.c.bf16 %v801, %v799
      %v816 = vpack.c.bf16 %v804, %v802
      %v817 = vpack.c.bf16 %v805, %v803
      %v818 = vpack.c.bf16 %v808, %v806
      %v819 = vpack.c.bf16 %v809, %v807
      %v820 = vpack.c.bf16 %v812, %v810
      %v821 = vpack.c.bf16 %v813, %v811
      %v830 = vunpack.c.l.b16 %v814
      %v831 = vunpack.c.l.b16 %v815
      %v832 = vunpack.c.h.b16 %v814
      %v833 = vunpack.c.h.b16 %v815
      %v834 = vunpack.c.l.b16 %v816
      %v835 = vunpack.c.l.b16 %v817
      %v836 = vunpack.c.h.b16 %v816
      %v837 = vunpack.c.h.b16 %v817
      %v838 = vunpack.c.l.b16 %v818
      %v839 = vunpack.c.l.b16 %v819
      %v840 = vunpack.c.h.b16 %v818
      %v841 = vunpack.c.h.b16 %v819
      %v842 = vunpack.c.l.b16 %v820
      %v843 = vunpack.c.l.b16 %v821
      %v844 = vunpack.c.h.b16 %v820
      %v845 = vunpack.c.h.b16 %v821
      %v846 = vpack.c.b16 %v831, %v830
      %v847 = vpack.c.b16 %v833, %v832
      %v848 = vpack.c.b16 %v835, %v834
      %v849 = vpack.c.b16 %v837, %v836
      %v850 = vpack.c.b16 %v839, %v838
      %v851 = vpack.c.b16 %v841, %v840
      %v852 = vpack.c.b16 %v843, %v842
      %v853 = vpack.c.b16 %v845, %v844
      %862 = vst [vmem:[#allocation3 + $0x18] sm:$0xff] %v846
      %863 = vst [vmem:[#allocation3 + $0x60] sm:$0xff] %v847
      %864 = vst [vmem:[#allocation3 + $0xa8] sm:$0xff] %v848
      %865 = vst [vmem:[#allocation3 + $0xf0] sm:$0xff] %v849
      %866 = vst [vmem:[#allocation3 + $0x138] sm:$0xff] %v850
      %867 = vst [vmem:[#allocation3 + $0x180] sm:$0xff] %v851
      %868 = vst [vmem:[#allocation3 + $0x1c8] sm:$0xff] %v852
      %869 = vst [vmem:[#allocation3 + $0x210] sm:$0xff] %v853
      %v870 = vld [vmem:[%s323] sm:$0xfe]
      %v871 = vld [vmem:[%s323 + $0x8] sm:$0xfe]
      %v872 = vld [vmem:[%s323 + $0x10] sm:$0x1]
      %v873 = vld [vmem:[%s323 + $0x18] sm:$0x1]
      %v874 = vld [vmem:[%s323 + $0x20] sm:$0xfe]
      %v875 = vld [vmem:[%s323 + $0x28] sm:$0xfe]
      %v876 = vld [vmem:[%s323 + $0x30] sm:$0x1]
      %v877 = vld [vmem:[%s323 + $0x38] sm:$0x1]
      %v878 = vld [vmem:[%s323 + $0x40] sm:$0xfe]
      %v879 = vld [vmem:[%s323 + $0x48] sm:$0xfe]
      %v880 = vld [vmem:[%s323 + $0x50] sm:$0x1]
      %v881 = vld [vmem:[%s323 + $0x58] sm:$0x1]
      %v882 = vld [vmem:[%s323 + $0x60] sm:$0xfe]
      %v883 = vld [vmem:[%s323 + $0x68] sm:$0xfe]
      %v884 = vld [vmem:[%s323 + $0x70] sm:$0x1]
      %v885 = vld [vmem:[%s323 + $0x78] sm:$0x1]
      %v886 = vld [vmem:[%s323 + $0x80] sm:$0xfe]
      %v887 = vld [vmem:[%s323 + $0x88] sm:$0xfe]
      %v888 = vld [vmem:[%s323 + $0x90] sm:$0x1]
      %v889 = vld [vmem:[%s323 + $0x98] sm:$0x1]
      %v890 = vld [vmem:[%s323 + $0xa0] sm:$0xfe]
      %v891 = vld [vmem:[%s323 + $0xa8] sm:$0xfe]
      %v892 = vld [vmem:[%s323 + $0xb0] sm:$0x1]
      %v893 = vld [vmem:[%s323 + $0xb8] sm:$0x1]
      %v894 = vld [vmem:[%s323 + $0xc0] sm:$0xfe]
      %v895 = vld [vmem:[%s323 + $0xc8] sm:$0xfe]
      %v896 = vld [vmem:[%s323 + $0xd0] sm:$0x1]
      %v897 = vld [vmem:[%s323 + $0xd8] sm:$0x1]
      %v898 = vld [vmem:[%s323 + $0xe0] sm:$0xfe]
      %v899 = vld [vmem:[%s323 + $0xe8] sm:$0xfe]
      %v900 = vld [vmem:[%s323 + $0xf0] sm:$0x1]
      %v901 = vld [vmem:[%s323 + $0xf8] sm:$0x1]
      %v934 = vrot.slane %v870, 1
      %v935 = vrot.slane %v872, 1
      %v936 = vsel %vm492, %v934, %v935
      %v937 = vrot.slane %v871, 1
      %v938 = vrot.slane %v873, 1
      %v939 = vsel %vm492, %v937, %v938
      %v940 = vrot.slane %v874, 1
      %v941 = vrot.slane %v876, 1
      %v942 = vsel %vm492, %v940, %v941
      %v943 = vrot.slane %v875, 1
      %v944 = vrot.slane %v877, 1
      %v945 = vsel %vm492, %v943, %v944
      %v946 = vrot.slane %v878, 1
      %v947 = vrot.slane %v880, 1
      %v948 = vsel %vm492, %v946, %v947
      %v949 = vrot.slane %v879, 1
      %v950 = vrot.slane %v881, 1
      %v951 = vsel %vm492, %v949, %v950
      %v952 = vrot.slane %v882, 1
      %v953 = vrot.slane %v884, 1
      %v954 = vsel %vm492, %v952, %v953
      %v955 = vrot.slane %v883, 1
      %v956 = vrot.slane %v885, 1
      %v957 = vsel %vm492, %v955, %v956
      %v958 = vrot.slane %v886, 1
      %v959 = vrot.slane %v888, 1
      %v960 = vsel %vm492, %v958, %v959
      %v961 = vrot.slane %v887, 1
      %v962 = vrot.slane %v889, 1
      %v963 = vsel %vm492, %v961, %v962
      %v964 = vrot.slane %v890, 1
      %v965 = vrot.slane %v892, 1
      %v966 = vsel %vm492, %v964, %v965
      %v967 = vrot.slane %v891, 1
      %v968 = vrot.slane %v893, 1
      %v969 = vsel %vm492, %v967, %v968
      %v970 = vrot.slane %v894, 1
      %v971 = vrot.slane %v896, 1
      %v972 = vsel %vm492, %v970, %v971
      %v973 = vrot.slane %v895, 1
      %v974 = vrot.slane %v897, 1
      %v975 = vsel %vm492, %v973, %v974
      %v976 = vrot.slane %v898, 1
      %v977 = vrot.slane %v900, 1
      %v978 = vsel %vm492, %v976, %v977
      %v979 = vrot.slane %v899, 1
      %v980 = vrot.slane %v901, 1
      %v981 = vsel %vm492, %v979, %v980
      %v998 = vpack.c.bf16 %v942, %v936
      %v999 = vpack.c.bf16 %v945, %v939
      %v1000 = vpack.c.bf16 %v954, %v948
      %v1001 = vpack.c.bf16 %v957, %v951
      %v1002 = vpack.c.bf16 %v966, %v960
      %v1003 = vpack.c.bf16 %v969, %v963
      %v1004 = vpack.c.bf16 %v978, %v972
      %v1005 = vpack.c.bf16 %v981, %v975
      %v1014 = vunpack.c.l.b16 %v998
      %v1015 = vunpack.c.l.b16 %v999
      %v1016 = vunpack.c.h.b16 %v998
      %v1017 = vunpack.c.h.b16 %v999
      %v1018 = vunpack.c.l.b16 %v1000
      %v1019 = vunpack.c.l.b16 %v1001
      %v1020 = vunpack.c.h.b16 %v1000
      %v1021 = vunpack.c.h.b16 %v1001
      %v1022 = vunpack.c.l.b16 %v1002
      %v1023 = vunpack.c.l.b16 %v1003
      %v1024 = vunpack.c.h.b16 %v1002
      %v1025 = vunpack.c.h.b16 %v1003
      %v1026 = vunpack.c.l.b16 %v1004
      %v1027 = vunpack.c.l.b16 %v1005
      %v1028 = vunpack.c.h.b16 %v1004
      %v1029 = vunpack.c.h.b16 %v1005
      %v1030 = vpack.c.b16 %v1015, %v1014
      %v1031 = vpack.c.b16 %v1017, %v1016
      %v1032 = vpack.c.b16 %v1019, %v1018
      %v1033 = vpack.c.b16 %v1021, %v1020
      %v1034 = vpack.c.b16 %v1023, %v1022
      %v1035 = vpack.c.b16 %v1025, %v1024
      %v1036 = vpack.c.b16 %v1027, %v1026
      %v1037 = vpack.c.b16 %v1029, %v1028
      %1046 = vst [vmem:[#allocation3 + $0x20] sm:$0xff] %v1030
      %1047 = vst [vmem:[#allocation3 + $0x68] sm:$0xff] %v1031
      %1048 = vst [vmem:[#allocation3 + $0xb0] sm:$0xff] %v1032
      %1049 = vst [vmem:[#allocation3 + $0xf8] sm:$0xff] %v1033
      %1050 = vst [vmem:[#allocation3 + $0x140] sm:$0xff] %v1034
      %1051 = vst [vmem:[#allocation3 + $0x188] sm:$0xff] %v1035
      %1052 = vst [vmem:[#allocation3 + $0x1d0] sm:$0xff] %v1036
      %1053 = vst [vmem:[#allocation3 + $0x218] sm:$0xff] %v1037
      %v1054 = vld [vmem:[%s323] sm:$0xfc]
      %v1055 = vld [vmem:[%s323 + $0x8] sm:$0xfc]
      %v1056 = vld [vmem:[%s323 + $0x10] sm:$0x3]
      %v1057 = vld [vmem:[%s323 + $0x18] sm:$0x3]
      %v1058 = vld [vmem:[%s323 + $0x20] sm:$0xfc]
      %v1059 = vld [vmem:[%s323 + $0x28] sm:$0xfc]
      %v1060 = vld [vmem:[%s323 + $0x30] sm:$0x3]
      %v1061 = vld [vmem:[%s323 + $0x38] sm:$0x3]
      %v1062 = vld [vmem:[%s323 + $0x40] sm:$0xfc]
      %v1063 = vld [vmem:[%s323 + $0x48] sm:$0xfc]
      %v1064 = vld [vmem:[%s323 + $0x50] sm:$0x3]
      %v1065 = vld [vmem:[%s323 + $0x58] sm:$0x3]
      %v1066 = vld [vmem:[%s323 + $0x60] sm:$0xfc]
      %v1067 = vld [vmem:[%s323 + $0x68] sm:$0xfc]
      %v1068 = vld [vmem:[%s323 + $0x70] sm:$0x3]
      %v1069 = vld [vmem:[%s323 + $0x78] sm:$0x3]
      %v1070 = vld [vmem:[%s323 + $0x80] sm:$0xfc]
      %v1071 = vld [vmem:[%s323 + $0x88] sm:$0xfc]
      %v1072 = vld [vmem:[%s323 + $0x90] sm:$0x3]
      %v1073 = vld [vmem:[%s323 + $0x98] sm:$0x3]
      %v1074 = vld [vmem:[%s323 + $0xa0] sm:$0xfc]
      %v1075 = vld [vmem:[%s323 + $0xa8] sm:$0xfc]
      %v1076 = vld [vmem:[%s323 + $0xb0] sm:$0x3]
      %v1077 = vld [vmem:[%s323 + $0xb8] sm:$0x3]
      %v1078 = vld [vmem:[%s323 + $0xc0] sm:$0xfc]
      %v1079 = vld [vmem:[%s323 + $0xc8] sm:$0xfc]
      %v1080 = vld [vmem:[%s323 + $0xd0] sm:$0x3]
      %v1081 = vld [vmem:[%s323 + $0xd8] sm:$0x3]
      %v1082 = vld [vmem:[%s323 + $0xe0] sm:$0xfc]
      %v1083 = vld [vmem:[%s323 + $0xe8] sm:$0xfc]
      %v1084 = vld [vmem:[%s323 + $0xf0] sm:$0x3]
      %v1085 = vld [vmem:[%s323 + $0xf8] sm:$0x3]
      %v1118 = vrot.slane %v1054, 2
      %v1119 = vrot.slane %v1056, 2
      %v1120 = vsel %vm677, %v1118, %v1119
      %v1121 = vrot.slane %v1055, 2
      %v1122 = vrot.slane %v1057, 2
      %v1123 = vsel %vm677, %v1121, %v1122
      %v1124 = vrot.slane %v1058, 2
      %v1125 = vrot.slane %v1060, 2
      %v1126 = vsel %vm677, %v1124, %v1125
      %v1127 = vrot.slane %v1059, 2
      %v1128 = vrot.slane %v1061, 2
      %v1129 = vsel %vm677, %v1127, %v1128
      %v1130 = vrot.slane %v1062, 2
      %v1131 = vrot.slane %v1064, 2
      %v1132 = vsel %vm677, %v1130, %v1131
      %v1133 = vrot.slane %v1063, 2
      %v1134 = vrot.slane %v1065, 2
      %v1135 = vsel %vm677, %v1133, %v1134
      %v1136 = vrot.slane %v1066, 2
      %v1137 = vrot.slane %v1068, 2
      %v1138 = vsel %vm677, %v1136, %v1137
      %v1139 = vrot.slane %v1067, 2
      %v1140 = vrot.slane %v1069, 2
      %v1141 = vsel %vm677, %v1139, %v1140
      %v1142 = vrot.slane %v1070, 2
      %v1143 = vrot.slane %v1072, 2
      %v1144 = vsel %vm677, %v1142, %v1143
      %v1145 = vrot.slane %v1071, 2
      %v1146 = vrot.slane %v1073, 2
      %v1147 = vsel %vm677, %v1145, %v1146
      %v1148 = vrot.slane %v1074, 2
      %v1149 = vrot.slane %v1076, 2
      %v1150 = vsel %vm677, %v1148, %v1149
      %v1151 = vrot.slane %v1075, 2
      %v1152 = vrot.slane %v1077, 2
      %v1153 = vsel %vm677, %v1151, %v1152
      %v1154 = vrot.slane %v1078, 2
      %v1155 = vrot.slane %v1080, 2
      %v1156 = vsel %vm677, %v1154, %v1155
      %v1157 = vrot.slane %v1079, 2
      %v1158 = vrot.slane %v1081, 2
      %v1159 = vsel %vm677, %v1157, %v1158
      %v1160 = vrot.slane %v1082, 2
      %v1161 = vrot.slane %v1084, 2
      %v1162 = vsel %vm677, %v1160, %v1161
      %v1163 = vrot.slane %v1083, 2
      %v1164 = vrot.slane %v1085, 2
      %v1165 = vsel %vm677, %v1163, %v1164
      %v1182 = vpack.c.bf16 %v1126, %v1120
      %v1183 = vpack.c.bf16 %v1129, %v1123
      %v1184 = vpack.c.bf16 %v1138, %v1132
      %v1185 = vpack.c.bf16 %v1141, %v1135
      %v1186 = vpack.c.bf16 %v1150, %v1144
      %v1187 = vpack.c.bf16 %v1153, %v1147
      %v1188 = vpack.c.bf16 %v1162, %v1156
      %v1189 = vpack.c.bf16 %v1165, %v1159
      %v1198 = vunpack.c.l.b16 %v1182
      %v1199 = vunpack.c.l.b16 %v1183
      %v1200 = vunpack.c.h.b16 %v1182
      %v1201 = vunpack.c.h.b16 %v1183
      %v1202 = vunpack.c.l.b16 %v1184
      %v1203 = vunpack.c.l.b16 %v1185
      %v1204 = vunpack.c.h.b16 %v1184
      %v1205 = vunpack.c.h.b16 %v1185
      %v1206 = vunpack.c.l.b16 %v1186
      %v1207 = vunpack.c.l.b16 %v1187
      %v1208 = vunpack.c.h.b16 %v1186
      %v1209 = vunpack.c.h.b16 %v1187
      %v1210 = vunpack.c.l.b16 %v1188
      %v1211 = vunpack.c.l.b16 %v1189
      %v1212 = vunpack.c.h.b16 %v1188
      %v1213 = vunpack.c.h.b16 %v1189
      %v1214 = vpack.c.b16 %v1199, %v1198
      %v1215 = vpack.c.b16 %v1201, %v1200
      %v1216 = vpack.c.b16 %v1203, %v1202
      %v1217 = vpack.c.b16 %v1205, %v1204
      %v1218 = vpack.c.b16 %v1207, %v1206
      %v1219 = vpack.c.b16 %v1209, %v1208
      %v1220 = vpack.c.b16 %v1211, %v1210
      %v1221 = vpack.c.b16 %v1213, %v1212
      %1230 = vst [vmem:[#allocation3 + $0x28] sm:$0xff] %v1214
      %1231 = vst [vmem:[#allocation3 + $0x70] sm:$0xff] %v1215
      %1232 = vst [vmem:[#allocation3 + $0xb8] sm:$0xff] %v1216
      %1233 = vst [vmem:[#allocation3 + $0x100] sm:$0xff] %v1217
      %1234 = vst [vmem:[#allocation3 + $0x148] sm:$0xff] %v1218
      %1235 = vst [vmem:[#allocation3 + $0x190] sm:$0xff] %v1219
      %1236 = vst [vmem:[#allocation3 + $0x1d8] sm:$0xff] %v1220
      %1237 = vst [vmem:[#allocation3 + $0x220] sm:$0xff] %v1221
      %s1238 = scalar_lea.vmem [#allocation2], 64
      %v1239 = vld [vmem:[%s1238] sm:$0xff]
      %v1240 = vld [vmem:[%s1238 + $0x8] sm:$0xff]
      %v1241 = vld [vmem:[%s1238 + $0x20] sm:$0xff]
      %v1242 = vld [vmem:[%s1238 + $0x28] sm:$0xff]
      %v1243 = vld [vmem:[%s1238 + $0x40] sm:$0xff]
      %v1244 = vld [vmem:[%s1238 + $0x48] sm:$0xff]
      %v1245 = vld [vmem:[%s1238 + $0x60] sm:$0xff]
      %v1246 = vld [vmem:[%s1238 + $0x68] sm:$0xff]
      %v1247 = vld [vmem:[%s1238 + $0x80] sm:$0xff]
      %v1248 = vld [vmem:[%s1238 + $0x88] sm:$0xff]
      %v1249 = vld [vmem:[%s1238 + $0xa0] sm:$0xff]
      %v1250 = vld [vmem:[%s1238 + $0xa8] sm:$0xff]
      %v1251 = vld [vmem:[%s1238 + $0xc0] sm:$0xff]
      %v1252 = vld [vmem:[%s1238 + $0xc8] sm:$0xff]
      %v1253 = vld [vmem:[%s1238 + $0xe0] sm:$0xff]
      %v1254 = vld [vmem:[%s1238 + $0xe8] sm:$0xff]
      %v1255 = vpack.c.bf16 %v1241, %v1239
      %v1256 = vpack.c.bf16 %v1242, %v1240
      %v1257 = vpack.c.bf16 %v1245, %v1243
      %v1258 = vpack.c.bf16 %v1246, %v1244
      %v1259 = vpack.c.bf16 %v1249, %v1247
      %v1260 = vpack.c.bf16 %v1250, %v1248
      %v1261 = vpack.c.bf16 %v1253, %v1251
      %v1262 = vpack.c.bf16 %v1254, %v1252
      %v1271 = vunpack.c.l.b16 %v1255
      %v1272 = vunpack.c.l.b16 %v1256
      %v1273 = vunpack.c.h.b16 %v1255
      %v1274 = vunpack.c.h.b16 %v1256
      %v1275 = vunpack.c.l.b16 %v1257
      %v1276 = vunpack.c.l.b16 %v1258
      %v1277 = vunpack.c.h.b16 %v1257
      %v1278 = vunpack.c.h.b16 %v1258
      %v1279 = vunpack.c.l.b16 %v1259
      %v1280 = vunpack.c.l.b16 %v1260
      %v1281 = vunpack.c.h.b16 %v1259
      %v1282 = vunpack.c.h.b16 %v1260
      %v1283 = vunpack.c.l.b16 %v1261
      %v1284 = vunpack.c.l.b16 %v1262
      %v1285 = vunpack.c.h.b16 %v1261
      %v1286 = vunpack.c.h.b16 %v1262
      %v1287 = vpack.c.b16 %v1272, %v1271
      %v1288 = vpack.c.b16 %v1274, %v1273
      %v1289 = vpack.c.b16 %v1276, %v1275
      %v1290 = vpack.c.b16 %v1278, %v1277
      %v1291 = vpack.c.b16 %v1280, %v1279
      %v1292 = vpack.c.b16 %v1282, %v1281
      %v1293 = vpack.c.b16 %v1284, %v1283
      %v1294 = vpack.c.b16 %v1286, %v1285
      %1303 = vst [vmem:[#allocation3 + $0x30] sm:$0xff] %v1287
      %1304 = vst [vmem:[#allocation3 + $0x78] sm:$0xff] %v1288
      %1305 = vst [vmem:[#allocation3 + $0xc0] sm:$0xff] %v1289
      %1306 = vst [vmem:[#allocation3 + $0x108] sm:$0xff] %v1290
      %1307 = vst [vmem:[#allocation3 + $0x150] sm:$0xff] %v1291
      %1308 = vst [vmem:[#allocation3 + $0x198] sm:$0xff] %v1292
      %1309 = vst [vmem:[#allocation3 + $0x1e0] sm:$0xff] %v1293
      %1310 = vst [vmem:[#allocation3 + $0x228] sm:$0xff] %v1294
      %v1311 = vld [vmem:[%s1238] sm:$0xfe]
      %v1312 = vld [vmem:[%s1238 + $0x8] sm:$0xfe]
      %v1313 = vld [vmem:[%s1238 + $0x10] sm:$0x1]
      %v1314 = vld [vmem:[%s1238 + $0x18] sm:$0x1]
      %v1315 = vld [vmem:[%s1238 + $0x20] sm:$0xfe]
      %v1316 = vld [vmem:[%s1238 + $0x28] sm:$0xfe]
      %v1317 = vld [vmem:[%s1238 + $0x30] sm:$0x1]
      %v1318 = vld [vmem:[%s1238 + $0x38] sm:$0x1]
      %v1319 = vld [vmem:[%s1238 + $0x40] sm:$0xfe]
      %v1320 = vld [vmem:[%s1238 + $0x48] sm:$0xfe]
      %v1321 = vld [vmem:[%s1238 + $0x50] sm:$0x1]
      %v1322 = vld [vmem:[%s1238 + $0x58] sm:$0x1]
      %v1323 = vld [vmem:[%s1238 + $0x60] sm:$0xfe]
      %v1324 = vld [vmem:[%s1238 + $0x68] sm:$0xfe]
      %v1325 = vld [vmem:[%s1238 + $0x70] sm:$0x1]
      %v1326 = vld [vmem:[%s1238 + $0x78] sm:$0x1]
      %v1327 = vld [vmem:[%s1238 + $0x80] sm:$0xfe]
      %v1328 = vld [vmem:[%s1238 + $0x88] sm:$0xfe]
      %v1329 = vld [vmem:[%s1238 + $0x90] sm:$0x1]
      %v1330 = vld [vmem:[%s1238 + $0x98] sm:$0x1]
      %v1331 = vld [vmem:[%s1238 + $0xa0] sm:$0xfe]
      %v1332 = vld [vmem:[%s1238 + $0xa8] sm:$0xfe]
      %v1333 = vld [vmem:[%s1238 + $0xb0] sm:$0x1]
      %v1334 = vld [vmem:[%s1238 + $0xb8] sm:$0x1]
      %v1335 = vld [vmem:[%s1238 + $0xc0] sm:$0xfe]
      %v1336 = vld [vmem:[%s1238 + $0xc8] sm:$0xfe]
      %v1337 = vld [vmem:[%s1238 + $0xd0] sm:$0x1]
      %v1338 = vld [vmem:[%s1238 + $0xd8] sm:$0x1]
      %v1339 = vld [vmem:[%s1238 + $0xe0] sm:$0xfe]
      %v1340 = vld [vmem:[%s1238 + $0xe8] sm:$0xfe]
      %v1341 = vld [vmem:[%s1238 + $0xf0] sm:$0x1]
      %v1342 = vld [vmem:[%s1238 + $0xf8] sm:$0x1]
      %v1375 = vrot.slane %v1311, 1
      %v1376 = vrot.slane %v1313, 1
      %v1377 = vsel %vm492, %v1375, %v1376
      %v1378 = vrot.slane %v1312, 1
      %v1379 = vrot.slane %v1314, 1
      %v1380 = vsel %vm492, %v1378, %v1379
      %v1381 = vrot.slane %v1315, 1
      %v1382 = vrot.slane %v1317, 1
      %v1383 = vsel %vm492, %v1381, %v1382
      %v1384 = vrot.slane %v1316, 1
      %v1385 = vrot.slane %v1318, 1
      %v1386 = vsel %vm492, %v1384, %v1385
      %v1387 = vrot.slane %v1319, 1
      %v1388 = vrot.slane %v1321, 1
      %v1389 = vsel %vm492, %v1387, %v1388
      %v1390 = vrot.slane %v1320, 1
      %v1391 = vrot.slane %v1322, 1
      %v1392 = vsel %vm492, %v1390, %v1391
      %v1393 = vrot.slane %v1323, 1
      %v1394 = vrot.slane %v1325, 1
      %v1395 = vsel %vm492, %v1393, %v1394
      %v1396 = vrot.slane %v1324, 1
      %v1397 = vrot.slane %v1326, 1
      %v1398 = vsel %vm492, %v1396, %v1397
      %v1399 = vrot.slane %v1327, 1
      %v1400 = vrot.slane %v1329, 1
      %v1401 = vsel %vm492, %v1399, %v1400
      %v1402 = vrot.slane %v1328, 1
      %v1403 = vrot.slane %v1330, 1
      %v1404 = vsel %vm492, %v1402, %v1403
      %v1405 = vrot.slane %v1331, 1
      %v1406 = vrot.slane %v1333, 1
      %v1407 = vsel %vm492, %v1405, %v1406
      %v1408 = vrot.slane %v1332, 1
      %v1409 = vrot.slane %v1334, 1
      %v1410 = vsel %vm492, %v1408, %v1409
      %v1411 = vrot.slane %v1335, 1
      %v1412 = vrot.slane %v1337, 1
      %v1413 = vsel %vm492, %v1411, %v1412
      %v1414 = vrot.slane %v1336, 1
      %v1415 = vrot.slane %v1338, 1
      %v1416 = vsel %vm492, %v1414, %v1415
      %v1417 = vrot.slane %v1339, 1
      %v1418 = vrot.slane %v1341, 1
      %v1419 = vsel %vm492, %v1417, %v1418
      %v1420 = vrot.slane %v1340, 1
      %v1421 = vrot.slane %v1342, 1
      %v1422 = vsel %vm492, %v1420, %v1421
      %v1439 = vpack.c.bf16 %v1383, %v1377
      %v1440 = vpack.c.bf16 %v1386, %v1380
      %v1441 = vpack.c.bf16 %v1395, %v1389
      %v1442 = vpack.c.bf16 %v1398, %v1392
      %v1443 = vpack.c.bf16 %v1407, %v1401
      %v1444 = vpack.c.bf16 %v1410, %v1404
      %v1445 = vpack.c.bf16 %v1419, %v1413
      %v1446 = vpack.c.bf16 %v1422, %v1416
      %v1455 = vunpack.c.l.b16 %v1439
      %v1456 = vunpack.c.l.b16 %v1440
      %v1457 = vunpack.c.h.b16 %v1439
      %v1458 = vunpack.c.h.b16 %v1440
      %v1459 = vunpack.c.l.b16 %v1441
      %v1460 = vunpack.c.l.b16 %v1442
      %v1461 = vunpack.c.h.b16 %v1441
      %v1462 = vunpack.c.h.b16 %v1442
      %v1463 = vunpack.c.l.b16 %v1443
      %v1464 = vunpack.c.l.b16 %v1444
      %v1465 = vunpack.c.h.b16 %v1443
      %v1466 = vunpack.c.h.b16 %v1444
      %v1467 = vunpack.c.l.b16 %v1445
      %v1468 = vunpack.c.l.b16 %v1446
      %v1469 = vunpack.c.h.b16 %v1445
      %v1470 = vunpack.c.h.b16 %v1446
      %v1471 = vpack.c.b16 %v1456, %v1455
      %v1472 = vpack.c.b16 %v1458, %v1457
      %v1473 = vpack.c.b16 %v1460, %v1459
      %v1474 = vpack.c.b16 %v1462, %v1461
      %v1475 = vpack.c.b16 %v1464, %v1463
      %v1476 = vpack.c.b16 %v1466, %v1465
      %v1477 = vpack.c.b16 %v1468, %v1467
      %v1478 = vpack.c.b16 %v1470, %v1469
      %1487 = vst [vmem:[#allocation3 + $0x38] sm:$0xff] %v1471
      %1488 = vst [vmem:[#allocation3 + $0x80] sm:$0xff] %v1472
      %1489 = vst [vmem:[#allocation3 + $0xc8] sm:$0xff] %v1473
      %1490 = vst [vmem:[#allocation3 + $0x110] sm:$0xff] %v1474
      %1491 = vst [vmem:[#allocation3 + $0x158] sm:$0xff] %v1475
      %1492 = vst [vmem:[#allocation3 + $0x1a0] sm:$0xff] %v1476
      %1493 = vst [vmem:[#allocation3 + $0x1e8] sm:$0xff] %v1477
      %1494 = vst [vmem:[#allocation3 + $0x230] sm:$0xff] %v1478
      %v1495 = vld [vmem:[%s1238] sm:$0xfc]
      %v1496 = vld [vmem:[%s1238 + $0x8] sm:$0xfc]
      %v1497 = vld [vmem:[%s1238 + $0x10] sm:$0x3]
      %v1498 = vld [vmem:[%s1238 + $0x18] sm:$0x3]
      %v1499 = vld [vmem:[%s1238 + $0x20] sm:$0xfc]
      %v1500 = vld [vmem:[%s1238 + $0x28] sm:$0xfc]
      %v1501 = vld [vmem:[%s1238 + $0x30] sm:$0x3]
      %v1502 = vld [vmem:[%s1238 + $0x38] sm:$0x3]
      %v1503 = vld [vmem:[%s1238 + $0x40] sm:$0xfc]
      %v1504 = vld [vmem:[%s1238 + $0x48] sm:$0xfc]
      %v1505 = vld [vmem:[%s1238 + $0x50] sm:$0x3]
      %v1506 = vld [vmem:[%s1238 + $0x58] sm:$0x3]
      %v1507 = vld [vmem:[%s1238 + $0x60] sm:$0xfc]
      %v1508 = vld [vmem:[%s1238 + $0x68] sm:$0xfc]
      %v1509 = vld [vmem:[%s1238 + $0x70] sm:$0x3]
      %v1510 = vld [vmem:[%s1238 + $0x78] sm:$0x3]
      %v1511 = vld [vmem:[%s1238 + $0x80] sm:$0xfc]
      %v1512 = vld [vmem:[%s1238 + $0x88] sm:$0xfc]
      %v1513 = vld [vmem:[%s1238 + $0x90] sm:$0x3]
      %v1514 = vld [vmem:[%s1238 + $0x98] sm:$0x3]
      %v1515 = vld [vmem:[%s1238 + $0xa0] sm:$0xfc]
      %v1516 = vld [vmem:[%s1238 + $0xa8] sm:$0xfc]
      %v1517 = vld [vmem:[%s1238 + $0xb0] sm:$0x3]
      %v1518 = vld [vmem:[%s1238 + $0xb8] sm:$0x3]
      %v1519 = vld [vmem:[%s1238 + $0xc0] sm:$0xfc]
      %v1520 = vld [vmem:[%s1238 + $0xc8] sm:$0xfc]
      %v1521 = vld [vmem:[%s1238 + $0xd0] sm:$0x3]
      %v1522 = vld [vmem:[%s1238 + $0xd8] sm:$0x3]
      %v1523 = vld [vmem:[%s1238 + $0xe0] sm:$0xfc]
      %v1524 = vld [vmem:[%s1238 + $0xe8] sm:$0xfc]
      %v1525 = vld [vmem:[%s1238 + $0xf0] sm:$0x3]
      %v1526 = vld [vmem:[%s1238 + $0xf8] sm:$0x3]
      %v1559 = vrot.slane %v1495, 2
      %v1560 = vrot.slane %v1497, 2
      %v1561 = vsel %vm677, %v1559, %v1560
      %v1562 = vrot.slane %v1496, 2
      %v1563 = vrot.slane %v1498, 2
      %v1564 = vsel %vm677, %v1562, %v1563
      %v1565 = vrot.slane %v1499, 2
      %v1566 = vrot.slane %v1501, 2
      %v1567 = vsel %vm677, %v1565, %v1566
      %v1568 = vrot.slane %v1500, 2
      %v1569 = vrot.slane %v1502, 2
      %v1570 = vsel %vm677, %v1568, %v1569
      %v1571 = vrot.slane %v1503, 2
      %v1572 = vrot.slane %v1505, 2
      %v1573 = vsel %vm677, %v1571, %v1572
      %v1574 = vrot.slane %v1504, 2
      %v1575 = vrot.slane %v1506, 2
      %v1576 = vsel %vm677, %v1574, %v1575
      %v1577 = vrot.slane %v1507, 2
      %v1578 = vrot.slane %v1509, 2
      %v1579 = vsel %vm677, %v1577, %v1578
      %v1580 = vrot.slane %v1508, 2
      %v1581 = vrot.slane %v1510, 2
      %v1582 = vsel %vm677, %v1580, %v1581
      %v1583 = vrot.slane %v1511, 2
      %v1584 = vrot.slane %v1513, 2
      %v1585 = vsel %vm677, %v1583, %v1584
      %v1586 = vrot.slane %v1512, 2
      %v1587 = vrot.slane %v1514, 2
      %v1588 = vsel %vm677, %v1586, %v1587
      %v1589 = vrot.slane %v1515, 2
      %v1590 = vrot.slane %v1517, 2
      %v1591 = vsel %vm677, %v1589, %v1590
      %v1592 = vrot.slane %v1516, 2
      %v1593 = vrot.slane %v1518, 2
      %v1594 = vsel %vm677, %v1592, %v1593
      %v1595 = vrot.slane %v1519, 2
      %v1596 = vrot.slane %v1521, 2
      %v1597 = vsel %vm677, %v1595, %v1596
      %v1598 = vrot.slane %v1520, 2
      %v1599 = vrot.slane %v1522, 2
      %v1600 = vsel %vm677, %v1598, %v1599
      %v1601 = vrot.slane %v1523, 2
      %v1602 = vrot.slane %v1525, 2
      %v1603 = vsel %vm677, %v1601, %v1602
      %v1604 = vrot.slane %v1524, 2
      %v1605 = vrot.slane %v1526, 2
      %v1606 = vsel %vm677, %v1604, %v1605
      %v1623 = vpack.c.bf16 %v1567, %v1561
      %v1624 = vpack.c.bf16 %v1570, %v1564
      %v1625 = vpack.c.bf16 %v1579, %v1573
      %v1626 = vpack.c.bf16 %v1582, %v1576
      %v1627 = vpack.c.bf16 %v1591, %v1585
      %v1628 = vpack.c.bf16 %v1594, %v1588
      %v1629 = vpack.c.bf16 %v1603, %v1597
      %v1630 = vpack.c.bf16 %v1606, %v1600
      %v1639 = vunpack.c.l.b16 %v1623
      %v1640 = vunpack.c.l.b16 %v1624
      %v1641 = vunpack.c.h.b16 %v1623
      %v1642 = vunpack.c.h.b16 %v1624
      %v1643 = vunpack.c.l.b16 %v1625
      %v1644 = vunpack.c.l.b16 %v1626
      %v1645 = vunpack.c.h.b16 %v1625
      %v1646 = vunpack.c.h.b16 %v1626
      %v1647 = vunpack.c.l.b16 %v1627
      %v1648 = vunpack.c.l.b16 %v1628
      %v1649 = vunpack.c.h.b16 %v1627
      %v1650 = vunpack.c.h.b16 %v1628
      %v1651 = vunpack.c.l.b16 %v1629
      %v1652 = vunpack.c.l.b16 %v1630
      %v1653 = vunpack.c.h.b16 %v1629
      %v1654 = vunpack.c.h.b16 %v1630
      %v1655 = vpack.c.b16 %v1640, %v1639
      %v1656 = vpack.c.b16 %v1642, %v1641
      %v1657 = vpack.c.b16 %v1644, %v1643
      %v1658 = vpack.c.b16 %v1646, %v1645
      %v1659 = vpack.c.b16 %v1648, %v1647
      %v1660 = vpack.c.b16 %v1650, %v1649
      %v1661 = vpack.c.b16 %v1652, %v1651
      %v1662 = vpack.c.b16 %v1654, %v1653
      %1671 = vst [vmem:[#allocation3 + $0x40] sm:$0xff] %v1655
      %1672 = vst [vmem:[#allocation3 + $0x88] sm:$0xff] %v1656
      %1673 = vst [vmem:[#allocation3 + $0xd0] sm:$0xff] %v1657
      %1674 = vst [vmem:[#allocation3 + $0x118] sm:$0xff] %v1658
      %1675 = vst [vmem:[#allocation3 + $0x160] sm:$0xff] %v1659
      %1676 = vst [vmem:[#allocation3 + $0x1a8] sm:$0xff] %v1660
      %1677 = vst [vmem:[#allocation3 + $0x1f0] sm:$0xff] %v1661
      %1678 = vst [vmem:[#allocation3 + $0x238] sm:$0xff] %v1662
      %v1679 = vld [vmem:[#allocation3] sm:$0xff]
      %v1680 = vld [vmem:[#allocation3 + $0x8] sm:$0xff]
      %v1681 = vld [vmem:[#allocation3 + $0x10] sm:$0xff]
      %v1682 = vld [vmem:[#allocation3 + $0x18] sm:$0xff]
      %v1683 = vld [vmem:[#allocation3 + $0x20] sm:$0xff]
      %v1684 = vld [vmem:[#allocation3 + $0x28] sm:$0xff]
      %v1685 = vld [vmem:[#allocation3 + $0x30] sm:$0xff]
      %v1686 = vld [vmem:[#allocation3 + $0x38] sm:$0xff]
      %v1687 = vld [vmem:[#allocation3 + $0x40] sm:$0xff]
      %v1688 = vld [vmem:[#allocation3 + $0x48] sm:$0xff]
      %v1689 = vld [vmem:[#allocation3 + $0x50] sm:$0xff]
      %v1690 = vld [vmem:[#allocation3 + $0x58] sm:$0xff]
      %v1691 = vld [vmem:[#allocation3 + $0x60] sm:$0xff]
      %v1692 = vld [vmem:[#allocation3 + $0x68] sm:$0xff]
      %v1693 = vld [vmem:[#allocation3 + $0x70] sm:$0xff]
      %v1694 = vld [vmem:[#allocation3 + $0x78] sm:$0xff]
      %v1695 = vld [vmem:[#allocation3 + $0x80] sm:$0xff]
      %v1696 = vld [vmem:[#allocation3 + $0x88] sm:$0xff]
      %v1697 = vld [vmem:[#allocation3 + $0x90] sm:$0xff]
      %v1698 = vld [vmem:[#allocation3 + $0x98] sm:$0xff]
      %v1699 = vld [vmem:[#allocation3 + $0xa0] sm:$0xff]
      %v1700 = vld [vmem:[#allocation3 + $0xa8] sm:$0xff]
      %v1701 = vld [vmem:[#allocation3 + $0xb0] sm:$0xff]
      %v1702 = vld [vmem:[#allocation3 + $0xb8] sm:$0xff]
      %v1703 = vld [vmem:[#allocation3 + $0xc0] sm:$0xff]
      %v1704 = vld [vmem:[#allocation3 + $0xc8] sm:$0xff]
      %v1705 = vld [vmem:[#allocation3 + $0xd0] sm:$0xff]
      %v1706 = vld [vmem:[#allocation3 + $0xd8] sm:$0xff]
      %v1707 = vld [vmem:[#allocation3 + $0xe0] sm:$0xff]
      %v1708 = vld [vmem:[#allocation3 + $0xe8] sm:$0xff]
      %v1709 = vld [vmem:[#allocation3 + $0xf0] sm:$0xff]
      %v1710 = vld [vmem:[#allocation3 + $0xf8] sm:$0xff]
      %v1711 = vld [vmem:[#allocation3 + $0x100] sm:$0xff]
      %v1712 = vld [vmem:[#allocation3 + $0x108] sm:$0xff]
      %v1713 = vld [vmem:[#allocation3 + $0x110] sm:$0xff]
      %v1714 = vld [vmem:[#allocation3 + $0x118] sm:$0xff]
      %v1715 = vld [vmem:[#allocation3 + $0x120] sm:$0xff]
      %v1716 = vld [vmem:[#allocation3 + $0x128] sm:$0xff]
      %v1717 = vld [vmem:[#allocation3 + $0x130] sm:$0xff]
      %v1718 = vld [vmem:[#allocation3 + $0x138] sm:$0xff]
      %v1719 = vld [vmem:[#allocation3 + $0x140] sm:$0xff]
      %v1720 = vld [vmem:[#allocation3 + $0x148] sm:$0xff]
      %v1721 = vld [vmem:[#allocation3 + $0x150] sm:$0xff]
      %v1722 = vld [vmem:[#allocation3 + $0x158] sm:$0xff]
      %v1723 = vld [vmem:[#allocation3 + $0x160] sm:$0xff]
      %v1724 = vld [vmem:[#allocation3 + $0x168] sm:$0xff]
      %v1725 = vld [vmem:[#allocation3 + $0x170] sm:$0xff]
      %v1726 = vld [vmem:[#allocation3 + $0x178] sm:$0xff]
      %v1727 = vld [vmem:[#allocation3 + $0x180] sm:$0xff]
      %v1728 = vld [vmem:[#allocation3 + $0x188] sm:$0xff]
      %v1729 = vld [vmem:[#allocation3 + $0x190] sm:$0xff]
      %v1730 = vld [vmem:[#allocation3 + $0x198] sm:$0xff]
      %v1731 = vld [vmem:[#allocation3 + $0x1a0] sm:$0xff]
      %v1732 = vld [vmem:[#allocation3 + $0x1a8] sm:$0xff]
      %v1733 = vld [vmem:[#allocation3 + $0x1b0] sm:$0xff]
      %v1734 = vld [vmem:[#allocation3 + $0x1b8] sm:$0xff]
      %v1735 = vld [vmem:[#allocation3 + $0x1c0] sm:$0xff]
      %v1736 = vld [vmem:[#allocation3 + $0x1c8] sm:$0xff]
      %v1737 = vld [vmem:[#allocation3 + $0x1d0] sm:$0xff]
      %v1738 = vld [vmem:[#allocation3 + $0x1d8] sm:$0xff]
      %v1739 = vld [vmem:[#allocation3 + $0x1e0] sm:$0xff]
      %v1740 = vld [vmem:[#allocation3 + $0x1e8] sm:$0xff]
      %v1741 = vld [vmem:[#allocation3 + $0x1f0] sm:$0xff]
      %v1742 = vld [vmem:[#allocation3 + $0x1f8] sm:$0xff]
      %v1743 = vld [vmem:[#allocation3 + $0x200] sm:$0xff]
      %v1744 = vld [vmem:[#allocation3 + $0x208] sm:$0xff]
      %v1745 = vld [vmem:[#allocation3 + $0x210] sm:$0xff]
      %v1746 = vld [vmem:[#allocation3 + $0x218] sm:$0xff]
      %v1747 = vld [vmem:[#allocation3 + $0x220] sm:$0xff]
      %v1748 = vld [vmem:[#allocation3 + $0x228] sm:$0xff]
      %v1749 = vld [vmem:[#allocation3 + $0x230] sm:$0xff]
      %v1750 = vld [vmem:[#allocation3 + $0x238] sm:$0xff]
      %v1751 = vld [vmem:[%s1] sm:$0xff]
      %v1752 = vld [vmem:[%s1 + $0x8] sm:$0xff]
      %v1753 = vld [vmem:[%s1 + $0x10] sm:$0xff]
      %v1754 = vld [vmem:[%s1 + $0x18] sm:$0xff]
      %v1755 = vld [vmem:[%s1 + $0x20] sm:$0xff]
      %v1756 = vld [vmem:[%s1 + $0x28] sm:$0xff]
      %v1757 = vld [vmem:[%s1 + $0x30] sm:$0xff]
      %v1758 = vld [vmem:[%s1 + $0x38] sm:$0xff]
      %v1759 = vld [vmem:[%s1 + $0x40] sm:$0xff]
      %v1760 = vld [vmem:[%s1 + $0x48] sm:$0xff]
      %v1761 = vld [vmem:[%s1 + $0x50] sm:$0xff]
      %v1762 = vld [vmem:[%s1 + $0x58] sm:$0xff]
      %v1763 = vld [vmem:[%s1 + $0x60] sm:$0xff]
      %v1764 = vld [vmem:[%s1 + $0x68] sm:$0xff]
      %v1765 = vld [vmem:[%s1 + $0x70] sm:$0xff]
      %v1766 = vld [vmem:[%s1 + $0x78] sm:$0xff]
      %v1767 = vld [vmem:[%s1 + $0x80] sm:$0xff]
      %v1768 = vld [vmem:[%s1 + $0x88] sm:$0xff]
      %v1769 = vld [vmem:[%s1 + $0x90] sm:$0xff]
      %v1770 = vld [vmem:[%s1 + $0x98] sm:$0xff]
      %v1771 = vld [vmem:[%s1 + $0xa0] sm:$0xff]
      %v1772 = vld [vmem:[%s1 + $0xa8] sm:$0xff]
      %v1773 = vld [vmem:[%s1 + $0xb0] sm:$0xff]
      %v1774 = vld [vmem:[%s1 + $0xb8] sm:$0xff]
      %v1775 = vld [vmem:[%s1 + $0xc0] sm:$0xff]
      %v1776 = vld [vmem:[%s1 + $0xc8] sm:$0xff]
      %v1777 = vld [vmem:[%s1 + $0xd0] sm:$0xff]
      %v1778 = vld [vmem:[%s1 + $0xd8] sm:$0xff]
      %v1779 = vld [vmem:[%s1 + $0xe0] sm:$0xff]
      %v1780 = vld [vmem:[%s1 + $0xe8] sm:$0xff]
      %v1781 = vld [vmem:[%s1 + $0xf0] sm:$0xff]
      %v1782 = vld [vmem:[%s1 + $0xf8] sm:$0xff]
      %v1783 = vld [vmem:[%s1 + $0x100] sm:$0xff]
      %v1784 = vld [vmem:[%s1 + $0x108] sm:$0xff]
      %v1785 = vld [vmem:[%s1 + $0x110] sm:$0xff]
      %v1786 = vld [vmem:[%s1 + $0x118] sm:$0xff]
      %v1787 = vld [vmem:[%s1 + $0x120] sm:$0xff]
      %v1788 = vld [vmem:[%s1 + $0x128] sm:$0xff]
      %v1789 = vld [vmem:[%s1 + $0x130] sm:$0xff]
      %v1790 = vld [vmem:[%s1 + $0x138] sm:$0xff]
      %v1791 = vld [vmem:[%s1 + $0x140] sm:$0xff]
      %v1792 = vld [vmem:[%s1 + $0x148] sm:$0xff]
      %v1793 = vld [vmem:[%s1 + $0x150] sm:$0xff]
      %v1794 = vld [vmem:[%s1 + $0x158] sm:$0xff]
      %v1795 = vld [vmem:[%s1 + $0x160] sm:$0xff]
      %v1796 = vld [vmem:[%s1 + $0x168] sm:$0xff]
      %v1797 = vld [vmem:[%s1 + $0x170] sm:$0xff]
      %v1798 = vld [vmem:[%s1 + $0x178] sm:$0xff]
      %v1799 = vld [vmem:[%s1 + $0x180] sm:$0xff]
      %v1800 = vld [vmem:[%s1 + $0x188] sm:$0xff]
      %v1801 = vld [vmem:[%s1 + $0x190] sm:$0xff]
      %v1802 = vld [vmem:[%s1 + $0x198] sm:$0xff]
      %v1803 = vld [vmem:[%s1 + $0x1a0] sm:$0xff]
      %v1804 = vld [vmem:[%s1 + $0x1a8] sm:$0xff]
      %v1805 = vld [vmem:[%s1 + $0x1b0] sm:$0xff]
      %v1806 = vld [vmem:[%s1 + $0x1b8] sm:$0xff]
      %v1807 = vld [vmem:[%s1 + $0x1c0] sm:$0xff]
      %v1808 = vld [vmem:[%s1 + $0x1c8] sm:$0xff]
      %v1809 = vld [vmem:[%s1 + $0x1d0] sm:$0xff]
      %v1810 = vld [vmem:[%s1 + $0x1d8] sm:$0xff]
      %v1811 = vld [vmem:[%s1 + $0x1e0] sm:$0xff]
      %v1812 = vld [vmem:[%s1 + $0x1e8] sm:$0xff]
      %v1813 = vld [vmem:[%s1 + $0x1f0] sm:$0xff]
      %v1814 = vld [vmem:[%s1 + $0x1f8] sm:$0xff]
      %v1815 = vld [vmem:[%s1 + $0x200] sm:$0xff]
      %v1816 = vld [vmem:[%s1 + $0x208] sm:$0xff]
      %v1817 = vld [vmem:[%s1 + $0x210] sm:$0xff]
      %v1818 = vld [vmem:[%s1 + $0x218] sm:$0xff]
      %v1819 = vld [vmem:[%s1 + $0x220] sm:$0xff]
      %v1820 = vld [vmem:[%s1 + $0x228] sm:$0xff]
      %v1821 = vld [vmem:[%s1 + $0x230] sm:$0xff]
      %v1822 = vld [vmem:[%s1 + $0x238] sm:$0xff]
      %v1823 = vld [vmem:[%s1 + $0x240] sm:$0xff]
      %v1824 = vld [vmem:[%s1 + $0x248] sm:$0xff]
      %v1825 = vld [vmem:[%s1 + $0x250] sm:$0xff]
      %v1826 = vld [vmem:[%s1 + $0x258] sm:$0xff]
      %v1827 = vld [vmem:[%s1 + $0x260] sm:$0xff]
      %v1828 = vld [vmem:[%s1 + $0x268] sm:$0xff]
      %v1829 = vld [vmem:[%s1 + $0x270] sm:$0xff]
      %v1830 = vld [vmem:[%s1 + $0x278] sm:$0xff]
      %v1831 = vld [vmem:[%s1 + $0x280] sm:$0xff]
      %v1832 = vld [vmem:[%s1 + $0x288] sm:$0xff]
      %v1833 = vld [vmem:[%s1 + $0x290] sm:$0xff]
      %v1834 = vld [vmem:[%s1 + $0x298] sm:$0xff]
      %v1835 = vld [vmem:[%s1 + $0x2a0] sm:$0xff]
      %v1836 = vld [vmem:[%s1 + $0x2a8] sm:$0xff]
      %v1837 = vld [vmem:[%s1 + $0x2b0] sm:$0xff]
      %v1838 = vld [vmem:[%s1 + $0x2b8] sm:$0xff]
      %v1839 = vld [vmem:[%s1 + $0x2c0] sm:$0xff]
      %v1840 = vld [vmem:[%s1 + $0x2c8] sm:$0xff]
      %v1841 = vld [vmem:[%s1 + $0x2d0] sm:$0xff]
      %v1842 = vld [vmem:[%s1 + $0x2d8] sm:$0xff]
      %v1843 = vld [vmem:[%s1 + $0x2e0] sm:$0xff]
      %v1844 = vld [vmem:[%s1 + $0x2e8] sm:$0xff]
      %v1845 = vld [vmem:[%s1 + $0x2f0] sm:$0xff]
      %v1846 = vld [vmem:[%s1 + $0x2f8] sm:$0xff]
      %v1847 = vld [vmem:[%s1 + $0x300] sm:$0xff]
      %v1848 = vld [vmem:[%s1 + $0x308] sm:$0xff]
      %v1849 = vld [vmem:[%s1 + $0x310] sm:$0xff]
      %v1850 = vld [vmem:[%s1 + $0x318] sm:$0xff]
      %v1851 = vld [vmem:[%s1 + $0x320] sm:$0xff]
      %v1852 = vld [vmem:[%s1 + $0x328] sm:$0xff]
      %v1853 = vld [vmem:[%s1 + $0x330] sm:$0xff]
      %v1854 = vld [vmem:[%s1 + $0x338] sm:$0xff]
      %v1855 = vld [vmem:[%s1 + $0x340] sm:$0xff]
      %v1856 = vld [vmem:[%s1 + $0x348] sm:$0xff]
      %v1857 = vld [vmem:[%s1 + $0x350] sm:$0xff]
      %v1858 = vld [vmem:[%s1 + $0x358] sm:$0xff]
      %v1859 = vld [vmem:[%s1 + $0x360] sm:$0xff]
      %v1860 = vld [vmem:[%s1 + $0x368] sm:$0xff]
      %v1861 = vld [vmem:[%s1 + $0x370] sm:$0xff]
      %v1862 = vld [vmem:[%s1 + $0x378] sm:$0xff]
      %v1863 = vld [vmem:[%s1 + $0x380] sm:$0xff]
      %v1864 = vld [vmem:[%s1 + $0x388] sm:$0xff]
      %v1865 = vld [vmem:[%s1 + $0x390] sm:$0xff]
      %v1866 = vld [vmem:[%s1 + $0x398] sm:$0xff]
      %v1867 = vld [vmem:[%s1 + $0x3a0] sm:$0xff]
      %v1868 = vld [vmem:[%s1 + $0x3a8] sm:$0xff]
      %v1869 = vld [vmem:[%s1 + $0x3b0] sm:$0xff]
      %v1870 = vld [vmem:[%s1 + $0x3b8] sm:$0xff]
      %v1871 = vld [vmem:[%s1 + $0x3c0] sm:$0xff]
      %v1872 = vld [vmem:[%s1 + $0x3c8] sm:$0xff]
      %v1873 = vld [vmem:[%s1 + $0x3d0] sm:$0xff]
      %v1874 = vld [vmem:[%s1 + $0x3d8] sm:$0xff]
      %v1875 = vld [vmem:[%s1 + $0x3e0] sm:$0xff]
      %v1876 = vld [vmem:[%s1 + $0x3e8] sm:$0xff]
      %v1877 = vld [vmem:[%s1 + $0x3f0] sm:$0xff]
      %v1878 = vld [vmem:[%s1 + $0x3f8] sm:$0xff]
      %v1879 = vld [vmem:[%s1 + $0x400] sm:$0xff]
      %v1880 = vld [vmem:[%s1 + $0x408] sm:$0xff]
      %v1881 = vld [vmem:[%s1 + $0x410] sm:$0xff]
      %v1882 = vld [vmem:[%s1 + $0x418] sm:$0xff]
      %v1883 = vld [vmem:[%s1 + $0x420] sm:$0xff]
      %v1884 = vld [vmem:[%s1 + $0x428] sm:$0xff]
      %v1885 = vld [vmem:[%s1 + $0x430] sm:$0xff]
      %v1886 = vld [vmem:[%s1 + $0x438] sm:$0xff]
      %v1887 = vld [vmem:[%s1 + $0x440] sm:$0xff]
      %v1888 = vld [vmem:[%s1 + $0x448] sm:$0xff]
      %v1889 = vld [vmem:[%s1 + $0x450] sm:$0xff]
      %v1890 = vld [vmem:[%s1 + $0x458] sm:$0xff]
      %v1891 = vld [vmem:[%s1 + $0x460] sm:$0xff]
      %v1892 = vld [vmem:[%s1 + $0x468] sm:$0xff]
      %v1893 = vld [vmem:[%s1 + $0x470] sm:$0xff]
      %v1894 = vld [vmem:[%s1 + $0x478] sm:$0xff]
      %v1895 = vld [vmem:[%s1 + $0x480] sm:$0xff]
      %v1896 = vld [vmem:[%s1 + $0x488] sm:$0xff]
      %v1897 = vld [vmem:[%s1 + $0x490] sm:$0xff]
      %v1898 = vld [vmem:[%s1 + $0x498] sm:$0xff]
      %v1899 = vld [vmem:[%s1 + $0x4a0] sm:$0xff]
      %v1900 = vld [vmem:[%s1 + $0x4a8] sm:$0xff]
      %v1901 = vld [vmem:[%s1 + $0x4b0] sm:$0xff]
      %v1902 = vld [vmem:[%s1 + $0x4b8] sm:$0xff]
      %v1903 = vld [vmem:[%s1 + $0x4c0] sm:$0xff]
      %v1904 = vld [vmem:[%s1 + $0x4c8] sm:$0xff]
      %v1905 = vld [vmem:[%s1 + $0x4d0] sm:$0xff]
      %v1906 = vld [vmem:[%s1 + $0x4d8] sm:$0xff]
      %v1907 = vld [vmem:[%s1 + $0x4e0] sm:$0xff]
      %v1908 = vld [vmem:[%s1 + $0x4e8] sm:$0xff]
      %v1909 = vld [vmem:[%s1 + $0x4f0] sm:$0xff]
      %v1910 = vld [vmem:[%s1 + $0x4f8] sm:$0xff]
      %v1911 = vld [vmem:[%s1 + $0x500] sm:$0xff]
      %v1912 = vld [vmem:[%s1 + $0x508] sm:$0xff]
      %v1913 = vld [vmem:[%s1 + $0x510] sm:$0xff]
      %v1914 = vld [vmem:[%s1 + $0x518] sm:$0xff]
      %v1915 = vld [vmem:[%s1 + $0x520] sm:$0xff]
      %v1916 = vld [vmem:[%s1 + $0x528] sm:$0xff]
      %v1917 = vld [vmem:[%s1 + $0x530] sm:$0xff]
      %v1918 = vld [vmem:[%s1 + $0x538] sm:$0xff]
      %v1919 = vld [vmem:[%s1 + $0x540] sm:$0xff]
      %v1920 = vld [vmem:[%s1 + $0x548] sm:$0xff]
      %v1921 = vld [vmem:[%s1 + $0x550] sm:$0xff]
      %v1922 = vld [vmem:[%s1 + $0x558] sm:$0xff]
      %v1923 = vld [vmem:[%s1 + $0x560] sm:$0xff]
      %v1924 = vld [vmem:[%s1 + $0x568] sm:$0xff]
      %v1925 = vld [vmem:[%s1 + $0x570] sm:$0xff]
      %v1926 = vld [vmem:[%s1 + $0x578] sm:$0xff]
      %v1927 = vld [vmem:[%s1 + $0x580] sm:$0xff]
      %v1928 = vld [vmem:[%s1 + $0x588] sm:$0xff]
      %v1929 = vld [vmem:[%s1 + $0x590] sm:$0xff]
      %v1930 = vld [vmem:[%s1 + $0x598] sm:$0xff]
      %v1931 = vld [vmem:[%s1 + $0x5a0] sm:$0xff]
      %v1932 = vld [vmem:[%s1 + $0x5a8] sm:$0xff]
      %v1933 = vld [vmem:[%s1 + $0x5b0] sm:$0xff]
      %v1934 = vld [vmem:[%s1 + $0x5b8] sm:$0xff]
      %v1935 = vld [vmem:[%s1 + $0x5c0] sm:$0xff]
      %v1936 = vld [vmem:[%s1 + $0x5c8] sm:$0xff]
      %v1937 = vld [vmem:[%s1 + $0x5d0] sm:$0xff]
      %v1938 = vld [vmem:[%s1 + $0x5d8] sm:$0xff]
      %v1939 = vld [vmem:[%s1 + $0x5e0] sm:$0xff]
      %v1940 = vld [vmem:[%s1 + $0x5e8] sm:$0xff]
      %v1941 = vld [vmem:[%s1 + $0x5f0] sm:$0xff]
      %v1942 = vld [vmem:[%s1 + $0x5f8] sm:$0xff]
      %v1943 = vld [vmem:[%s1 + $0x600] sm:$0xff]
      %v1944 = vld [vmem:[%s1 + $0x608] sm:$0xff]
      %v1945 = vld [vmem:[%s1 + $0x610] sm:$0xff]
      %v1946 = vld [vmem:[%s1 + $0x618] sm:$0xff]
      %v1947 = vld [vmem:[%s1 + $0x620] sm:$0xff]
      %v1948 = vld [vmem:[%s1 + $0x628] sm:$0xff]
      %v1949 = vld [vmem:[%s1 + $0x630] sm:$0xff]
      %v1950 = vld [vmem:[%s1 + $0x638] sm:$0xff]
      %v1951 = vld [vmem:[%s1 + $0x640] sm:$0xff]
      %v1952 = vld [vmem:[%s1 + $0x648] sm:$0xff]
      %v1953 = vld [vmem:[%s1 + $0x650] sm:$0xff]
      %v1954 = vld [vmem:[%s1 + $0x658] sm:$0xff]
      %v1955 = vld [vmem:[%s1 + $0x660] sm:$0xff]
      %v1956 = vld [vmem:[%s1 + $0x668] sm:$0xff]
      %v1957 = vld [vmem:[%s1 + $0x670] sm:$0xff]
      %v1958 = vld [vmem:[%s1 + $0x678] sm:$0xff]
      %v1959 = vld [vmem:[%s1 + $0x680] sm:$0xff]
      %v1960 = vld [vmem:[%s1 + $0x688] sm:$0xff]
      %v1961 = vld [vmem:[%s1 + $0x690] sm:$0xff]
      %v1962 = vld [vmem:[%s1 + $0x698] sm:$0xff]
      %v1963 = vld [vmem:[%s1 + $0x6a0] sm:$0xff]
      %v1964 = vld [vmem:[%s1 + $0x6a8] sm:$0xff]
      %v1965 = vld [vmem:[%s1 + $0x6b0] sm:$0xff]
      %v1966 = vld [vmem:[%s1 + $0x6b8] sm:$0xff]
      %v1967 = vld [vmem:[%s1 + $0x6c0] sm:$0xff]
      %v1968 = vld [vmem:[%s1 + $0x6c8] sm:$0xff]
      %v1969 = vld [vmem:[%s1 + $0x6d0] sm:$0xff]
      %v1970 = vld [vmem:[%s1 + $0x6d8] sm:$0xff]
      %v1971 = vld [vmem:[%s1 + $0x6e0] sm:$0xff]
      %v1972 = vld [vmem:[%s1 + $0x6e8] sm:$0xff]
      %v1973 = vld [vmem:[%s1 + $0x6f0] sm:$0xff]
      %v1974 = vld [vmem:[%s1 + $0x6f8] sm:$0xff]
      %v1975 = vld [vmem:[%s1 + $0x700] sm:$0xff]
      %v1976 = vld [vmem:[%s1 + $0x708] sm:$0xff]
      %v1977 = vld [vmem:[%s1 + $0x710] sm:$0xff]
      %v1978 = vld [vmem:[%s1 + $0x718] sm:$0xff]
      %v1979 = vld [vmem:[%s1 + $0x720] sm:$0xff]
      %v1980 = vld [vmem:[%s1 + $0x728] sm:$0xff]
      %v1981 = vld [vmem:[%s1 + $0x730] sm:$0xff]
      %v1982 = vld [vmem:[%s1 + $0x738] sm:$0xff]
      %v1983 = vld [vmem:[%s1 + $0x740] sm:$0xff]
      %v1984 = vld [vmem:[%s1 + $0x748] sm:$0xff]
      %v1985 = vld [vmem:[%s1 + $0x750] sm:$0xff]
      %v1986 = vld [vmem:[%s1 + $0x758] sm:$0xff]
      %v1987 = vld [vmem:[%s1 + $0x760] sm:$0xff]
      %v1988 = vld [vmem:[%s1 + $0x768] sm:$0xff]
      %v1989 = vld [vmem:[%s1 + $0x770] sm:$0xff]
      %v1990 = vld [vmem:[%s1 + $0x778] sm:$0xff]
      %v1991 = vld [vmem:[%s1 + $0x780] sm:$0xff]
      %v1992 = vld [vmem:[%s1 + $0x788] sm:$0xff]
      %v1993 = vld [vmem:[%s1 + $0x790] sm:$0xff]
      %v1994 = vld [vmem:[%s1 + $0x798] sm:$0xff]
      %v1995 = vld [vmem:[%s1 + $0x7a0] sm:$0xff]
      %v1996 = vld [vmem:[%s1 + $0x7a8] sm:$0xff]
      %v1997 = vld [vmem:[%s1 + $0x7b0] sm:$0xff]
      %v1998 = vld [vmem:[%s1 + $0x7b8] sm:$0xff]
      %v1999 = vld [vmem:[%s1 + $0x7c0] sm:$0xff]
      %v2000 = vld [vmem:[%s1 + $0x7c8] sm:$0xff]
      %v2001 = vld [vmem:[%s1 + $0x7d0] sm:$0xff]
      %v2002 = vld [vmem:[%s1 + $0x7d8] sm:$0xff]
      %v2003 = vld [vmem:[%s1 + $0x7e0] sm:$0xff]
      %v2004 = vld [vmem:[%s1 + $0x7e8] sm:$0xff]
      %v2005 = vld [vmem:[%s1 + $0x7f0] sm:$0xff]
      %v2006 = vld [vmem:[%s1 + $0x7f8] sm:$0xff]
      %v2007 = vld [vmem:[%s1 + $0x800] sm:$0xff]
      %v2008 = vld [vmem:[%s1 + $0x808] sm:$0xff]
      %v2009 = vld [vmem:[%s1 + $0x810] sm:$0xff]
      %v2010 = vld [vmem:[%s1 + $0x818] sm:$0xff]
      %v2011 = vld [vmem:[%s1 + $0x820] sm:$0xff]
      %v2012 = vld [vmem:[%s1 + $0x828] sm:$0xff]
      %v2013 = vld [vmem:[%s1 + $0x830] sm:$0xff]
      %v2014 = vld [vmem:[%s1 + $0x838] sm:$0xff]
      %v2015 = vld [vmem:[%s1 + $0x840] sm:$0xff]
      %v2016 = vld [vmem:[%s1 + $0x848] sm:$0xff]
      %v2017 = vld [vmem:[%s1 + $0x850] sm:$0xff]
      %v2018 = vld [vmem:[%s1 + $0x858] sm:$0xff]
      %v2019 = vld [vmem:[%s1 + $0x860] sm:$0xff]
      %v2020 = vld [vmem:[%s1 + $0x868] sm:$0xff]
      %v2021 = vld [vmem:[%s1 + $0x870] sm:$0xff]
      %v2022 = vld [vmem:[%s1 + $0x878] sm:$0xff]
      %v2023 = vld [vmem:[%s1 + $0x880] sm:$0xff]
      %v2024 = vld [vmem:[%s1 + $0x888] sm:$0xff]
      %v2025 = vld [vmem:[%s1 + $0x890] sm:$0xff]
      %v2026 = vld [vmem:[%s1 + $0x898] sm:$0xff]
      %v2027 = vld [vmem:[%s1 + $0x8a0] sm:$0xff]
      %v2028 = vld [vmem:[%s1 + $0x8a8] sm:$0xff]
      %v2029 = vld [vmem:[%s1 + $0x8b0] sm:$0xff]
      %v2030 = vld [vmem:[%s1 + $0x8b8] sm:$0xff]
      %v2031 = vld [vmem:[%s1 + $0x8c0] sm:$0xff]
      %v2032 = vld [vmem:[%s1 + $0x8c8] sm:$0xff]
      %v2033 = vld [vmem:[%s1 + $0x8d0] sm:$0xff]
      %v2034 = vld [vmem:[%s1 + $0x8d8] sm:$0xff]
      %v2035 = vld [vmem:[%s1 + $0x8e0] sm:$0xff]
      %v2036 = vld [vmem:[%s1 + $0x8e8] sm:$0xff]
      %v2037 = vld [vmem:[%s1 + $0x8f0] sm:$0xff]
      %v2038 = vld [vmem:[%s1 + $0x8f8] sm:$0xff]
      %v2111 = vunpack.c.l.b16 %v1679
      %v2112 = vunpack.c.h.b16 %v1679
      %v2113 = vunpack.c.l.b16 %v1680
      %v2114 = vunpack.c.h.b16 %v1680
      %v2115 = vunpack.c.l.b16 %v1681
      %v2116 = vunpack.c.h.b16 %v1681
      %v2117 = vunpack.c.l.b16 %v1682
      %v2118 = vunpack.c.h.b16 %v1682
      %v2119 = vunpack.c.l.b16 %v1683
      %v2120 = vunpack.c.h.b16 %v1683
      %v2121 = vunpack.c.l.b16 %v1684
      %v2122 = vunpack.c.h.b16 %v1684
      %v2123 = vunpack.c.l.b16 %v1685
      %v2124 = vunpack.c.h.b16 %v1685
      %v2125 = vunpack.c.l.b16 %v1686
      %v2126 = vunpack.c.h.b16 %v1686
      %v2127 = vunpack.c.l.b16 %v1687
      %v2128 = vunpack.c.h.b16 %v1687
      %v2129 = vunpack.c.l.b16 %v1688
      %v2130 = vunpack.c.h.b16 %v1688
      %v2131 = vunpack.c.l.b16 %v1689
      %v2132 = vunpack.c.h.b16 %v1689
      %v2133 = vunpack.c.l.b16 %v1690
      %v2134 = vunpack.c.h.b16 %v1690
      %v2135 = vunpack.c.l.b16 %v1691
      %v2136 = vunpack.c.h.b16 %v1691
      %v2137 = vunpack.c.l.b16 %v1692
      %v2138 = vunpack.c.h.b16 %v1692
      %v2139 = vunpack.c.l.b16 %v1693
      %v2140 = vunpack.c.h.b16 %v1693
      %v2141 = vunpack.c.l.b16 %v1694
      %v2142 = vunpack.c.h.b16 %v1694
      %v2143 = vunpack.c.l.b16 %v1695
      %v2144 = vunpack.c.h.b16 %v1695
      %v2145 = vunpack.c.l.b16 %v1696
      %v2146 = vunpack.c.h.b16 %v1696
      %v2147 = vunpack.c.l.b16 %v1697
      %v2148 = vunpack.c.h.b16 %v1697
      %v2149 = vunpack.c.l.b16 %v1698
      %v2150 = vunpack.c.h.b16 %v1698
      %v2151 = vunpack.c.l.b16 %v1699
      %v2152 = vunpack.c.h.b16 %v1699
      %v2153 = vunpack.c.l.b16 %v1700
      %v2154 = vunpack.c.h.b16 %v1700
      %v2155 = vunpack.c.l.b16 %v1701
      %v2156 = vunpack.c.h.b16 %v1701
      %v2157 = vunpack.c.l.b16 %v1702
      %v2158 = vunpack.c.h.b16 %v1702
      %v2159 = vunpack.c.l.b16 %v1703
      %v2160 = vunpack.c.h.b16 %v1703
      %v2161 = vunpack.c.l.b16 %v1704
      %v2162 = vunpack.c.h.b16 %v1704
      %v2163 = vunpack.c.l.b16 %v1705
      %v2164 = vunpack.c.h.b16 %v1705
      %v2165 = vunpack.c.l.b16 %v1706
      %v2166 = vunpack.c.h.b16 %v1706
      %v2167 = vunpack.c.l.b16 %v1707
      %v2168 = vunpack.c.h.b16 %v1707
      %v2169 = vunpack.c.l.b16 %v1708
      %v2170 = vunpack.c.h.b16 %v1708
      %v2171 = vunpack.c.l.b16 %v1709
      %v2172 = vunpack.c.h.b16 %v1709
      %v2173 = vunpack.c.l.b16 %v1710
      %v2174 = vunpack.c.h.b16 %v1710
      %v2175 = vunpack.c.l.b16 %v1711
      %v2176 = vunpack.c.h.b16 %v1711
      %v2177 = vunpack.c.l.b16 %v1712
      %v2178 = vunpack.c.h.b16 %v1712
      %v2179 = vunpack.c.l.b16 %v1713
      %v2180 = vunpack.c.h.b16 %v1713
      %v2181 = vunpack.c.l.b16 %v1714
      %v2182 = vunpack.c.h.b16 %v1714
      %v2183 = vunpack.c.l.b16 %v1715
      %v2184 = vunpack.c.h.b16 %v1715
      %v2185 = vunpack.c.l.b16 %v1716
      %v2186 = vunpack.c.h.b16 %v1716
      %v2187 = vunpack.c.l.b16 %v1717
      %v2188 = vunpack.c.h.b16 %v1717
      %v2189 = vunpack.c.l.b16 %v1718
      %v2190 = vunpack.c.h.b16 %v1718
      %v2191 = vunpack.c.l.b16 %v1719
      %v2192 = vunpack.c.h.b16 %v1719
      %v2193 = vunpack.c.l.b16 %v1720
      %v2194 = vunpack.c.h.b16 %v1720
      %v2195 = vunpack.c.l.b16 %v1721
      %v2196 = vunpack.c.h.b16 %v1721
      %v2197 = vunpack.c.l.b16 %v1722
      %v2198 = vunpack.c.h.b16 %v1722
      %v2199 = vunpack.c.l.b16 %v1723
      %v2200 = vunpack.c.h.b16 %v1723
      %v2201 = vunpack.c.l.b16 %v1724
      %v2202 = vunpack.c.h.b16 %v1724
      %v2203 = vunpack.c.l.b16 %v1725
      %v2204 = vunpack.c.h.b16 %v1725
      %v2205 = vunpack.c.l.b16 %v1726
      %v2206 = vunpack.c.h.b16 %v1726
      %v2207 = vunpack.c.l.b16 %v1727
      %v2208 = vunpack.c.h.b16 %v1727
      %v2209 = vunpack.c.l.b16 %v1728
      %v2210 = vunpack.c.h.b16 %v1728
      %v2211 = vunpack.c.l.b16 %v1729
      %v2212 = vunpack.c.h.b16 %v1729
      %v2213 = vunpack.c.l.b16 %v1730
      %v2214 = vunpack.c.h.b16 %v1730
      %v2215 = vunpack.c.l.b16 %v1731
      %v2216 = vunpack.c.h.b16 %v1731
      %v2217 = vunpack.c.l.b16 %v1732
      %v2218 = vunpack.c.h.b16 %v1732
      %v2219 = vunpack.c.l.b16 %v1733
      %v2220 = vunpack.c.h.b16 %v1733
      %v2221 = vunpack.c.l.b16 %v1734
      %v2222 = vunpack.c.h.b16 %v1734
      %v2223 = vunpack.c.l.b16 %v1735
      %v2224 = vunpack.c.h.b16 %v1735
      %v2225 = vunpack.c.l.b16 %v1736
      %v2226 = vunpack.c.h.b16 %v1736
      %v2227 = vunpack.c.l.b16 %v1737
      %v2228 = vunpack.c.h.b16 %v1737
      %v2229 = vunpack.c.l.b16 %v1738
      %v2230 = vunpack.c.h.b16 %v1738
      %v2231 = vunpack.c.l.b16 %v1739
      %v2232 = vunpack.c.h.b16 %v1739
      %v2233 = vunpack.c.l.b16 %v1740
      %v2234 = vunpack.c.h.b16 %v1740
      %v2235 = vunpack.c.l.b16 %v1741
      %v2236 = vunpack.c.h.b16 %v1741
      %v2237 = vunpack.c.l.b16 %v1742
      %v2238 = vunpack.c.h.b16 %v1742
      %v2239 = vunpack.c.l.b16 %v1743
      %v2240 = vunpack.c.h.b16 %v1743
      %v2241 = vunpack.c.l.b16 %v1744
      %v2242 = vunpack.c.h.b16 %v1744
      %v2243 = vunpack.c.l.b16 %v1745
      %v2244 = vunpack.c.h.b16 %v1745
      %v2245 = vunpack.c.l.b16 %v1746
      %v2246 = vunpack.c.h.b16 %v1746
      %v2247 = vunpack.c.l.b16 %v1747
      %v2248 = vunpack.c.h.b16 %v1747
      %v2249 = vunpack.c.l.b16 %v1748
      %v2250 = vunpack.c.h.b16 %v1748
      %v2251 = vunpack.c.l.b16 %v1749
      %v2252 = vunpack.c.h.b16 %v1749
      %v2253 = vunpack.c.l.b16 %v1750
      %v2254 = vunpack.c.h.b16 %v1750
      %v2255 = vpack.c.b16 %v2129, %v2111
      %v2256 = vpack.c.b16 %v2130, %v2112
      %v2257 = vpack.c.b16 %v2131, %v2113
      %v2258 = vpack.c.b16 %v2132, %v2114
      %v2259 = vpack.c.b16 %v2133, %v2115
      %v2260 = vpack.c.b16 %v2134, %v2116
      %v2261 = vpack.c.b16 %v2135, %v2117
      %v2262 = vpack.c.b16 %v2136, %v2118
      %v2263 = vpack.c.b16 %v2137, %v2119
      %v2264 = vpack.c.b16 %v2138, %v2120
      %v2265 = vpack.c.b16 %v2139, %v2121
      %v2266 = vpack.c.b16 %v2140, %v2122
      %v2267 = vpack.c.b16 %v2141, %v2123
      %v2268 = vpack.c.b16 %v2142, %v2124
      %v2269 = vpack.c.b16 %v2143, %v2125
      %v2270 = vpack.c.b16 %v2144, %v2126
      %v2271 = vpack.c.b16 %v2145, %v2127
      %v2272 = vpack.c.b16 %v2146, %v2128
      %v2273 = vpack.c.b16 %v2165, %v2147
      %v2274 = vpack.c.b16 %v2166, %v2148
      %v2275 = vpack.c.b16 %v2167, %v2149
      %v2276 = vpack.c.b16 %v2168, %v2150
      %v2277 = vpack.c.b16 %v2169, %v2151
      %v2278 = vpack.c.b16 %v2170, %v2152
      %v2279 = vpack.c.b16 %v2171, %v2153
      %v2280 = vpack.c.b16 %v2172, %v2154
      %v2281 = vpack.c.b16 %v2173, %v2155
      %v2282 = vpack.c.b16 %v2174, %v2156
      %v2283 = vpack.c.b16 %v2175, %v2157
      %v2284 = vpack.c.b16 %v2176, %v2158
      %v2285 = vpack.c.b16 %v2177, %v2159
      %v2286 = vpack.c.b16 %v2178, %v2160
      %v2287 = vpack.c.b16 %v2179, %v2161
      %v2288 = vpack.c.b16 %v2180, %v2162
      %v2289 = vpack.c.b16 %v2181, %v2163
      %v2290 = vpack.c.b16 %v2182, %v2164
      %v2291 = vpack.c.b16 %v2201, %v2183
      %v2292 = vpack.c.b16 %v2202, %v2184
      %v2293 = vpack.c.b16 %v2203, %v2185
      %v2294 = vpack.c.b16 %v2204, %v2186
      %v2295 = vpack.c.b16 %v2205, %v2187
      %v2296 = vpack.c.b16 %v2206, %v2188
      %v2297 = vpack.c.b16 %v2207, %v2189
      %v2298 = vpack.c.b16 %v2208, %v2190
      %v2299 = vpack.c.b16 %v2209, %v2191
      %v2300 = vpack.c.b16 %v2210, %v2192
      %v2301 = vpack.c.b16 %v2211, %v2193
      %v2302 = vpack.c.b16 %v2212, %v2194
      %v2303 = vpack.c.b16 %v2213, %v2195
      %v2304 = vpack.c.b16 %v2214, %v2196
      %v2305 = vpack.c.b16 %v2215, %v2197
      %v2306 = vpack.c.b16 %v2216, %v2198
      %v2307 = vpack.c.b16 %v2217, %v2199
      %v2308 = vpack.c.b16 %v2218, %v2200
      %v2309 = vpack.c.b16 %v2237, %v2219
      %v2310 = vpack.c.b16 %v2238, %v2220
      %v2311 = vpack.c.b16 %v2239, %v2221
      %v2312 = vpack.c.b16 %v2240, %v2222
      %v2313 = vpack.c.b16 %v2241, %v2223
      %v2314 = vpack.c.b16 %v2242, %v2224
      %v2315 = vpack.c.b16 %v2243, %v2225
      %v2316 = vpack.c.b16 %v2244, %v2226
      %v2317 = vpack.c.b16 %v2245, %v2227
      %v2318 = vpack.c.b16 %v2246, %v2228
      %v2319 = vpack.c.b16 %v2247, %v2229
      %v2320 = vpack.c.b16 %v2248, %v2230
      %v2321 = vpack.c.b16 %v2249, %v2231
      %v2322 = vpack.c.b16 %v2250, %v2232
      %v2323 = vpack.c.b16 %v2251, %v2233
      %v2324 = vpack.c.b16 %v2252, %v2234
      %v2325 = vpack.c.b16 %v2253, %v2235
      %v2326 = vpack.c.b16 %v2254, %v2236
      %v2687 = vunpack.c.l.b16 %v1751
      %v2688 = vunpack.c.h.b16 %v1751
      %v2689 = vunpack.c.l.b16 %v1752
      %v2690 = vunpack.c.h.b16 %v1752
      %v2691 = vunpack.c.l.b16 %v1753
      %v2692 = vunpack.c.h.b16 %v1753
      %v2693 = vunpack.c.l.b16 %v1754
      %v2694 = vunpack.c.h.b16 %v1754
      %v2695 = vunpack.c.l.b16 %v1755
      %v2696 = vunpack.c.h.b16 %v1755
      %v2697 = vunpack.c.l.b16 %v1756
      %v2698 = vunpack.c.h.b16 %v1756
      %v2699 = vunpack.c.l.b16 %v1757
      %v2700 = vunpack.c.h.b16 %v1757
      %v2701 = vunpack.c.l.b16 %v1758
      %v2702 = vunpack.c.h.b16 %v1758
      %v2703 = vunpack.c.l.b16 %v1759
      %v2704 = vunpack.c.h.b16 %v1759
      %v2705 = vunpack.c.l.b16 %v1760
      %v2706 = vunpack.c.h.b16 %v1760
      %v2707 = vunpack.c.l.b16 %v1761
      %v2708 = vunpack.c.h.b16 %v1761
      %v2709 = vunpack.c.l.b16 %v1762
      %v2710 = vunpack.c.h.b16 %v1762
      %v2711 = vunpack.c.l.b16 %v1763
      %v2712 = vunpack.c.h.b16 %v1763
      %v2713 = vunpack.c.l.b16 %v1764
      %v2714 = vunpack.c.h.b16 %v1764
      %v2715 = vunpack.c.l.b16 %v1765
      %v2716 = vunpack.c.h.b16 %v1765
      %v2717 = vunpack.c.l.b16 %v1766
      %v2718 = vunpack.c.h.b16 %v1766
      %v2719 = vunpack.c.l.b16 %v1767
      %v2720 = vunpack.c.h.b16 %v1767
      %v2721 = vunpack.c.l.b16 %v1768
      %v2722 = vunpack.c.h.b16 %v1768
      %v2723 = vunpack.c.l.b16 %v1769
      %v2724 = vunpack.c.h.b16 %v1769
      %v2725 = vunpack.c.l.b16 %v1770
      %v2726 = vunpack.c.h.b16 %v1770
      %v2727 = vunpack.c.l.b16 %v1771
      %v2728 = vunpack.c.h.b16 %v1771
      %v2729 = vunpack.c.l.b16 %v1772
      %v2730 = vunpack.c.h.b16 %v1772
      %v2731 = vunpack.c.l.b16 %v1773
      %v2732 = vunpack.c.h.b16 %v1773
      %v2733 = vunpack.c.l.b16 %v1774
      %v2734 = vunpack.c.h.b16 %v1774
      %v2735 = vunpack.c.l.b16 %v1775
      %v2736 = vunpack.c.h.b16 %v1775
      %v2737 = vunpack.c.l.b16 %v1776
      %v2738 = vunpack.c.h.b16 %v1776
      %v2739 = vunpack.c.l.b16 %v1777
      %v2740 = vunpack.c.h.b16 %v1777
      %v2741 = vunpack.c.l.b16 %v1778
      %v2742 = vunpack.c.h.b16 %v1778
      %v2743 = vunpack.c.l.b16 %v1779
      %v2744 = vunpack.c.h.b16 %v1779
      %v2745 = vunpack.c.l.b16 %v1780
      %v2746 = vunpack.c.h.b16 %v1780
      %v2747 = vunpack.c.l.b16 %v1781
      %v2748 = vunpack.c.h.b16 %v1781
      %v2749 = vunpack.c.l.b16 %v1782
      %v2750 = vunpack.c.h.b16 %v1782
      %v2751 = vunpack.c.l.b16 %v1783
      %v2752 = vunpack.c.h.b16 %v1783
      %v2753 = vunpack.c.l.b16 %v1784
      %v2754 = vunpack.c.h.b16 %v1784
      %v2755 = vunpack.c.l.b16 %v1785
      %v2756 = vunpack.c.h.b16 %v1785
      %v2757 = vunpack.c.l.b16 %v1786
      %v2758 = vunpack.c.h.b16 %v1786
      %v2759 = vunpack.c.l.b16 %v1787
      %v2760 = vunpack.c.h.b16 %v1787
      %v2761 = vunpack.c.l.b16 %v1788
      %v2762 = vunpack.c.h.b16 %v1788
      %v2763 = vunpack.c.l.b16 %v1789
      %v2764 = vunpack.c.h.b16 %v1789
      %v2765 = vunpack.c.l.b16 %v1790
      %v2766 = vunpack.c.h.b16 %v1790
      %v2767 = vunpack.c.l.b16 %v1791
      %v2768 = vunpack.c.h.b16 %v1791
      %v2769 = vunpack.c.l.b16 %v1792
      %v2770 = vunpack.c.h.b16 %v1792
      %v2771 = vunpack.c.l.b16 %v1793
      %v2772 = vunpack.c.h.b16 %v1793
      %v2773 = vunpack.c.l.b16 %v1794
      %v2774 = vunpack.c.h.b16 %v1794
      %v2775 = vunpack.c.l.b16 %v1795
      %v2776 = vunpack.c.h.b16 %v1795
      %v2777 = vunpack.c.l.b16 %v1796
      %v2778 = vunpack.c.h.b16 %v1796
      %v2779 = vunpack.c.l.b16 %v1797
      %v2780 = vunpack.c.h.b16 %v1797
      %v2781 = vunpack.c.l.b16 %v1798
      %v2782 = vunpack.c.h.b16 %v1798
      %v2783 = vunpack.c.l.b16 %v1799
      %v2784 = vunpack.c.h.b16 %v1799
      %v2785 = vunpack.c.l.b16 %v1800
      %v2786 = vunpack.c.h.b16 %v1800
      %v2787 = vunpack.c.l.b16 %v1801
      %v2788 = vunpack.c.h.b16 %v1801
      %v2789 = vunpack.c.l.b16 %v1802
      %v2790 = vunpack.c.h.b16 %v1802
      %v2791 = vunpack.c.l.b16 %v1803
      %v2792 = vunpack.c.h.b16 %v1803
      %v2793 = vunpack.c.l.b16 %v1804
      %v2794 = vunpack.c.h.b16 %v1804
      %v2795 = vunpack.c.l.b16 %v1805
      %v2796 = vunpack.c.h.b16 %v1805
      %v2797 = vunpack.c.l.b16 %v1806
      %v2798 = vunpack.c.h.b16 %v1806
      %v2799 = vunpack.c.l.b16 %v1807
      %v2800 = vunpack.c.h.b16 %v1807
      %v2801 = vunpack.c.l.b16 %v1808
      %v2802 = vunpack.c.h.b16 %v1808
      %v2803 = vunpack.c.l.b16 %v1809
      %v2804 = vunpack.c.h.b16 %v1809
      %v2805 = vunpack.c.l.b16 %v1810
      %v2806 = vunpack.c.h.b16 %v1810
      %v2807 = vunpack.c.l.b16 %v1811
      %v2808 = vunpack.c.h.b16 %v1811
      %v2809 = vunpack.c.l.b16 %v1812
      %v2810 = vunpack.c.h.b16 %v1812
      %v2811 = vunpack.c.l.b16 %v1813
      %v2812 = vunpack.c.h.b16 %v1813
      %v2813 = vunpack.c.l.b16 %v1814
      %v2814 = vunpack.c.h.b16 %v1814
      %v2815 = vunpack.c.l.b16 %v1815
      %v2816 = vunpack.c.h.b16 %v1815
      %v2817 = vunpack.c.l.b16 %v1816
      %v2818 = vunpack.c.h.b16 %v1816
      %v2819 = vunpack.c.l.b16 %v1817
      %v2820 = vunpack.c.h.b16 %v1817
      %v2821 = vunpack.c.l.b16 %v1818
      %v2822 = vunpack.c.h.b16 %v1818
      %v2823 = vunpack.c.l.b16 %v1819
      %v2824 = vunpack.c.h.b16 %v1819
      %v2825 = vunpack.c.l.b16 %v1820
      %v2826 = vunpack.c.h.b16 %v1820
      %v2827 = vunpack.c.l.b16 %v1821
      %v2828 = vunpack.c.h.b16 %v1821
      %v2829 = vunpack.c.l.b16 %v1822
      %v2830 = vunpack.c.h.b16 %v1822
      %v2831 = vunpack.c.l.b16 %v1823
      %v2832 = vunpack.c.h.b16 %v1823
      %v2833 = vunpack.c.l.b16 %v1824
      %v2834 = vunpack.c.h.b16 %v1824
      %v2835 = vunpack.c.l.b16 %v1825
      %v2836 = vunpack.c.h.b16 %v1825
      %v2837 = vunpack.c.l.b16 %v1826
      %v2838 = vunpack.c.h.b16 %v1826
      %v2839 = vunpack.c.l.b16 %v1827
      %v2840 = vunpack.c.h.b16 %v1827
      %v2841 = vunpack.c.l.b16 %v1828
      %v2842 = vunpack.c.h.b16 %v1828
      %v2843 = vunpack.c.l.b16 %v1829
      %v2844 = vunpack.c.h.b16 %v1829
      %v2845 = vunpack.c.l.b16 %v1830
      %v2846 = vunpack.c.h.b16 %v1830
      %v2847 = vunpack.c.l.b16 %v1831
      %v2848 = vunpack.c.h.b16 %v1831
      %v2849 = vunpack.c.l.b16 %v1832
      %v2850 = vunpack.c.h.b16 %v1832
      %v2851 = vunpack.c.l.b16 %v1833
      %v2852 = vunpack.c.h.b16 %v1833
      %v2853 = vunpack.c.l.b16 %v1834
      %v2854 = vunpack.c.h.b16 %v1834
      %v2855 = vunpack.c.l.b16 %v1835
      %v2856 = vunpack.c.h.b16 %v1835
      %v2857 = vunpack.c.l.b16 %v1836
      %v2858 = vunpack.c.h.b16 %v1836
      %v2859 = vunpack.c.l.b16 %v1837
      %v2860 = vunpack.c.h.b16 %v1837
      %v2861 = vunpack.c.l.b16 %v1838
      %v2862 = vunpack.c.h.b16 %v1838
      %v2863 = vunpack.c.l.b16 %v1839
      %v2864 = vunpack.c.h.b16 %v1839
      %v2865 = vunpack.c.l.b16 %v1840
      %v2866 = vunpack.c.h.b16 %v1840
      %v2867 = vunpack.c.l.b16 %v1841
      %v2868 = vunpack.c.h.b16 %v1841
      %v2869 = vunpack.c.l.b16 %v1842
      %v2870 = vunpack.c.h.b16 %v1842
      %v2871 = vunpack.c.l.b16 %v1843
      %v2872 = vunpack.c.h.b16 %v1843
      %v2873 = vunpack.c.l.b16 %v1844
      %v2874 = vunpack.c.h.b16 %v1844
      %v2875 = vunpack.c.l.b16 %v1845
      %v2876 = vunpack.c.h.b16 %v1845
      %v2877 = vunpack.c.l.b16 %v1846
      %v2878 = vunpack.c.h.b16 %v1846
      %v2879 = vunpack.c.l.b16 %v1847
      %v2880 = vunpack.c.h.b16 %v1847
      %v2881 = vunpack.c.l.b16 %v1848
      %v2882 = vunpack.c.h.b16 %v1848
      %v2883 = vunpack.c.l.b16 %v1849
      %v2884 = vunpack.c.h.b16 %v1849
      %v2885 = vunpack.c.l.b16 %v1850
      %v2886 = vunpack.c.h.b16 %v1850
      %v2887 = vunpack.c.l.b16 %v1851
      %v2888 = vunpack.c.h.b16 %v1851
      %v2889 = vunpack.c.l.b16 %v1852
      %v2890 = vunpack.c.h.b16 %v1852
      %v2891 = vunpack.c.l.b16 %v1853
      %v2892 = vunpack.c.h.b16 %v1853
      %v2893 = vunpack.c.l.b16 %v1854
      %v2894 = vunpack.c.h.b16 %v1854
      %v2895 = vunpack.c.l.b16 %v1855
      %v2896 = vunpack.c.h.b16 %v1855
      %v2897 = vunpack.c.l.b16 %v1856
      %v2898 = vunpack.c.h.b16 %v1856
      %v2899 = vunpack.c.l.b16 %v1857
      %v2900 = vunpack.c.h.b16 %v1857
      %v2901 = vunpack.c.l.b16 %v1858
      %v2902 = vunpack.c.h.b16 %v1858
      %v2903 = vunpack.c.l.b16 %v1859
      %v2904 = vunpack.c.h.b16 %v1859
      %v2905 = vunpack.c.l.b16 %v1860
      %v2906 = vunpack.c.h.b16 %v1860
      %v2907 = vunpack.c.l.b16 %v1861
      %v2908 = vunpack.c.h.b16 %v1861
      %v2909 = vunpack.c.l.b16 %v1862
      %v2910 = vunpack.c.h.b16 %v1862
      %v2911 = vunpack.c.l.b16 %v1863
      %v2912 = vunpack.c.h.b16 %v1863
      %v2913 = vunpack.c.l.b16 %v1864
      %v2914 = vunpack.c.h.b16 %v1864
      %v2915 = vunpack.c.l.b16 %v1865
      %v2916 = vunpack.c.h.b16 %v1865
      %v2917 = vunpack.c.l.b16 %v1866
      %v2918 = vunpack.c.h.b16 %v1866
      %v2919 = vunpack.c.l.b16 %v1867
      %v2920 = vunpack.c.h.b16 %v1867
      %v2921 = vunpack.c.l.b16 %v1868
      %v2922 = vunpack.c.h.b16 %v1868
      %v2923 = vunpack.c.l.b16 %v1869
      %v2924 = vunpack.c.h.b16 %v1869
      %v2925 = vunpack.c.l.b16 %v1870
      %v2926 = vunpack.c.h.b16 %v1870
      %v2927 = vunpack.c.l.b16 %v1871
      %v2928 = vunpack.c.h.b16 %v1871
      %v2929 = vunpack.c.l.b16 %v1872
      %v2930 = vunpack.c.h.b16 %v1872
      %v2931 = vunpack.c.l.b16 %v1873
      %v2932 = vunpack.c.h.b16 %v1873
      %v2933 = vunpack.c.l.b16 %v1874
      %v2934 = vunpack.c.h.b16 %v1874
      %v2935 = vunpack.c.l.b16 %v1875
      %v2936 = vunpack.c.h.b16 %v1875
      %v2937 = vunpack.c.l.b16 %v1876
      %v2938 = vunpack.c.h.b16 %v1876
      %v2939 = vunpack.c.l.b16 %v1877
      %v2940 = vunpack.c.h.b16 %v1877
      %v2941 = vunpack.c.l.b16 %v1878
      %v2942 = vunpack.c.h.b16 %v1878
      %v2943 = vunpack.c.l.b16 %v1879
      %v2944 = vunpack.c.h.b16 %v1879
      %v2945 = vunpack.c.l.b16 %v1880
      %v2946 = vunpack.c.h.b16 %v1880
      %v2947 = vunpack.c.l.b16 %v1881
      %v2948 = vunpack.c.h.b16 %v1881
      %v2949 = vunpack.c.l.b16 %v1882
      %v2950 = vunpack.c.h.b16 %v1882
      %v2951 = vunpack.c.l.b16 %v1883
      %v2952 = vunpack.c.h.b16 %v1883
      %v2953 = vunpack.c.l.b16 %v1884
      %v2954 = vunpack.c.h.b16 %v1884
      %v2955 = vunpack.c.l.b16 %v1885
      %v2956 = vunpack.c.h.b16 %v1885
      %v2957 = vunpack.c.l.b16 %v1886
      %v2958 = vunpack.c.h.b16 %v1886
      %v2959 = vunpack.c.l.b16 %v1887
      %v2960 = vunpack.c.h.b16 %v1887
      %v2961 = vunpack.c.l.b16 %v1888
      %v2962 = vunpack.c.h.b16 %v1888
      %v2963 = vunpack.c.l.b16 %v1889
      %v2964 = vunpack.c.h.b16 %v1889
      %v2965 = vunpack.c.l.b16 %v1890
      %v2966 = vunpack.c.h.b16 %v1890
      %v2967 = vunpack.c.l.b16 %v1891
      %v2968 = vunpack.c.h.b16 %v1891
      %v2969 = vunpack.c.l.b16 %v1892
      %v2970 = vunpack.c.h.b16 %v1892
      %v2971 = vunpack.c.l.b16 %v1893
      %v2972 = vunpack.c.h.b16 %v1893
      %v2973 = vunpack.c.l.b16 %v1894
      %v2974 = vunpack.c.h.b16 %v1894
      %v2975 = vunpack.c.l.b16 %v1895
      %v2976 = vunpack.c.h.b16 %v1895
      %v2977 = vunpack.c.l.b16 %v1896
      %v2978 = vunpack.c.h.b16 %v1896
      %v2979 = vunpack.c.l.b16 %v1897
      %v2980 = vunpack.c.h.b16 %v1897
      %v2981 = vunpack.c.l.b16 %v1898
      %v2982 = vunpack.c.h.b16 %v1898
      %v2983 = vunpack.c.l.b16 %v1899
      %v2984 = vunpack.c.h.b16 %v1899
      %v2985 = vunpack.c.l.b16 %v1900
      %v2986 = vunpack.c.h.b16 %v1900
      %v2987 = vunpack.c.l.b16 %v1901
      %v2988 = vunpack.c.h.b16 %v1901
      %v2989 = vunpack.c.l.b16 %v1902
      %v2990 = vunpack.c.h.b16 %v1902
      %v2991 = vunpack.c.l.b16 %v1903
      %v2992 = vunpack.c.h.b16 %v1903
      %v2993 = vunpack.c.l.b16 %v1904
      %v2994 = vunpack.c.h.b16 %v1904
      %v2995 = vunpack.c.l.b16 %v1905
      %v2996 = vunpack.c.h.b16 %v1905
      %v2997 = vunpack.c.l.b16 %v1906
      %v2998 = vunpack.c.h.b16 %v1906
      %v2999 = vunpack.c.l.b16 %v1907
      %v3000 = vunpack.c.h.b16 %v1907
      %v3001 = vunpack.c.l.b16 %v1908
      %v3002 = vunpack.c.h.b16 %v1908
      %v3003 = vunpack.c.l.b16 %v1909
      %v3004 = vunpack.c.h.b16 %v1909
      %v3005 = vunpack.c.l.b16 %v1910
      %v3006 = vunpack.c.h.b16 %v1910
      %v3007 = vunpack.c.l.b16 %v1911
      %v3008 = vunpack.c.h.b16 %v1911
      %v3009 = vunpack.c.l.b16 %v1912
      %v3010 = vunpack.c.h.b16 %v1912
      %v3011 = vunpack.c.l.b16 %v1913
      %v3012 = vunpack.c.h.b16 %v1913
      %v3013 = vunpack.c.l.b16 %v1914
      %v3014 = vunpack.c.h.b16 %v1914
      %v3015 = vunpack.c.l.b16 %v1915
      %v3016 = vunpack.c.h.b16 %v1915
      %v3017 = vunpack.c.l.b16 %v1916
      %v3018 = vunpack.c.h.b16 %v1916
      %v3019 = vunpack.c.l.b16 %v1917
      %v3020 = vunpack.c.h.b16 %v1917
      %v3021 = vunpack.c.l.b16 %v1918
      %v3022 = vunpack.c.h.b16 %v1918
      %v3023 = vunpack.c.l.b16 %v1919
      %v3024 = vunpack.c.h.b16 %v1919
      %v3025 = vunpack.c.l.b16 %v1920
      %v3026 = vunpack.c.h.b16 %v1920
      %v3027 = vunpack.c.l.b16 %v1921
      %v3028 = vunpack.c.h.b16 %v1921
      %v3029 = vunpack.c.l.b16 %v1922
      %v3030 = vunpack.c.h.b16 %v1922
      %v3031 = vunpack.c.l.b16 %v1923
      %v3032 = vunpack.c.h.b16 %v1923
      %v3033 = vunpack.c.l.b16 %v1924
      %v3034 = vunpack.c.h.b16 %v1924
      %v3035 = vunpack.c.l.b16 %v1925
      %v3036 = vunpack.c.h.b16 %v1925
      %v3037 = vunpack.c.l.b16 %v1926
      %v3038 = vunpack.c.h.b16 %v1926
      %v3039 = vunpack.c.l.b16 %v1927
      %v3040 = vunpack.c.h.b16 %v1927
      %v3041 = vunpack.c.l.b16 %v1928
      %v3042 = vunpack.c.h.b16 %v1928
      %v3043 = vunpack.c.l.b16 %v1929
      %v3044 = vunpack.c.h.b16 %v1929
      %v3045 = vunpack.c.l.b16 %v1930
      %v3046 = vunpack.c.h.b16 %v1930
      %v3047 = vunpack.c.l.b16 %v1931
      %v3048 = vunpack.c.h.b16 %v1931
      %v3049 = vunpack.c.l.b16 %v1932
      %v3050 = vunpack.c.h.b16 %v1932
      %v3051 = vunpack.c.l.b16 %v1933
      %v3052 = vunpack.c.h.b16 %v1933
      %v3053 = vunpack.c.l.b16 %v1934
      %v3054 = vunpack.c.h.b16 %v1934
      %v3055 = vunpack.c.l.b16 %v1935
      %v3056 = vunpack.c.h.b16 %v1935
      %v3057 = vunpack.c.l.b16 %v1936
      %v3058 = vunpack.c.h.b16 %v1936
      %v3059 = vunpack.c.l.b16 %v1937
      %v3060 = vunpack.c.h.b16 %v1937
      %v3061 = vunpack.c.l.b16 %v1938
      %v3062 = vunpack.c.h.b16 %v1938
      %v3063 = vunpack.c.l.b16 %v1939
      %v3064 = vunpack.c.h.b16 %v1939
      %v3065 = vunpack.c.l.b16 %v1940
      %v3066 = vunpack.c.h.b16 %v1940
      %v3067 = vunpack.c.l.b16 %v1941
      %v3068 = vunpack.c.h.b16 %v1941
      %v3069 = vunpack.c.l.b16 %v1942
      %v3070 = vunpack.c.h.b16 %v1942
      %v3071 = vunpack.c.l.b16 %v1943
      %v3072 = vunpack.c.h.b16 %v1943
      %v3073 = vunpack.c.l.b16 %v1944
      %v3074 = vunpack.c.h.b16 %v1944
      %v3075 = vunpack.c.l.b16 %v1945
      %v3076 = vunpack.c.h.b16 %v1945
      %v3077 = vunpack.c.l.b16 %v1946
      %v3078 = vunpack.c.h.b16 %v1946
      %v3079 = vunpack.c.l.b16 %v1947
      %v3080 = vunpack.c.h.b16 %v1947
      %v3081 = vunpack.c.l.b16 %v1948
      %v3082 = vunpack.c.h.b16 %v1948
      %v3083 = vunpack.c.l.b16 %v1949
      %v3084 = vunpack.c.h.b16 %v1949
      %v3085 = vunpack.c.l.b16 %v1950
      %v3086 = vunpack.c.h.b16 %v1950
      %v3087 = vunpack.c.l.b16 %v1951
      %v3088 = vunpack.c.h.b16 %v1951
      %v3089 = vunpack.c.l.b16 %v1952
      %v3090 = vunpack.c.h.b16 %v1952
      %v3091 = vunpack.c.l.b16 %v1953
      %v3092 = vunpack.c.h.b16 %v1953
      %v3093 = vunpack.c.l.b16 %v1954
      %v3094 = vunpack.c.h.b16 %v1954
      %v3095 = vunpack.c.l.b16 %v1955
      %v3096 = vunpack.c.h.b16 %v1955
      %v3097 = vunpack.c.l.b16 %v1956
      %v3098 = vunpack.c.h.b16 %v1956
      %v3099 = vunpack.c.l.b16 %v1957
      %v3100 = vunpack.c.h.b16 %v1957
      %v3101 = vunpack.c.l.b16 %v1958
      %v3102 = vunpack.c.h.b16 %v1958
      %v3103 = vunpack.c.l.b16 %v1959
      %v3104 = vunpack.c.h.b16 %v1959
      %v3105 = vunpack.c.l.b16 %v1960
      %v3106 = vunpack.c.h.b16 %v1960
      %v3107 = vunpack.c.l.b16 %v1961
      %v3108 = vunpack.c.h.b16 %v1961
      %v3109 = vunpack.c.l.b16 %v1962
      %v3110 = vunpack.c.h.b16 %v1962
      %v3111 = vunpack.c.l.b16 %v1963
      %v3112 = vunpack.c.h.b16 %v1963
      %v3113 = vunpack.c.l.b16 %v1964
      %v3114 = vunpack.c.h.b16 %v1964
      %v3115 = vunpack.c.l.b16 %v1965
      %v3116 = vunpack.c.h.b16 %v1965
      %v3117 = vunpack.c.l.b16 %v1966
      %v3118 = vunpack.c.h.b16 %v1966
      %v3119 = vunpack.c.l.b16 %v1967
      %v3120 = vunpack.c.h.b16 %v1967
      %v3121 = vunpack.c.l.b16 %v1968
      %v3122 = vunpack.c.h.b16 %v1968
      %v3123 = vunpack.c.l.b16 %v1969
      %v3124 = vunpack.c.h.b16 %v1969
      %v3125 = vunpack.c.l.b16 %v1970
      %v3126 = vunpack.c.h.b16 %v1970
      %v3127 = vunpack.c.l.b16 %v1971
      %v3128 = vunpack.c.h.b16 %v1971
      %v3129 = vunpack.c.l.b16 %v1972
      %v3130 = vunpack.c.h.b16 %v1972
      %v3131 = vunpack.c.l.b16 %v1973
      %v3132 = vunpack.c.h.b16 %v1973
      %v3133 = vunpack.c.l.b16 %v1974
      %v3134 = vunpack.c.h.b16 %v1974
      %v3135 = vunpack.c.l.b16 %v1975
      %v3136 = vunpack.c.h.b16 %v1975
      %v3137 = vunpack.c.l.b16 %v1976
      %v3138 = vunpack.c.h.b16 %v1976
      %v3139 = vunpack.c.l.b16 %v1977
      %v3140 = vunpack.c.h.b16 %v1977
      %v3141 = vunpack.c.l.b16 %v1978
      %v3142 = vunpack.c.h.b16 %v1978
      %v3143 = vunpack.c.l.b16 %v1979
      %v3144 = vunpack.c.h.b16 %v1979
      %v3145 = vunpack.c.l.b16 %v1980
      %v3146 = vunpack.c.h.b16 %v1980
      %v3147 = vunpack.c.l.b16 %v1981
      %v3148 = vunpack.c.h.b16 %v1981
      %v3149 = vunpack.c.l.b16 %v1982
      %v3150 = vunpack.c.h.b16 %v1982
      %v3151 = vunpack.c.l.b16 %v1983
      %v3152 = vunpack.c.h.b16 %v1983
      %v3153 = vunpack.c.l.b16 %v1984
      %v3154 = vunpack.c.h.b16 %v1984
      %v3155 = vunpack.c.l.b16 %v1985
      %v3156 = vunpack.c.h.b16 %v1985
      %v3157 = vunpack.c.l.b16 %v1986
      %v3158 = vunpack.c.h.b16 %v1986
      %v3159 = vunpack.c.l.b16 %v1987
      %v3160 = vunpack.c.h.b16 %v1987
      %v3161 = vunpack.c.l.b16 %v1988
      %v3162 = vunpack.c.h.b16 %v1988
      %v3163 = vunpack.c.l.b16 %v1989
      %v3164 = vunpack.c.h.b16 %v1989
      %v3165 = vunpack.c.l.b16 %v1990
      %v3166 = vunpack.c.h.b16 %v1990
      %v3167 = vunpack.c.l.b16 %v1991
      %v3168 = vunpack.c.h.b16 %v1991
      %v3169 = vunpack.c.l.b16 %v1992
      %v3170 = vunpack.c.h.b16 %v1992
      %v3171 = vunpack.c.l.b16 %v1993
      %v3172 = vunpack.c.h.b16 %v1993
      %v3173 = vunpack.c.l.b16 %v1994
      %v3174 = vunpack.c.h.b16 %v1994
      %v3175 = vunpack.c.l.b16 %v1995
      %v3176 = vunpack.c.h.b16 %v1995
      %v3177 = vunpack.c.l.b16 %v1996
      %v3178 = vunpack.c.h.b16 %v1996
      %v3179 = vunpack.c.l.b16 %v1997
      %v3180 = vunpack.c.h.b16 %v1997
      %v3181 = vunpack.c.l.b16 %v1998
      %v3182 = vunpack.c.h.b16 %v1998
      %v3183 = vunpack.c.l.b16 %v1999
      %v3184 = vunpack.c.h.b16 %v1999
      %v3185 = vunpack.c.l.b16 %v2000
      %v3186 = vunpack.c.h.b16 %v2000
      %v3187 = vunpack.c.l.b16 %v2001
      %v3188 = vunpack.c.h.b16 %v2001
      %v3189 = vunpack.c.l.b16 %v2002
      %v3190 = vunpack.c.h.b16 %v2002
      %v3191 = vunpack.c.l.b16 %v2003
      %v3192 = vunpack.c.h.b16 %v2003
      %v3193 = vunpack.c.l.b16 %v2004
      %v3194 = vunpack.c.h.b16 %v2004
      %v3195 = vunpack.c.l.b16 %v2005
      %v3196 = vunpack.c.h.b16 %v2005
      %v3197 = vunpack.c.l.b16 %v2006
      %v3198 = vunpack.c.h.b16 %v2006
      %v3199 = vunpack.c.l.b16 %v2007
      %v3200 = vunpack.c.h.b16 %v2007
      %v3201 = vunpack.c.l.b16 %v2008
      %v3202 = vunpack.c.h.b16 %v2008
      %v3203 = vunpack.c.l.b16 %v2009
      %v3204 = vunpack.c.h.b16 %v2009
      %v3205 = vunpack.c.l.b16 %v2010
      %v3206 = vunpack.c.h.b16 %v2010
      %v3207 = vunpack.c.l.b16 %v2011
      %v3208 = vunpack.c.h.b16 %v2011
      %v3209 = vunpack.c.l.b16 %v2012
      %v3210 = vunpack.c.h.b16 %v2012
      %v3211 = vunpack.c.l.b16 %v2013
      %v3212 = vunpack.c.h.b16 %v2013
      %v3213 = vunpack.c.l.b16 %v2014
      %v3214 = vunpack.c.h.b16 %v2014
      %v3215 = vunpack.c.l.b16 %v2015
      %v3216 = vunpack.c.h.b16 %v2015
      %v3217 = vunpack.c.l.b16 %v2016
      %v3218 = vunpack.c.h.b16 %v2016
      %v3219 = vunpack.c.l.b16 %v2017
      %v3220 = vunpack.c.h.b16 %v2017
      %v3221 = vunpack.c.l.b16 %v2018
      %v3222 = vunpack.c.h.b16 %v2018
      %v3223 = vunpack.c.l.b16 %v2019
      %v3224 = vunpack.c.h.b16 %v2019
      %v3225 = vunpack.c.l.b16 %v2020
      %v3226 = vunpack.c.h.b16 %v2020
      %v3227 = vunpack.c.l.b16 %v2021
      %v3228 = vunpack.c.h.b16 %v2021
      %v3229 = vunpack.c.l.b16 %v2022
      %v3230 = vunpack.c.h.b16 %v2022
      %v3231 = vunpack.c.l.b16 %v2023
      %v3232 = vunpack.c.h.b16 %v2023
      %v3233 = vunpack.c.l.b16 %v2024
      %v3234 = vunpack.c.h.b16 %v2024
      %v3235 = vunpack.c.l.b16 %v2025
      %v3236 = vunpack.c.h.b16 %v2025
      %v3237 = vunpack.c.l.b16 %v2026
      %v3238 = vunpack.c.h.b16 %v2026
      %v3239 = vunpack.c.l.b16 %v2027
      %v3240 = vunpack.c.h.b16 %v2027
      %v3241 = vunpack.c.l.b16 %v2028
      %v3242 = vunpack.c.h.b16 %v2028
      %v3243 = vunpack.c.l.b16 %v2029
      %v3244 = vunpack.c.h.b16 %v2029
      %v3245 = vunpack.c.l.b16 %v2030
      %v3246 = vunpack.c.h.b16 %v2030
      %v3247 = vunpack.c.l.b16 %v2031
      %v3248 = vunpack.c.h.b16 %v2031
      %v3249 = vunpack.c.l.b16 %v2032
      %v3250 = vunpack.c.h.b16 %v2032
      %v3251 = vunpack.c.l.b16 %v2033
      %v3252 = vunpack.c.h.b16 %v2033
      %v3253 = vunpack.c.l.b16 %v2034
      %v3254 = vunpack.c.h.b16 %v2034
      %v3255 = vunpack.c.l.b16 %v2035
      %v3256 = vunpack.c.h.b16 %v2035
      %v3257 = vunpack.c.l.b16 %v2036
      %v3258 = vunpack.c.h.b16 %v2036
      %v3259 = vunpack.c.l.b16 %v2037
      %v3260 = vunpack.c.h.b16 %v2037
      %v3261 = vunpack.c.l.b16 %v2038
      %v3262 = vunpack.c.h.b16 %v2038
      %v3263 = vpack.c.b16 %v2689, %v2687
      %v3264 = vpack.c.b16 %v2690, %v2688
      %v3265 = vpack.c.b16 %v2693, %v2691
      %v3266 = vpack.c.b16 %v2694, %v2692
      %v3267 = vpack.c.b16 %v2697, %v2695
      %v3268 = vpack.c.b16 %v2698, %v2696
      %v3269 = vpack.c.b16 %v2701, %v2699
      %v3270 = vpack.c.b16 %v2702, %v2700
      %v3271 = vpack.c.b16 %v2705, %v2703
      %v3272 = vpack.c.b16 %v2706, %v2704
      %v3273 = vpack.c.b16 %v2709, %v2707
      %v3274 = vpack.c.b16 %v2710, %v2708
      %v3275 = vpack.c.b16 %v2713, %v2711
      %v3276 = vpack.c.b16 %v2714, %v2712
      %v3277 = vpack.c.b16 %v2717, %v2715
      %v3278 = vpack.c.b16 %v2718, %v2716
      %v3279 = vpack.c.b16 %v2721, %v2719
      %v3280 = vpack.c.b16 %v2722, %v2720
      %v3281 = vpack.c.b16 %v2725, %v2723
      %v3282 = vpack.c.b16 %v2726, %v2724
      %v3283 = vpack.c.b16 %v2729, %v2727
      %v3284 = vpack.c.b16 %v2730, %v2728
      %v3285 = vpack.c.b16 %v2733, %v2731
      %v3286 = vpack.c.b16 %v2734, %v2732
      %v3287 = vpack.c.b16 %v2737, %v2735
      %v3288 = vpack.c.b16 %v2738, %v2736
      %v3289 = vpack.c.b16 %v2741, %v2739
      %v3290 = vpack.c.b16 %v2742, %v2740
      %v3291 = vpack.c.b16 %v2745, %v2743
      %v3292 = vpack.c.b16 %v2746, %v2744
      %v3293 = vpack.c.b16 %v2749, %v2747
      %v3294 = vpack.c.b16 %v2750, %v2748
      %v3295 = vpack.c.b16 %v2753, %v2751
      %v3296 = vpack.c.b16 %v2754, %v2752
      %v3297 = vpack.c.b16 %v2757, %v2755
      %v3298 = vpack.c.b16 %v2758, %v2756
      %v3299 = vpack.c.b16 %v2761, %v2759
      %v3300 = vpack.c.b16 %v2762, %v2760
      %v3301 = vpack.c.b16 %v2765, %v2763
      %v3302 = vpack.c.b16 %v2766, %v2764
      %v3303 = vpack.c.b16 %v2769, %v2767
      %v3304 = vpack.c.b16 %v2770, %v2768
      %v3305 = vpack.c.b16 %v2773, %v2771
      %v3306 = vpack.c.b16 %v2774, %v2772
      %v3307 = vpack.c.b16 %v2777, %v2775
      %v3308 = vpack.c.b16 %v2778, %v2776
      %v3309 = vpack.c.b16 %v2781, %v2779
      %v3310 = vpack.c.b16 %v2782, %v2780
      %v3311 = vpack.c.b16 %v2785, %v2783
      %v3312 = vpack.c.b16 %v2786, %v2784
      %v3313 = vpack.c.b16 %v2789, %v2787
      %v3314 = vpack.c.b16 %v2790, %v2788
      %v3315 = vpack.c.b16 %v2793, %v2791
      %v3316 = vpack.c.b16 %v2794, %v2792
      %v3317 = vpack.c.b16 %v2797, %v2795
      %v3318 = vpack.c.b16 %v2798, %v2796
      %v3319 = vpack.c.b16 %v2801, %v2799
      %v3320 = vpack.c.b16 %v2802, %v2800
      %v3321 = vpack.c.b16 %v2805, %v2803
      %v3322 = vpack.c.b16 %v2806, %v2804
      %v3323 = vpack.c.b16 %v2809, %v2807
      %v3324 = vpack.c.b16 %v2810, %v2808
      %v3325 = vpack.c.b16 %v2813, %v2811
      %v3326 = vpack.c.b16 %v2814, %v2812
      %v3327 = vpack.c.b16 %v2817, %v2815
      %v3328 = vpack.c.b16 %v2818, %v2816
      %v3329 = vpack.c.b16 %v2821, %v2819
      %v3330 = vpack.c.b16 %v2822, %v2820
      %v3331 = vpack.c.b16 %v2825, %v2823
      %v3332 = vpack.c.b16 %v2826, %v2824
      %v3333 = vpack.c.b16 %v2829, %v2827
      %v3334 = vpack.c.b16 %v2830, %v2828
      %v3335 = vpack.c.b16 %v2833, %v2831
      %v3336 = vpack.c.b16 %v2834, %v2832
      %v3337 = vpack.c.b16 %v2837, %v2835
      %v3338 = vpack.c.b16 %v2838, %v2836
      %v3339 = vpack.c.b16 %v2841, %v2839
      %v3340 = vpack.c.b16 %v2842, %v2840
      %v3341 = vpack.c.b16 %v2845, %v2843
      %v3342 = vpack.c.b16 %v2846, %v2844
      %v3343 = vpack.c.b16 %v2849, %v2847
      %v3344 = vpack.c.b16 %v2850, %v2848
      %v3345 = vpack.c.b16 %v2853, %v2851
      %v3346 = vpack.c.b16 %v2854, %v2852
      %v3347 = vpack.c.b16 %v2857, %v2855
      %v3348 = vpack.c.b16 %v2858, %v2856
      %v3349 = vpack.c.b16 %v2861, %v2859
      %v3350 = vpack.c.b16 %v2862, %v2860
      %v3351 = vpack.c.b16 %v2865, %v2863
      %v3352 = vpack.c.b16 %v2866, %v2864
      %v3353 = vpack.c.b16 %v2869, %v2867
      %v3354 = vpack.c.b16 %v2870, %v2868
      %v3355 = vpack.c.b16 %v2873, %v2871
      %v3356 = vpack.c.b16 %v2874, %v2872
      %v3357 = vpack.c.b16 %v2877, %v2875
      %v3358 = vpack.c.b16 %v2878, %v2876
      %v3359 = vpack.c.b16 %v2881, %v2879
      %v3360 = vpack.c.b16 %v2882, %v2880
      %v3361 = vpack.c.b16 %v2885, %v2883
      %v3362 = vpack.c.b16 %v2886, %v2884
      %v3363 = vpack.c.b16 %v2889, %v2887
      %v3364 = vpack.c.b16 %v2890, %v2888
      %v3365 = vpack.c.b16 %v2893, %v2891
      %v3366 = vpack.c.b16 %v2894, %v2892
      %v3367 = vpack.c.b16 %v2897, %v2895
      %v3368 = vpack.c.b16 %v2898, %v2896
      %v3369 = vpack.c.b16 %v2901, %v2899
      %v3370 = vpack.c.b16 %v2902, %v2900
      %v3371 = vpack.c.b16 %v2905, %v2903
      %v3372 = vpack.c.b16 %v2906, %v2904
      %v3373 = vpack.c.b16 %v2909, %v2907
      %v3374 = vpack.c.b16 %v2910, %v2908
      %v3375 = vpack.c.b16 %v2913, %v2911
      %v3376 = vpack.c.b16 %v2914, %v2912
      %v3377 = vpack.c.b16 %v2917, %v2915
      %v3378 = vpack.c.b16 %v2918, %v2916
      %v3379 = vpack.c.b16 %v2921, %v2919
      %v3380 = vpack.c.b16 %v2922, %v2920
      %v3381 = vpack.c.b16 %v2925, %v2923
      %v3382 = vpack.c.b16 %v2926, %v2924
      %v3383 = vpack.c.b16 %v2929, %v2927
      %v3384 = vpack.c.b16 %v2930, %v2928
      %v3385 = vpack.c.b16 %v2933, %v2931
      %v3386 = vpack.c.b16 %v2934, %v2932
      %v3387 = vpack.c.b16 %v2937, %v2935
      %v3388 = vpack.c.b16 %v2938, %v2936
      %v3389 = vpack.c.b16 %v2941, %v2939
      %v3390 = vpack.c.b16 %v2942, %v2940
      %v3391 = vpack.c.b16 %v2945, %v2943
      %v3392 = vpack.c.b16 %v2946, %v2944
      %v3393 = vpack.c.b16 %v2949, %v2947
      %v3394 = vpack.c.b16 %v2950, %v2948
      %v3395 = vpack.c.b16 %v2953, %v2951
      %v3396 = vpack.c.b16 %v2954, %v2952
      %v3397 = vpack.c.b16 %v2957, %v2955
      %v3398 = vpack.c.b16 %v2958, %v2956
      %v3399 = vpack.c.b16 %v2961, %v2959
      %v3400 = vpack.c.b16 %v2962, %v2960
      %v3401 = vpack.c.b16 %v2965, %v2963
      %v3402 = vpack.c.b16 %v2966, %v2964
      %v3403 = vpack.c.b16 %v2969, %v2967
      %v3404 = vpack.c.b16 %v2970, %v2968
      %v3405 = vpack.c.b16 %v2973, %v2971
      %v3406 = vpack.c.b16 %v2974, %v2972
      %v3407 = vpack.c.b16 %v2977, %v2975
      %v3408 = vpack.c.b16 %v2978, %v2976
      %v3409 = vpack.c.b16 %v2981, %v2979
      %v3410 = vpack.c.b16 %v2982, %v2980
      %v3411 = vpack.c.b16 %v2985, %v2983
      %v3412 = vpack.c.b16 %v2986, %v2984
      %v3413 = vpack.c.b16 %v2989, %v2987
      %v3414 = vpack.c.b16 %v2990, %v2988
      %v3415 = vpack.c.b16 %v2993, %v2991
      %v3416 = vpack.c.b16 %v2994, %v2992
      %v3417 = vpack.c.b16 %v2997, %v2995
      %v3418 = vpack.c.b16 %v2998, %v2996
      %v3419 = vpack.c.b16 %v3001, %v2999
      %v3420 = vpack.c.b16 %v3002, %v3000
      %v3421 = vpack.c.b16 %v3005, %v3003
      %v3422 = vpack.c.b16 %v3006, %v3004
      %v3423 = vpack.c.b16 %v3009, %v3007
      %v3424 = vpack.c.b16 %v3010, %v3008
      %v3425 = vpack.c.b16 %v3013, %v3011
      %v3426 = vpack.c.b16 %v3014, %v3012
      %v3427 = vpack.c.b16 %v3017, %v3015
      %v3428 = vpack.c.b16 %v3018, %v3016
      %v3429 = vpack.c.b16 %v3021, %v3019
      %v3430 = vpack.c.b16 %v3022, %v3020
      %v3431 = vpack.c.b16 %v3025, %v3023
      %v3432 = vpack.c.b16 %v3026, %v3024
      %v3433 = vpack.c.b16 %v3029, %v3027
      %v3434 = vpack.c.b16 %v3030, %v3028
      %v3435 = vpack.c.b16 %v3033, %v3031
      %v3436 = vpack.c.b16 %v3034, %v3032
      %v3437 = vpack.c.b16 %v3037, %v3035
      %v3438 = vpack.c.b16 %v3038, %v3036
      %v3439 = vpack.c.b16 %v3041, %v3039
      %v3440 = vpack.c.b16 %v3042, %v3040
      %v3441 = vpack.c.b16 %v3045, %v3043
      %v3442 = vpack.c.b16 %v3046, %v3044
      %v3443 = vpack.c.b16 %v3049, %v3047
      %v3444 = vpack.c.b16 %v3050, %v3048
      %v3445 = vpack.c.b16 %v3053, %v3051
      %v3446 = vpack.c.b16 %v3054, %v3052
      %v3447 = vpack.c.b16 %v3057, %v3055
      %v3448 = vpack.c.b16 %v3058, %v3056
      %v3449 = vpack.c.b16 %v3061, %v3059
      %v3450 = vpack.c.b16 %v3062, %v3060
      %v3451 = vpack.c.b16 %v3065, %v3063
      %v3452 = vpack.c.b16 %v3066, %v3064
      %v3453 = vpack.c.b16 %v3069, %v3067
      %v3454 = vpack.c.b16 %v3070, %v3068
      %v3455 = vpack.c.b16 %v3073, %v3071
      %v3456 = vpack.c.b16 %v3074, %v3072
      %v3457 = vpack.c.b16 %v3077, %v3075
      %v3458 = vpack.c.b16 %v3078, %v3076
      %v3459 = vpack.c.b16 %v3081, %v3079
      %v3460 = vpack.c.b16 %v3082, %v3080
      %v3461 = vpack.c.b16 %v3085, %v3083
      %v3462 = vpack.c.b16 %v3086, %v3084
      %v3463 = vpack.c.b16 %v3089, %v3087
      %v3464 = vpack.c.b16 %v3090, %v3088
      %v3465 = vpack.c.b16 %v3093, %v3091
      %v3466 = vpack.c.b16 %v3094, %v3092
      %v3467 = vpack.c.b16 %v3097, %v3095
      %v3468 = vpack.c.b16 %v3098, %v3096
      %v3469 = vpack.c.b16 %v3101, %v3099
      %v3470 = vpack.c.b16 %v3102, %v3100
      %v3471 = vpack.c.b16 %v3105, %v3103
      %v3472 = vpack.c.b16 %v3106, %v3104
      %v3473 = vpack.c.b16 %v3109, %v3107
      %v3474 = vpack.c.b16 %v3110, %v3108
      %v3475 = vpack.c.b16 %v3113, %v3111
      %v3476 = vpack.c.b16 %v3114, %v3112
      %v3477 = vpack.c.b16 %v3117, %v3115
      %v3478 = vpack.c.b16 %v3118, %v3116
      %v3479 = vpack.c.b16 %v3121, %v3119
      %v3480 = vpack.c.b16 %v3122, %v3120
      %v3481 = vpack.c.b16 %v3125, %v3123
      %v3482 = vpack.c.b16 %v3126, %v3124
      %v3483 = vpack.c.b16 %v3129, %v3127
      %v3484 = vpack.c.b16 %v3130, %v3128
      %v3485 = vpack.c.b16 %v3133, %v3131
      %v3486 = vpack.c.b16 %v3134, %v3132
      %v3487 = vpack.c.b16 %v3137, %v3135
      %v3488 = vpack.c.b16 %v3138, %v3136
      %v3489 = vpack.c.b16 %v3141, %v3139
      %v3490 = vpack.c.b16 %v3142, %v3140
      %v3491 = vpack.c.b16 %v3145, %v3143
      %v3492 = vpack.c.b16 %v3146, %v3144
      %v3493 = vpack.c.b16 %v3149, %v3147
      %v3494 = vpack.c.b16 %v3150, %v3148
      %v3495 = vpack.c.b16 %v3153, %v3151
      %v3496 = vpack.c.b16 %v3154, %v3152
      %v3497 = vpack.c.b16 %v3157, %v3155
      %v3498 = vpack.c.b16 %v3158, %v3156
      %v3499 = vpack.c.b16 %v3161, %v3159
      %v3500 = vpack.c.b16 %v3162, %v3160
      %v3501 = vpack.c.b16 %v3165, %v3163
      %v3502 = vpack.c.b16 %v3166, %v3164
      %v3503 = vpack.c.b16 %v3169, %v3167
      %v3504 = vpack.c.b16 %v3170, %v3168
      %v3505 = vpack.c.b16 %v3173, %v3171
      %v3506 = vpack.c.b16 %v3174, %v3172
      %v3507 = vpack.c.b16 %v3177, %v3175
      %v3508 = vpack.c.b16 %v3178, %v3176
      %v3509 = vpack.c.b16 %v3181, %v3179
      %v3510 = vpack.c.b16 %v3182, %v3180
      %v3511 = vpack.c.b16 %v3185, %v3183
      %v3512 = vpack.c.b16 %v3186, %v3184
      %v3513 = vpack.c.b16 %v3189, %v3187
      %v3514 = vpack.c.b16 %v3190, %v3188
      %v3515 = vpack.c.b16 %v3193, %v3191
      %v3516 = vpack.c.b16 %v3194, %v3192
      %v3517 = vpack.c.b16 %v3197, %v3195
      %v3518 = vpack.c.b16 %v3198, %v3196
      %v3519 = vpack.c.b16 %v3201, %v3199
      %v3520 = vpack.c.b16 %v3202, %v3200
      %v3521 = vpack.c.b16 %v3205, %v3203
      %v3522 = vpack.c.b16 %v3206, %v3204
      %v3523 = vpack.c.b16 %v3209, %v3207
      %v3524 = vpack.c.b16 %v3210, %v3208
      %v3525 = vpack.c.b16 %v3213, %v3211
      %v3526 = vpack.c.b16 %v3214, %v3212
      %v3527 = vpack.c.b16 %v3217, %v3215
      %v3528 = vpack.c.b16 %v3218, %v3216
      %v3529 = vpack.c.b16 %v3221, %v3219
      %v3530 = vpack.c.b16 %v3222, %v3220
      %v3531 = vpack.c.b16 %v3225, %v3223
      %v3532 = vpack.c.b16 %v3226, %v3224
      %v3533 = vpack.c.b16 %v3229, %v3227
      %v3534 = vpack.c.b16 %v3230, %v3228
      %v3535 = vpack.c.b16 %v3233, %v3231
      %v3536 = vpack.c.b16 %v3234, %v3232
      %v3537 = vpack.c.b16 %v3237, %v3235
      %v3538 = vpack.c.b16 %v3238, %v3236
      %v3539 = vpack.c.b16 %v3241, %v3239
      %v3540 = vpack.c.b16 %v3242, %v3240
      %v3541 = vpack.c.b16 %v3245, %v3243
      %v3542 = vpack.c.b16 %v3246, %v3244
      %v3543 = vpack.c.b16 %v3249, %v3247
      %v3544 = vpack.c.b16 %v3250, %v3248
      %v3545 = vpack.c.b16 %v3253, %v3251
      %v3546 = vpack.c.b16 %v3254, %v3252
      %v3547 = vpack.c.b16 %v3257, %v3255
      %v3548 = vpack.c.b16 %v3258, %v3256
      %v3549 = vpack.c.b16 %v3261, %v3259
      %v3550 = vpack.c.b16 %v3262, %v3260
      %3839 = vmatprep.subr.bf16.mxu0 %v3278
      %3840 = vmatpush1.bf16.msra.mxu0 %v3277
      %3841 = vmatprep.subr.bf16.mxu0 %v3276
      %3842 = vmatpush1.bf16.msra.mxu0 %v3275
      %3843 = vmatprep.subr.bf16.mxu0 %v3274
      %3844 = vmatpush1.bf16.msra.mxu0 %v3273
      %3845 = vmatprep.subr.bf16.mxu0 %v3272
      %3846 = vmatpush1.bf16.msra.mxu0 %v3271
      %3847 = vmatprep.subr.bf16.mxu0 %v3270
      %3848 = vmatpush1.bf16.msra.mxu0 %v3269
      %3849 = vmatprep.subr.bf16.mxu0 %v3268
      %3850 = vmatpush1.bf16.msra.mxu0 %v3267
      %3851 = vmatprep.subr.bf16.mxu0 %v3266
      %3852 = vmatpush1.bf16.msra.mxu0 %v3265
      %3853 = vmatprep.subr.bf16.mxu0 %v3264
      %3854 = vmatpush1.bf16.msra.mxu0 %v3263
      %3855 = vmatprep.subr.bf16.mxu0 %v3294
      %3856 = vmatpush2.bf16.msra.mxu0 %v3293
      %3857 = vmatprep.subr.bf16.mxu0 %v3292
      %3858 = vmatpush2.bf16.msra.mxu0 %v3291
      %3859 = vmatprep.subr.bf16.mxu0 %v3290
      %3860 = vmatpush2.bf16.msra.mxu0 %v3289
      %3861 = vmatprep.subr.bf16.mxu0 %v3288
      %3862 = vmatpush2.bf16.msra.mxu0 %v3287
      %3863 = vmatprep.subr.bf16.mxu0 %v3286
      %3864 = vmatpush2.bf16.msra.mxu0 %v3285
      %3865 = vmatprep.subr.bf16.mxu0 %v3284
      %3866 = vmatpush2.bf16.msra.mxu0 %v3283
      %3867 = vmatprep.subr.bf16.mxu0 %v3282
      %3868 = vmatpush2.bf16.msra.mxu0 %v3281
      %3869 = vmatprep.subr.bf16.mxu0 %v3280
      %3870 = vmatpush2.bf16.msra.mxu0 %v3279
      %3871 = vmatprep.mubr.bf16.mxu0 %v2256
      %3872 = vmatmul.mubr.bf16.gmra.mxu0 %v2255
      %v3873 = vpop.f32.mrf.mxu0
      %v3874 = vadd.f32 0.0, %v3873
      %v3875 = vpop.f32.mrf.mxu0
      %v3876 = vadd.f32 0.0, %v3875
      %v3877 = vpop.f32.mrf.mxu0
      %v3878 = vadd.f32 0.0, %v3877
      %v3879 = vpop.f32.mrf.mxu0
      %v3880 = vadd.f32 0.0, %v3879
      %3881 = vmatprep.mubr.bf16.mxu0 %v2274
      %3882 = vmatmul.mubr.bf16.gmra.mxu0 %v2273
      %v3883 = vpop.f32.mrf.mxu0
      %v3884 = vadd.f32 0.0, %v3883
      %v3885 = vpop.f32.mrf.mxu0
      %v3886 = vadd.f32 0.0, %v3885
      %v3887 = vpop.f32.mrf.mxu0
      %v3888 = vadd.f32 0.0, %v3887
      %v3889 = vpop.f32.mrf.mxu0
      %v3890 = vadd.f32 0.0, %v3889
      %3891 = vmatprep.mubr.bf16.mxu0 %v2292
      %3892 = vmatmul.mubr.bf16.gmra.mxu0 %v2291
      %v3893 = vpop.f32.mrf.mxu0
      %v3894 = vadd.f32 0.0, %v3893
      %v3895 = vpop.f32.mrf.mxu0
      %v3896 = vadd.f32 0.0, %v3895
      %v3897 = vpop.f32.mrf.mxu0
      %v3898 = vadd.f32 0.0, %v3897
      %v3899 = vpop.f32.mrf.mxu0
      %v3900 = vadd.f32 0.0, %v3899
      %3901 = vmatprep.mubr.bf16.mxu0 %v2310
      %3902 = vmatmul.mubr.bf16.gmra.mxu0 %v2309
      %v3903 = vpop.f32.mrf.mxu0
      %v3904 = vadd.f32 0.0, %v3903
      %v3905 = vpop.f32.mrf.mxu0
      %v3906 = vadd.f32 0.0, %v3905
      %v3907 = vpop.f32.mrf.mxu0
      %v3908 = vadd.f32 0.0, %v3907
      %v3909 = vpop.f32.mrf.mxu0
      %v3910 = vadd.f32 0.0, %v3909
      %3911 = vdwg.mxu0
      %3912 = vmatprep.subr.bf16.mxu0 %v3310
      %3913 = vmatpush1.bf16.msra.mxu0 %v3309
      %3914 = vmatprep.subr.bf16.mxu0 %v3308
      %3915 = vmatpush1.bf16.msra.mxu0 %v3307
      %3916 = vmatprep.subr.bf16.mxu0 %v3306
      %3917 = vmatpush1.bf16.msra.mxu0 %v3305
      %3918 = vmatprep.subr.bf16.mxu0 %v3304
      %3919 = vmatpush1.bf16.msra.mxu0 %v3303
      %3920 = vmatprep.subr.bf16.mxu0 %v3302
      %3921 = vmatpush1.bf16.msra.mxu0 %v3301
      %3922 = vmatprep.subr.bf16.mxu0 %v3300
      %3923 = vmatpush1.bf16.msra.mxu0 %v3299
      %3924 = vmatprep.subr.bf16.mxu0 %v3298
      %3925 = vmatpush1.bf16.msra.mxu0 %v3297
      %3926 = vmatprep.subr.bf16.mxu0 %v3296
      %3927 = vmatpush1.bf16.msra.mxu0 %v3295
      %3928 = vmatprep.subr.bf16.mxu0 %v3326
      %3929 = vmatpush2.bf16.msra.mxu0 %v3325
      %3930 = vmatprep.subr.bf16.mxu0 %v3324
      %3931 = vmatpush2.bf16.msra.mxu0 %v3323
      %3932 = vmatprep.subr.bf16.mxu0 %v3322
      %3933 = vmatpush2.bf16.msra.mxu0 %v3321
      %3934 = vmatprep.subr.bf16.mxu0 %v3320
      %3935 = vmatpush2.bf16.msra.mxu0 %v3319
      %3936 = vmatprep.subr.bf16.mxu0 %v3318
      %3937 = vmatpush2.bf16.msra.mxu0 %v3317
      %3938 = vmatprep.subr.bf16.mxu0 %v3316
      %3939 = vmatpush2.bf16.msra.mxu0 %v3315
      %3940 = vmatprep.subr.bf16.mxu0 %v3314
      %3941 = vmatpush2.bf16.msra.mxu0 %v3313
      %3942 = vmatprep.subr.bf16.mxu0 %v3312
      %3943 = vmatpush2.bf16.msra.mxu0 %v3311
      %3944 = vmatprep.mubr.bf16.mxu0 %v2258
      %3945 = vmatmul.mubr.bf16.gmra.mxu0 %v2257
      %v3946 = vpop.f32.mrf.mxu0
      %v3947 = vadd.f32 %v3874, %v3946
      %v3948 = vpop.f32.mrf.mxu0
      %v3949 = vadd.f32 %v3876, %v3948
      %v3950 = vpop.f32.mrf.mxu0
      %v3951 = vadd.f32 %v3878, %v3950
      %v3952 = vpop.f32.mrf.mxu0
      %v3953 = vadd.f32 %v3880, %v3952
      %3954 = vmatprep.mubr.bf16.mxu0 %v2276
      %3955 = vmatmul.mubr.bf16.gmra.mxu0 %v2275
      %v3956 = vpop.f32.mrf.mxu0
      %v3957 = vadd.f32 %v3884, %v3956
      %v3958 = vpop.f32.mrf.mxu0
      %v3959 = vadd.f32 %v3886, %v3958
      %v3960 = vpop.f32.mrf.mxu0
      %v3961 = vadd.f32 %v3888, %v3960
      %v3962 = vpop.f32.mrf.mxu0
      %v3963 = vadd.f32 %v3890, %v3962
      %3964 = vmatprep.mubr.bf16.mxu0 %v2294
      %3965 = vmatmul.mubr.bf16.gmra.mxu0 %v2293
      %v3966 = vpop.f32.mrf.mxu0
      %v3967 = vadd.f32 %v3894, %v3966
      %v3968 = vpop.f32.mrf.mxu0
      %v3969 = vadd.f32 %v3896, %v3968
      %v3970 = vpop.f32.mrf.mxu0
      %v3971 = vadd.f32 %v3898, %v3970
      %v3972 = vpop.f32.mrf.mxu0
      %v3973 = vadd.f32 %v3900, %v3972
      %3974 = vmatprep.mubr.bf16.mxu0 %v2312
      %3975 = vmatmul.mubr.bf16.gmra.mxu0 %v2311
      %v3976 = vpop.f32.mrf.mxu0
      %v3977 = vadd.f32 %v3904, %v3976
      %v3978 = vpop.f32.mrf.mxu0
      %v3979 = vadd.f32 %v3906, %v3978
      %v3980 = vpop.f32.mrf.mxu0
      %v3981 = vadd.f32 %v3908, %v3980
      %v3982 = vpop.f32.mrf.mxu0
      %v3983 = vadd.f32 %v3910, %v3982
      %3984 = vdwg.mxu0
      %3985 = vmatprep.subr.bf16.mxu0 %v3342
      %3986 = vmatpush1.bf16.msra.mxu0 %v3341
      %3987 = vmatprep.subr.bf16.mxu0 %v3340
      %3988 = vmatpush1.bf16.msra.mxu0 %v3339
      %3989 = vmatprep.subr.bf16.mxu0 %v3338
      %3990 = vmatpush1.bf16.msra.mxu0 %v3337
      %3991 = vmatprep.subr.bf16.mxu0 %v3336
      %3992 = vmatpush1.bf16.msra.mxu0 %v3335
      %3993 = vmatprep.subr.bf16.mxu0 %v3334
      %3994 = vmatpush1.bf16.msra.mxu0 %v3333
      %3995 = vmatprep.subr.bf16.mxu0 %v3332
      %3996 = vmatpush1.bf16.msra.mxu0 %v3331
      %3997 = vmatprep.subr.bf16.mxu0 %v3330
      %3998 = vmatpush1.bf16.msra.mxu0 %v3329
      %3999 = vmatprep.subr.bf16.mxu0 %v3328
      %4000 = vmatpush1.bf16.msra.mxu0 %v3327
      %4001 = vmatprep.subr.bf16.mxu0 %v3358
      %4002 = vmatpush2.bf16.msra.mxu0 %v3357
      %4003 = vmatprep.subr.bf16.mxu0 %v3356
      %4004 = vmatpush2.bf16.msra.mxu0 %v3355
      %4005 = vmatprep.subr.bf16.mxu0 %v3354
      %4006 = vmatpush2.bf16.msra.mxu0 %v3353
      %4007 = vmatprep.subr.bf16.mxu0 %v3352
      %4008 = vmatpush2.bf16.msra.mxu0 %v3351
      %4009 = vmatprep.subr.bf16.mxu0 %v3350
      %4010 = vmatpush2.bf16.msra.mxu0 %v3349
      %4011 = vmatprep.subr.bf16.mxu0 %v3348
      %4012 = vmatpush2.bf16.msra.mxu0 %v3347
      %4013 = vmatprep.subr.bf16.mxu0 %v3346
      %4014 = vmatpush2.bf16.msra.mxu0 %v3345
      %4015 = vmatprep.subr.bf16.mxu0 %v3344
      %4016 = vmatpush2.bf16.msra.mxu0 %v3343
      %4017 = vmatprep.mubr.bf16.mxu0 %v2260
      %4018 = vmatmul.mubr.bf16.gmra.mxu0 %v2259
      %v4019 = vpop.f32.mrf.mxu0
      %v4020 = vadd.f32 %v3947, %v4019
      %v4021 = vpop.f32.mrf.mxu0
      %v4022 = vadd.f32 %v3949, %v4021
      %v4023 = vpop.f32.mrf.mxu0
      %v4024 = vadd.f32 %v3951, %v4023
      %v4025 = vpop.f32.mrf.mxu0
      %v4026 = vadd.f32 %v3953, %v4025
      %4027 = vmatprep.mubr.bf16.mxu0 %v2278
      %4028 = vmatmul.mubr.bf16.gmra.mxu0 %v2277
      %v4029 = vpop.f32.mrf.mxu0
      %v4030 = vadd.f32 %v3957, %v4029
      %v4031 = vpop.f32.mrf.mxu0
      %v4032 = vadd.f32 %v3959, %v4031
      %v4033 = vpop.f32.mrf.mxu0
      %v4034 = vadd.f32 %v3961, %v4033
      %v4035 = vpop.f32.mrf.mxu0
      %v4036 = vadd.f32 %v3963, %v4035
      %4037 = vmatprep.mubr.bf16.mxu0 %v2296
      %4038 = vmatmul.mubr.bf16.gmra.mxu0 %v2295
      %v4039 = vpop.f32.mrf.mxu0
      %v4040 = vadd.f32 %v3967, %v4039
      %v4041 = vpop.f32.mrf.mxu0
      %v4042 = vadd.f32 %v3969, %v4041
      %v4043 = vpop.f32.mrf.mxu0
      %v4044 = vadd.f32 %v3971, %v4043
      %v4045 = vpop.f32.mrf.mxu0
      %v4046 = vadd.f32 %v3973, %v4045
      %4047 = vmatprep.mubr.bf16.mxu0 %v2314
      %4048 = vmatmul.mubr.bf16.gmra.mxu0 %v2313
      %v4049 = vpop.f32.mrf.mxu0
      %v4050 = vadd.f32 %v3977, %v4049
      %v4051 = vpop.f32.mrf.mxu0
      %v4052 = vadd.f32 %v3979, %v4051
      %v4053 = vpop.f32.mrf.mxu0
      %v4054 = vadd.f32 %v3981, %v4053
      %v4055 = vpop.f32.mrf.mxu0
      %v4056 = vadd.f32 %v3983, %v4055
      %4057 = vdwg.mxu0
      %4058 = vmatprep.subr.bf16.mxu0 %v3374
      %4059 = vmatpush1.bf16.msra.mxu0 %v3373
      %4060 = vmatprep.subr.bf16.mxu0 %v3372
      %4061 = vmatpush1.bf16.msra.mxu0 %v3371
      %4062 = vmatprep.subr.bf16.mxu0 %v3370
      %4063 = vmatpush1.bf16.msra.mxu0 %v3369
      %4064 = vmatprep.subr.bf16.mxu0 %v3368
      %4065 = vmatpush1.bf16.msra.mxu0 %v3367
      %4066 = vmatprep.subr.bf16.mxu0 %v3366
      %4067 = vmatpush1.bf16.msra.mxu0 %v3365
      %4068 = vmatprep.subr.bf16.mxu0 %v3364
      %4069 = vmatpush1.bf16.msra.mxu0 %v3363
      %4070 = vmatprep.subr.bf16.mxu0 %v3362
      %4071 = vmatpush1.bf16.msra.mxu0 %v3361
      %4072 = vmatprep.subr.bf16.mxu0 %v3360
      %4073 = vmatpush1.bf16.msra.mxu0 %v3359
      %4074 = vmatprep.subr.bf16.mxu0 %v3390
      %4075 = vmatpush2.bf16.msra.mxu0 %v3389
      %4076 = vmatprep.subr.bf16.mxu0 %v3388
      %4077 = vmatpush2.bf16.msra.mxu0 %v3387
      %4078 = vmatprep.subr.bf16.mxu0 %v3386
      %4079 = vmatpush2.bf16.msra.mxu0 %v3385
      %4080 = vmatprep.subr.bf16.mxu0 %v3384
      %4081 = vmatpush2.bf16.msra.mxu0 %v3383
      %4082 = vmatprep.subr.bf16.mxu0 %v3382
      %4083 = vmatpush2.bf16.msra.mxu0 %v3381
      %4084 = vmatprep.subr.bf16.mxu0 %v3380
      %4085 = vmatpush2.bf16.msra.mxu0 %v3379
      %4086 = vmatprep.subr.bf16.mxu0 %v3378
      %4087 = vmatpush2.bf16.msra.mxu0 %v3377
      %4088 = vmatprep.subr.bf16.mxu0 %v3376
      %4089 = vmatpush2.bf16.msra.mxu0 %v3375
      %4090 = vmatprep.mubr.bf16.mxu0 %v2262
      %4091 = vmatmul.mubr.bf16.gmra.mxu0 %v2261
      %v4092 = vpop.f32.mrf.mxu0
      %v4093 = vadd.f32 %v4020, %v4092
      %v4094 = vpop.f32.mrf.mxu0
      %v4095 = vadd.f32 %v4022, %v4094
      %v4096 = vpop.f32.mrf.mxu0
      %v4097 = vadd.f32 %v4024, %v4096
      %v4098 = vpop.f32.mrf.mxu0
      %v4099 = vadd.f32 %v4026, %v4098
      %4100 = vmatprep.mubr.bf16.mxu0 %v2280
      %4101 = vmatmul.mubr.bf16.gmra.mxu0 %v2279
      %v4102 = vpop.f32.mrf.mxu0
      %v4103 = vadd.f32 %v4030, %v4102
      %v4104 = vpop.f32.mrf.mxu0
      %v4105 = vadd.f32 %v4032, %v4104
      %v4106 = vpop.f32.mrf.mxu0
      %v4107 = vadd.f32 %v4034, %v4106
      %v4108 = vpop.f32.mrf.mxu0
      %v4109 = vadd.f32 %v4036, %v4108
      %4110 = vmatprep.mubr.bf16.mxu0 %v2298
      %4111 = vmatmul.mubr.bf16.gmra.mxu0 %v2297
      %v4112 = vpop.f32.mrf.mxu0
      %v4113 = vadd.f32 %v4040, %v4112
      %v4114 = vpop.f32.mrf.mxu0
      %v4115 = vadd.f32 %v4042, %v4114
      %v4116 = vpop.f32.mrf.mxu0
      %v4117 = vadd.f32 %v4044, %v4116
      %v4118 = vpop.f32.mrf.mxu0
      %v4119 = vadd.f32 %v4046, %v4118
      %4120 = vmatprep.mubr.bf16.mxu0 %v2316
      %4121 = vmatmul.mubr.bf16.gmra.mxu0 %v2315
      %v4122 = vpop.f32.mrf.mxu0
      %v4123 = vadd.f32 %v4050, %v4122
      %v4124 = vpop.f32.mrf.mxu0
      %v4125 = vadd.f32 %v4052, %v4124
      %v4126 = vpop.f32.mrf.mxu0
      %v4127 = vadd.f32 %v4054, %v4126
      %v4128 = vpop.f32.mrf.mxu0
      %v4129 = vadd.f32 %v4056, %v4128
      %4130 = vdwg.mxu0
      %4131 = vmatprep.subr.bf16.mxu0 %v3406
      %4132 = vmatpush1.bf16.msra.mxu0 %v3405
      %4133 = vmatprep.subr.bf16.mxu0 %v3404
      %4134 = vmatpush1.bf16.msra.mxu0 %v3403
      %4135 = vmatprep.subr.bf16.mxu0 %v3402
      %4136 = vmatpush1.bf16.msra.mxu0 %v3401
      %4137 = vmatprep.subr.bf16.mxu0 %v3400
      %4138 = vmatpush1.bf16.msra.mxu0 %v3399
      %4139 = vmatprep.subr.bf16.mxu0 %v3398
      %4140 = vmatpush1.bf16.msra.mxu0 %v3397
      %4141 = vmatprep.subr.bf16.mxu0 %v3396
      %4142 = vmatpush1.bf16.msra.mxu0 %v3395
      %4143 = vmatprep.subr.bf16.mxu0 %v3394
      %4144 = vmatpush1.bf16.msra.mxu0 %v3393
      %4145 = vmatprep.subr.bf16.mxu0 %v3392
      %4146 = vmatpush1.bf16.msra.mxu0 %v3391
      %4147 = vmatprep.subr.bf16.mxu0 %v3422
      %4148 = vmatpush2.bf16.msra.mxu0 %v3421
      %4149 = vmatprep.subr.bf16.mxu0 %v3420
      %4150 = vmatpush2.bf16.msra.mxu0 %v3419
      %4151 = vmatprep.subr.bf16.mxu0 %v3418
      %4152 = vmatpush2.bf16.msra.mxu0 %v3417
      %4153 = vmatprep.subr.bf16.mxu0 %v3416
      %4154 = vmatpush2.bf16.msra.mxu0 %v3415
      %4155 = vmatprep.subr.bf16.mxu0 %v3414
      %4156 = vmatpush2.bf16.msra.mxu0 %v3413
      %4157 = vmatprep.subr.bf16.mxu0 %v3412
      %4158 = vmatpush2.bf16.msra.mxu0 %v3411
      %4159 = vmatprep.subr.bf16.mxu0 %v3410
      %4160 = vmatpush2.bf16.msra.mxu0 %v3409
      %4161 = vmatprep.subr.bf16.mxu0 %v3408
      %4162 = vmatpush2.bf16.msra.mxu0 %v3407
      %4163 = vmatprep.mubr.bf16.mxu0 %v2264
      %4164 = vmatmul.mubr.bf16.gmra.mxu0 %v2263
      %v4165 = vpop.f32.mrf.mxu0
      %v4166 = vadd.f32 %v4093, %v4165
      %v4167 = vpop.f32.mrf.mxu0
      %v4168 = vadd.f32 %v4095, %v4167
      %v4169 = vpop.f32.mrf.mxu0
      %v4170 = vadd.f32 %v4097, %v4169
      %v4171 = vpop.f32.mrf.mxu0
      %v4172 = vadd.f32 %v4099, %v4171
      %4173 = vmatprep.mubr.bf16.mxu0 %v2282
      %4174 = vmatmul.mubr.bf16.gmra.mxu0 %v2281
      %v4175 = vpop.f32.mrf.mxu0
      %v4176 = vadd.f32 %v4103, %v4175
      %v4177 = vpop.f32.mrf.mxu0
      %v4178 = vadd.f32 %v4105, %v4177
      %v4179 = vpop.f32.mrf.mxu0
      %v4180 = vadd.f32 %v4107, %v4179
      %v4181 = vpop.f32.mrf.mxu0
      %v4182 = vadd.f32 %v4109, %v4181
      %4183 = vmatprep.mubr.bf16.mxu0 %v2300
      %4184 = vmatmul.mubr.bf16.gmra.mxu0 %v2299
      %v4185 = vpop.f32.mrf.mxu0
      %v4186 = vadd.f32 %v4113, %v4185
      %v4187 = vpop.f32.mrf.mxu0
      %v4188 = vadd.f32 %v4115, %v4187
      %v4189 = vpop.f32.mrf.mxu0
      %v4190 = vadd.f32 %v4117, %v4189
      %v4191 = vpop.f32.mrf.mxu0
      %v4192 = vadd.f32 %v4119, %v4191
      %4193 = vmatprep.mubr.bf16.mxu0 %v2318
      %4194 = vmatmul.mubr.bf16.gmra.mxu0 %v2317
      %v4195 = vpop.f32.mrf.mxu0
      %v4196 = vadd.f32 %v4123, %v4195
      %v4197 = vpop.f32.mrf.mxu0
      %v4198 = vadd.f32 %v4125, %v4197
      %v4199 = vpop.f32.mrf.mxu0
      %v4200 = vadd.f32 %v4127, %v4199
      %v4201 = vpop.f32.mrf.mxu0
      %v4202 = vadd.f32 %v4129, %v4201
      %4203 = vdwg.mxu0
      %4204 = vmatprep.subr.bf16.mxu0 %v3438
      %4205 = vmatpush1.bf16.msra.mxu0 %v3437
      %4206 = vmatprep.subr.bf16.mxu0 %v3436
      %4207 = vmatpush1.bf16.msra.mxu0 %v3435
      %4208 = vmatprep.subr.bf16.mxu0 %v3434
      %4209 = vmatpush1.bf16.msra.mxu0 %v3433
      %4210 = vmatprep.subr.bf16.mxu0 %v3432
      %4211 = vmatpush1.bf16.msra.mxu0 %v3431
      %4212 = vmatprep.subr.bf16.mxu0 %v3430
      %4213 = vmatpush1.bf16.msra.mxu0 %v3429
      %4214 = vmatprep.subr.bf16.mxu0 %v3428
      %4215 = vmatpush1.bf16.msra.mxu0 %v3427
      %4216 = vmatprep.subr.bf16.mxu0 %v3426
      %4217 = vmatpush1.bf16.msra.mxu0 %v3425
      %4218 = vmatprep.subr.bf16.mxu0 %v3424
      %4219 = vmatpush1.bf16.msra.mxu0 %v3423
      %4220 = vmatprep.subr.bf16.mxu0 %v3454
      %4221 = vmatpush2.bf16.msra.mxu0 %v3453
      %4222 = vmatprep.subr.bf16.mxu0 %v3452
      %4223 = vmatpush2.bf16.msra.mxu0 %v3451
      %4224 = vmatprep.subr.bf16.mxu0 %v3450
      %4225 = vmatpush2.bf16.msra.mxu0 %v3449
      %4226 = vmatprep.subr.bf16.mxu0 %v3448
      %4227 = vmatpush2.bf16.msra.mxu0 %v3447
      %4228 = vmatprep.subr.bf16.mxu0 %v3446
      %4229 = vmatpush2.bf16.msra.mxu0 %v3445
      %4230 = vmatprep.subr.bf16.mxu0 %v3444
      %4231 = vmatpush2.bf16.msra.mxu0 %v3443
      %4232 = vmatprep.subr.bf16.mxu0 %v3442
      %4233 = vmatpush2.bf16.msra.mxu0 %v3441
      %4234 = vmatprep.subr.bf16.mxu0 %v3440
      %4235 = vmatpush2.bf16.msra.mxu0 %v3439
      %4236 = vmatprep.mubr.bf16.mxu0 %v2266
      %4237 = vmatmul.mubr.bf16.gmra.mxu0 %v2265
      %v4238 = vpop.f32.mrf.mxu0
      %v4239 = vadd.f32 %v4166, %v4238
      %v4240 = vpop.f32.mrf.mxu0
      %v4241 = vadd.f32 %v4168, %v4240
      %v4242 = vpop.f32.mrf.mxu0
      %v4243 = vadd.f32 %v4170, %v4242
      %v4244 = vpop.f32.mrf.mxu0
      %v4245 = vadd.f32 %v4172, %v4244
      %4246 = vmatprep.mubr.bf16.mxu0 %v2284
      %4247 = vmatmul.mubr.bf16.gmra.mxu0 %v2283
      %v4248 = vpop.f32.mrf.mxu0
      %v4249 = vadd.f32 %v4176, %v4248
      %v4250 = vpop.f32.mrf.mxu0
      %v4251 = vadd.f32 %v4178, %v4250
      %v4252 = vpop.f32.mrf.mxu0
      %v4253 = vadd.f32 %v4180, %v4252
      %v4254 = vpop.f32.mrf.mxu0
      %v4255 = vadd.f32 %v4182, %v4254
      %4256 = vmatprep.mubr.bf16.mxu0 %v2302
      %4257 = vmatmul.mubr.bf16.gmra.mxu0 %v2301
      %v4258 = vpop.f32.mrf.mxu0
      %v4259 = vadd.f32 %v4186, %v4258
      %v4260 = vpop.f32.mrf.mxu0
      %v4261 = vadd.f32 %v4188, %v4260
      %v4262 = vpop.f32.mrf.mxu0
      %v4263 = vadd.f32 %v4190, %v4262
      %v4264 = vpop.f32.mrf.mxu0
      %v4265 = vadd.f32 %v4192, %v4264
      %4266 = vmatprep.mubr.bf16.mxu0 %v2320
      %4267 = vmatmul.mubr.bf16.gmra.mxu0 %v2319
      %v4268 = vpop.f32.mrf.mxu0
      %v4269 = vadd.f32 %v4196, %v4268
      %v4270 = vpop.f32.mrf.mxu0
      %v4271 = vadd.f32 %v4198, %v4270
      %v4272 = vpop.f32.mrf.mxu0
      %v4273 = vadd.f32 %v4200, %v4272
      %v4274 = vpop.f32.mrf.mxu0
      %v4275 = vadd.f32 %v4202, %v4274
      %4276 = vdwg.mxu0
      %4277 = vmatprep.subr.bf16.mxu0 %v3470
      %4278 = vmatpush1.bf16.msra.mxu0 %v3469
      %4279 = vmatprep.subr.bf16.mxu0 %v3468
      %4280 = vmatpush1.bf16.msra.mxu0 %v3467
      %4281 = vmatprep.subr.bf16.mxu0 %v3466
      %4282 = vmatpush1.bf16.msra.mxu0 %v3465
      %4283 = vmatprep.subr.bf16.mxu0 %v3464
      %4284 = vmatpush1.bf16.msra.mxu0 %v3463
      %4285 = vmatprep.subr.bf16.mxu0 %v3462
      %4286 = vmatpush1.bf16.msra.mxu0 %v3461
      %4287 = vmatprep.subr.bf16.mxu0 %v3460
      %4288 = vmatpush1.bf16.msra.mxu0 %v3459
      %4289 = vmatprep.subr.bf16.mxu0 %v3458
      %4290 = vmatpush1.bf16.msra.mxu0 %v3457
      %4291 = vmatprep.subr.bf16.mxu0 %v3456
      %4292 = vmatpush1.bf16.msra.mxu0 %v3455
      %4293 = vmatprep.subr.bf16.mxu0 %v3486
      %4294 = vmatpush2.bf16.msra.mxu0 %v3485
      %4295 = vmatprep.subr.bf16.mxu0 %v3484
      %4296 = vmatpush2.bf16.msra.mxu0 %v3483
      %4297 = vmatprep.subr.bf16.mxu0 %v3482
      %4298 = vmatpush2.bf16.msra.mxu0 %v3481
      %4299 = vmatprep.subr.bf16.mxu0 %v3480
      %4300 = vmatpush2.bf16.msra.mxu0 %v3479
      %4301 = vmatprep.subr.bf16.mxu0 %v3478
      %4302 = vmatpush2.bf16.msra.mxu0 %v3477
      %4303 = vmatprep.subr.bf16.mxu0 %v3476
      %4304 = vmatpush2.bf16.msra.mxu0 %v3475
      %4305 = vmatprep.subr.bf16.mxu0 %v3474
      %4306 = vmatpush2.bf16.msra.mxu0 %v3473
      %4307 = vmatprep.subr.bf16.mxu0 %v3472
      %4308 = vmatpush2.bf16.msra.mxu0 %v3471
      %4309 = vmatprep.mubr.bf16.mxu0 %v2268
      %4310 = vmatmul.mubr.bf16.gmra.mxu0 %v2267
      %v4311 = vpop.f32.mrf.mxu0
      %v4312 = vadd.f32 %v4239, %v4311
      %v4313 = vpop.f32.mrf.mxu0
      %v4314 = vadd.f32 %v4241, %v4313
      %v4315 = vpop.f32.mrf.mxu0
      %v4316 = vadd.f32 %v4243, %v4315
      %v4317 = vpop.f32.mrf.mxu0
      %v4318 = vadd.f32 %v4245, %v4317
      %4319 = vmatprep.mubr.bf16.mxu0 %v2286
      %4320 = vmatmul.mubr.bf16.gmra.mxu0 %v2285
      %v4321 = vpop.f32.mrf.mxu0
      %v4322 = vadd.f32 %v4249, %v4321
      %v4323 = vpop.f32.mrf.mxu0
      %v4324 = vadd.f32 %v4251, %v4323
      %v4325 = vpop.f32.mrf.mxu0
      %v4326 = vadd.f32 %v4253, %v4325
      %v4327 = vpop.f32.mrf.mxu0
      %v4328 = vadd.f32 %v4255, %v4327
      %4329 = vmatprep.mubr.bf16.mxu0 %v2304
      %4330 = vmatmul.mubr.bf16.gmra.mxu0 %v2303
      %v4331 = vpop.f32.mrf.mxu0
      %v4332 = vadd.f32 %v4259, %v4331
      %v4333 = vpop.f32.mrf.mxu0
      %v4334 = vadd.f32 %v4261, %v4333
      %v4335 = vpop.f32.mrf.mxu0
      %v4336 = vadd.f32 %v4263, %v4335
      %v4337 = vpop.f32.mrf.mxu0
      %v4338 = vadd.f32 %v4265, %v4337
      %4339 = vmatprep.mubr.bf16.mxu0 %v2322
      %4340 = vmatmul.mubr.bf16.gmra.mxu0 %v2321
      %v4341 = vpop.f32.mrf.mxu0
      %v4342 = vadd.f32 %v4269, %v4341
      %v4343 = vpop.f32.mrf.mxu0
      %v4344 = vadd.f32 %v4271, %v4343
      %v4345 = vpop.f32.mrf.mxu0
      %v4346 = vadd.f32 %v4273, %v4345
      %v4347 = vpop.f32.mrf.mxu0
      %v4348 = vadd.f32 %v4275, %v4347
      %4349 = vdwg.mxu0
      %4350 = vmatprep.subr.bf16.mxu0 %v3502
      %4351 = vmatpush1.bf16.msra.mxu0 %v3501
      %4352 = vmatprep.subr.bf16.mxu0 %v3500
      %4353 = vmatpush1.bf16.msra.mxu0 %v3499
      %4354 = vmatprep.subr.bf16.mxu0 %v3498
      %4355 = vmatpush1.bf16.msra.mxu0 %v3497
      %4356 = vmatprep.subr.bf16.mxu0 %v3496
      %4357 = vmatpush1.bf16.msra.mxu0 %v3495
      %4358 = vmatprep.subr.bf16.mxu0 %v3494
      %4359 = vmatpush1.bf16.msra.mxu0 %v3493
      %4360 = vmatprep.subr.bf16.mxu0 %v3492
      %4361 = vmatpush1.bf16.msra.mxu0 %v3491
      %4362 = vmatprep.subr.bf16.mxu0 %v3490
      %4363 = vmatpush1.bf16.msra.mxu0 %v3489
      %4364 = vmatprep.subr.bf16.mxu0 %v3488
      %4365 = vmatpush1.bf16.msra.mxu0 %v3487
      %4366 = vmatprep.subr.bf16.mxu0 %v3518
      %4367 = vmatpush2.bf16.msra.mxu0 %v3517
      %4368 = vmatprep.subr.bf16.mxu0 %v3516
      %4369 = vmatpush2.bf16.msra.mxu0 %v3515
      %4370 = vmatprep.subr.bf16.mxu0 %v3514
      %4371 = vmatpush2.bf16.msra.mxu0 %v3513
      %4372 = vmatprep.subr.bf16.mxu0 %v3512
      %4373 = vmatpush2.bf16.msra.mxu0 %v3511
      %4374 = vmatprep.subr.bf16.mxu0 %v3510
      %4375 = vmatpush2.bf16.msra.mxu0 %v3509
      %4376 = vmatprep.subr.bf16.mxu0 %v3508
      %4377 = vmatpush2.bf16.msra.mxu0 %v3507
      %4378 = vmatprep.subr.bf16.mxu0 %v3506
      %4379 = vmatpush2.bf16.msra.mxu0 %v3505
      %4380 = vmatprep.subr.bf16.mxu0 %v3504
      %4381 = vmatpush2.bf16.msra.mxu0 %v3503
      %4382 = vmatprep.mubr.bf16.mxu0 %v2270
      %4383 = vmatmul.mubr.bf16.gmra.mxu0 %v2269
      %v4384 = vpop.f32.mrf.mxu0
      %v4385 = vadd.f32 %v4312, %v4384
      %v4386 = vpop.f32.mrf.mxu0
      %v4387 = vadd.f32 %v4314, %v4386
      %v4388 = vpop.f32.mrf.mxu0
      %v4389 = vadd.f32 %v4316, %v4388
      %v4390 = vpop.f32.mrf.mxu0
      %v4391 = vadd.f32 %v4318, %v4390
      %4392 = vmatprep.mubr.bf16.mxu0 %v2288
      %4393 = vmatmul.mubr.bf16.gmra.mxu0 %v2287
      %v4394 = vpop.f32.mrf.mxu0
      %v4395 = vadd.f32 %v4322, %v4394
      %v4396 = vpop.f32.mrf.mxu0
      %v4397 = vadd.f32 %v4324, %v4396
      %v4398 = vpop.f32.mrf.mxu0
      %v4399 = vadd.f32 %v4326, %v4398
      %v4400 = vpop.f32.mrf.mxu0
      %v4401 = vadd.f32 %v4328, %v4400
      %4402 = vmatprep.mubr.bf16.mxu0 %v2306
      %4403 = vmatmul.mubr.bf16.gmra.mxu0 %v2305
      %v4404 = vpop.f32.mrf.mxu0
      %v4405 = vadd.f32 %v4332, %v4404
      %v4406 = vpop.f32.mrf.mxu0
      %v4407 = vadd.f32 %v4334, %v4406
      %v4408 = vpop.f32.mrf.mxu0
      %v4409 = vadd.f32 %v4336, %v4408
      %v4410 = vpop.f32.mrf.mxu0
      %v4411 = vadd.f32 %v4338, %v4410
      %4412 = vmatprep.mubr.bf16.mxu0 %v2324
      %4413 = vmatmul.mubr.bf16.gmra.mxu0 %v2323
      %v4414 = vpop.f32.mrf.mxu0
      %v4415 = vadd.f32 %v4342, %v4414
      %v4416 = vpop.f32.mrf.mxu0
      %v4417 = vadd.f32 %v4344, %v4416
      %v4418 = vpop.f32.mrf.mxu0
      %v4419 = vadd.f32 %v4346, %v4418
      %v4420 = vpop.f32.mrf.mxu0
      %v4421 = vadd.f32 %v4348, %v4420
      %4422 = vdwg.mxu0
      %4423 = vmatprep.subr.bf16.mxu0 %v3534
      %4424 = vmatpush1.bf16.msra.mxu0 %v3533
      %4425 = vmatprep.subr.bf16.mxu0 %v3532
      %4426 = vmatpush1.bf16.msra.mxu0 %v3531
      %4427 = vmatprep.subr.bf16.mxu0 %v3530
      %4428 = vmatpush1.bf16.msra.mxu0 %v3529
      %4429 = vmatprep.subr.bf16.mxu0 %v3528
      %4430 = vmatpush1.bf16.msra.mxu0 %v3527
      %4431 = vmatprep.subr.bf16.mxu0 %v3526
      %4432 = vmatpush1.bf16.msra.mxu0 %v3525
      %4433 = vmatprep.subr.bf16.mxu0 %v3524
      %4434 = vmatpush1.bf16.msra.mxu0 %v3523
      %4435 = vmatprep.subr.bf16.mxu0 %v3522
      %4436 = vmatpush1.bf16.msra.mxu0 %v3521
      %4437 = vmatprep.subr.bf16.mxu0 %v3520
      %4438 = vmatpush1.bf16.msra.mxu0 %v3519
      %4439 = vmatprep.subr.bf16.mxu0 %v3550
      %4440 = vmatpush2.bf16.msra.mxu0 %v3549
      %4441 = vmatprep.subr.bf16.mxu0 %v3548
      %4442 = vmatpush2.bf16.msra.mxu0 %v3547
      %4443 = vmatprep.subr.bf16.mxu0 %v3546
      %4444 = vmatpush2.bf16.msra.mxu0 %v3545
      %4445 = vmatprep.subr.bf16.mxu0 %v3544
      %4446 = vmatpush2.bf16.msra.mxu0 %v3543
      %4447 = vmatprep.subr.bf16.mxu0 %v3542
      %4448 = vmatpush2.bf16.msra.mxu0 %v3541
      %4449 = vmatprep.subr.bf16.mxu0 %v3540
      %4450 = vmatpush2.bf16.msra.mxu0 %v3539
      %4451 = vmatprep.subr.bf16.mxu0 %v3538
      %4452 = vmatpush2.bf16.msra.mxu0 %v3537
      %4453 = vmatprep.subr.bf16.mxu0 %v3536
      %4454 = vmatpush2.bf16.msra.mxu0 %v3535
      %4455 = vmatprep.mubr.bf16.mxu0 %v2272
      %4456 = vmatmul.mubr.bf16.gmra.mxu0 %v2271
      %v4457 = vpop.f32.mrf.mxu0
      %v4458 = vadd.f32 %v4385, %v4457
      %v4459 = vpop.f32.mrf.mxu0
      %v4460 = vadd.f32 %v4387, %v4459
      %v4461 = vpop.f32.mrf.mxu0
      %v4462 = vadd.f32 %v4389, %v4461
      %v4463 = vpop.f32.mrf.mxu0
      %v4464 = vadd.f32 %v4391, %v4463
      %4465 = vmatprep.mubr.bf16.mxu0 %v2290
      %4466 = vmatmul.mubr.bf16.gmra.mxu0 %v2289
      %v4467 = vpop.f32.mrf.mxu0
      %v4468 = vadd.f32 %v4395, %v4467
      %v4469 = vpop.f32.mrf.mxu0
      %v4470 = vadd.f32 %v4397, %v4469
      %v4471 = vpop.f32.mrf.mxu0
      %v4472 = vadd.f32 %v4399, %v4471
      %v4473 = vpop.f32.mrf.mxu0
      %v4474 = vadd.f32 %v4401, %v4473
      %4475 = vmatprep.mubr.bf16.mxu0 %v2308
      %4476 = vmatmul.mubr.bf16.gmra.mxu0 %v2307
      %v4477 = vpop.f32.mrf.mxu0
      %v4478 = vadd.f32 %v4405, %v4477
      %v4479 = vpop.f32.mrf.mxu0
      %v4480 = vadd.f32 %v4407, %v4479
      %v4481 = vpop.f32.mrf.mxu0
      %v4482 = vadd.f32 %v4409, %v4481
      %v4483 = vpop.f32.mrf.mxu0
      %v4484 = vadd.f32 %v4411, %v4483
      %4485 = vmatprep.mubr.bf16.mxu0 %v2326
      %4486 = vmatmul.mubr.bf16.gmra.mxu0 %v2325
      %v4487 = vpop.f32.mrf.mxu0
      %v4488 = vadd.f32 %v4415, %v4487
      %v4489 = vpop.f32.mrf.mxu0
      %v4490 = vadd.f32 %v4417, %v4489
      %v4491 = vpop.f32.mrf.mxu0
      %v4492 = vadd.f32 %v4419, %v4491
      %v4493 = vpop.f32.mrf.mxu0
      %v4494 = vadd.f32 %v4421, %v4493
      %4495 = vdwg.mxu0
      %v4496 = vadd.f32 %v4458, %v4462
      %v4497 = vadd.f32 %v4496, %v4468
      %v4498 = vadd.f32 %v4497, %v4472
      %v4499 = vadd.f32 %v4498, %v4478
      %v4500 = vadd.f32 %v4499, %v4482
      %v4501 = vadd.f32 %v4500, %v4488
      %v4502 = vadd.f32 %v4501, %v4492
      %v4503 = vrot.slane %v4502, 4
      %v4504 = vadd.f32 %v4502, %v4503
      %v4505 = vrot.slane %v4504, 2
      %v4506 = vadd.f32 %v4504, %v4505
      %v4507 = vrot.slane %v4506, 1
      %v4508 = vadd.f32 %v4506, %v4507
      %v4509 = vadd.f32 %v4460, %v4464
      %v4510 = vadd.f32 %v4509, %v4470
      %v4511 = vadd.f32 %v4510, %v4474
      %v4512 = vadd.f32 %v4511, %v4480
      %v4513 = vadd.f32 %v4512, %v4484
      %v4514 = vadd.f32 %v4513, %v4490
      %v4515 = vadd.f32 %v4514, %v4494
      %v4516 = vrot.slane %v4515, 4
      %v4517 = vadd.f32 %v4515, %v4516
      %v4518 = vrot.slane %v4517, 2
      %v4519 = vadd.f32 %v4517, %v4518
      %v4520 = vrot.slane %v4519, 1
      %v4521 = vadd.f32 %v4519, %v4520
      %v4522 = vmul.f32 %v4458, %v4458
      %v4523 = vmul.f32 %v4460, %v4460
      %v4524 = vmul.f32 %v4462, %v4462
      %v4525 = vmul.f32 %v4464, %v4464
      %v4526 = vmul.f32 %v4468, %v4468
      %v4527 = vmul.f32 %v4470, %v4470
      %v4528 = vmul.f32 %v4472, %v4472
      %v4529 = vmul.f32 %v4474, %v4474
      %v4530 = vmul.f32 %v4478, %v4478
      %v4531 = vmul.f32 %v4480, %v4480
      %v4532 = vmul.f32 %v4482, %v4482
      %v4533 = vmul.f32 %v4484, %v4484
      %v4534 = vmul.f32 %v4488, %v4488
      %v4535 = vmul.f32 %v4490, %v4490
      %v4536 = vmul.f32 %v4492, %v4492
      %v4537 = vmul.f32 %v4494, %v4494
      %v4538 = vadd.f32 %v4522, %v4524
      %v4539 = vadd.f32 %v4538, %v4526
      %v4540 = vadd.f32 %v4539, %v4528
      %v4541 = vadd.f32 %v4540, %v4530
      %v4542 = vadd.f32 %v4541, %v4532
      %v4543 = vadd.f32 %v4542, %v4534
      %v4544 = vadd.f32 %v4543, %v4536
      %v4545 = vrot.slane %v4544, 4
      %v4546 = vadd.f32 %v4544, %v4545
      %v4547 = vrot.slane %v4546, 2
      %v4548 = vadd.f32 %v4546, %v4547
      %v4549 = vrot.slane %v4548, 1
      %v4550 = vadd.f32 %v4548, %v4549
      %v4551 = vadd.f32 %v4523, %v4525
      %v4552 = vadd.f32 %v4551, %v4527
      %v4553 = vadd.f32 %v4552, %v4529
      %v4554 = vadd.f32 %v4553, %v4531
      %v4555 = vadd.f32 %v4554, %v4533
      %v4556 = vadd.f32 %v4555, %v4535
      %v4557 = vadd.f32 %v4556, %v4537
      %v4558 = vrot.slane %v4557, 4
      %v4559 = vadd.f32 %v4557, %v4558
      %v4560 = vrot.slane %v4559, 2
      %v4561 = vadd.f32 %v4559, %v4560
      %v4562 = vrot.slane %v4561, 1
      %v4563 = vadd.f32 %v4561, %v4562
      %vm4564 = vcmask 1040384
      %v4565 = vsel %vm4564, %v4508, %v4550
      %v4566 = vsel %vm4564, %v4521, %v4563
      %v4569 = vcombine.low %v4565, %v4566
      %v4571 = vunpack.c.l.s4 1983009808
      %v4572 = vunpack.c.0.s8 %v4571
      %v4573 = vlaneseq
      %v4574 = vshrl.u32 %v4573, 7
      %v4575 = vsub.s32 %v4572, %v4574
      %v4576 = vrot.slane %v4569, %v4575
      %4578 = vst [vmem:[%s186] sm:$0xf] %v4576
      %v4579 = vpack.c.bf16 %v4462, %v4458
      %v4580 = vpack.c.bf16 %v4464, %v4460
      %v4581 = vpack.c.bf16 %v4472, %v4468
      %v4582 = vpack.c.bf16 %v4474, %v4470
      %v4583 = vpack.c.bf16 %v4482, %v4478
      %v4584 = vpack.c.bf16 %v4484, %v4480
      %v4585 = vpack.c.bf16 %v4492, %v4488
      %v4586 = vpack.c.bf16 %v4494, %v4490
      %v4595 = vunpack.c.l.b16 %v4579
      %v4596 = vunpack.c.l.b16 %v4580
      %v4597 = vunpack.c.h.b16 %v4579
      %v4598 = vunpack.c.h.b16 %v4580
      %v4599 = vunpack.c.l.b16 %v4581
      %v4600 = vunpack.c.l.b16 %v4582
      %v4601 = vunpack.c.h.b16 %v4581
      %v4602 = vunpack.c.h.b16 %v4582
      %v4603 = vunpack.c.l.b16 %v4583
      %v4604 = vunpack.c.l.b16 %v4584
      %v4605 = vunpack.c.h.b16 %v4583
      %v4606 = vunpack.c.h.b16 %v4584
      %v4607 = vunpack.c.l.b16 %v4585
      %v4608 = vunpack.c.l.b16 %v4586
      %v4609 = vunpack.c.h.b16 %v4585
      %v4610 = vunpack.c.h.b16 %v4586
      %v4611 = vpack.c.b16 %v4596, %v4595
      %v4612 = vpack.c.b16 %v4598, %v4597
      %v4613 = vpack.c.b16 %v4600, %v4599
      %v4614 = vpack.c.b16 %v4602, %v4601
      %v4615 = vpack.c.b16 %v4604, %v4603
      %v4616 = vpack.c.b16 %v4606, %v4605
      %v4617 = vpack.c.b16 %v4608, %v4607
      %v4618 = vpack.c.b16 %v4610, %v4609
      %4627 = vst [vmem:[%s180] sm:$0xff] %v4611
      %4628 = vst [vmem:[%s180 + $0x8] sm:$0xff] %v4612
      %4629 = vst [vmem:[%s180 + $0x10] sm:$0xff] %v4613
      %4630 = vst [vmem:[%s180 + $0x18] sm:$0xff] %v4614
      %4631 = vst [vmem:[%s180 + $0x20] sm:$0xff] %v4615
      %4632 = vst [vmem:[%s180 + $0x28] sm:$0xff] %v4616
      %4633 = vst [vmem:[%s180 + $0x30] sm:$0xff] %v4617
      %4634 = vst [vmem:[%s180 + $0x38] sm:$0xff] %v4618
      %s4635 = smul.u32 8, %s15
      %p4636 = scmp.lt.s32.totalorder %s4635, 15
      %s4637 = scalar_select %p4636, %s4635, 15
      %s4638 = smul.addr %s4637, 2
      %s4639 = smul.addr %s4638, 4
      %s4640 = scalar_lea.vmem %s2, %s4639
      %p4641 = scmp.lt.s32.totalorder %s15, 1
      %s4642 = scalar_select %p4641, %s15, 1
      %s4643 = smul.addr %s4642, 2
      %s4644 = smul.addr %s4643, 2
      %s4645 = scalar_lea.vmem %s3, %s4644
      // Predicated region
      $region29: #{block_of_dmt3.2} parent=27 // pred_check
        %p4646 = pneg %p80
      $region30: #{block_of_dmt3.2} parent=27 // pred_check_branch
        %4648 = sbr.rel (%p4646) target = $region32
      $region31: #{block_of_dmt3.2} parent=27 // pred_region
        %s4649 = smul.u32 8, %s15
      $region32: #{block_of_dmt3.2} parent=27 // pred_fallthru
        _
      // Predicated region
      $region33: #{block_of_dmt3.2} parent=27 // pred_check
        %p4650 = pneg %p106
      $region34: #{block_of_dmt3.2} parent=27 // pred_check_branch
        %4652 = sbr.rel (%p4650) target = $region36
      $region35: #{block_of_dmt3.2} parent=27 // pred_region
        _
      $region36: #{block_of_dmt3.2} parent=27 // pred_fallthru
        _
    $region28: #{block_of_dmt3.2} parent=5 // pred_fallthru
      _
    %p4653 = scmp.le.s32.totalorder 2, %s10
    // Predicated region
    $region37: #{block_of_dmt3.2} parent=5 // pred_check
      %p4654 = pneg %p4653
    $region38: #{block_of_dmt3.2} parent=5 // pred_check_branch
      %4656 = sbr.rel (%p4654) target = $region40
    $region39: #{block_of_dmt3.2} parent=5 // pred_region
      %s4657 = ssub.s32 %s10, 2
      // Predicated region
      $region41: #{block_of_dmt3.2} parent=39 // pred_check
        %p4658 = pneg %p86
      $region42: #{block_of_dmt3.2} parent=39 // pred_check_branch
        %4660 = sbr.rel (%p4658) target = $region44
      $region43: #{block_of_dmt3.2} parent=39 // pred_region
        %s4661 = smul.u32 8, %s16
        %p4662 = scmp.lt.s32.totalorder %s4661, 15
        %s4663 = scalar_select %p4662, %s4661, 15
        %s4664 = smul.addr %s4663, 2
        %s4665 = smul.addr %s4664, 4
        %s4666 = scalar_lea.vmem %s2, %s4665
      $region44: #{block_of_dmt3.2} parent=39 // pred_fallthru
        _
      // Predicated region
      $region45: #{block_of_dmt3.2} parent=39 // pred_check
        %p4667 = pneg %p112
      $region46: #{block_of_dmt3.2} parent=39 // pred_check_branch
        %4669 = sbr.rel (%p4667) target = $region48
      $region47: #{block_of_dmt3.2} parent=39 // pred_region
        %p4670 = scmp.lt.s32.totalorder %s16, 1
        %s4671 = scalar_select %p4670, %s16, 1
        %s4672 = smul.addr %s4671, 2
        %s4673 = smul.addr %s4672, 2
        %s4674 = scalar_lea.vmem %s3, %s4673
      $region48: #{block_of_dmt3.2} parent=39 // pred_fallthru
        _
    $region40: #{block_of_dmt3.2} parent=5 // pred_fallthru
      _
  $region6: #{block_of_dmt3.2} parent=0 // loop_footer
    %s14 = sadd.s32 1, %s10
  $region7: #{block_of_dmt3.2} parent=0 // loop_footer_branch
    %9 = sbr.rel target = $region3
  $region8: #{block_of_dmt3.2} parent=0 // loop_exit
    _

</llo_original>
